<compile_context>
chip_gen: v6e
topology: v6e:2x2x1
jax: 0.10.0
libtpu: 0.0.40
codegen_flags: <defaults>
</compile_context>

<pallas_src>
import math
import jax
import jax.numpy as jnp
from jax.experimental import pallas as pl
from jax.experimental.pallas import tpu as pltpu

# ---------------- synthetic config (small) ----------------
VOCAB = 32          # config.vocab_size
D = 32              # encoder_input_size == fft_emb == conv1_input_size == conv2_output_size
HEADS = 2           # config.att_heads
DH = D // HEADS
CONV_H = 64         # conv1_output_size == conv2_input_size
K = 3               # config.conv_kernel
LAYERS = 2          # config.encoder_layers
EPS = 1e-5
NEG = -1e9          # additive mask value (stands in for -inf)


# ---------------- in-kernel helpers ----------------
def _layernorm(x, g, b):
    mu = jnp.mean(x, axis=-1, keepdims=True)
    var = jnp.mean((x - mu) ** 2, axis=-1, keepdims=True)
    return (x - mu) * jax.lax.rsqrt(var + EPS) * g + b


def _softmax_rows(s):
    s = s - jnp.max(s, axis=-1, keepdims=True)
    p = jnp.exp(s)
    denom = jnp.sum(p, axis=-1, keepdims=True)
    inv = pl.reciprocal(denom, approx=True)     # divide goes to the EUP slot
    inv = inv * (2.0 - denom * inv)             # one Newton step -> f32-level accuracy
    return p * inv


# ---------------- the fused encoder kernel (all layers, whole batch, one step) ----
def make_encoder_kernel(B, S):
    BS = B * S
    PAD = K // 2

    def kernel(x_ref, kb_ref, em_ref,
               wqkv_ref, bqkv_ref, wo_ref, w1_ref, w2_ref, vec_ref, b1_ref,
               o_ref, pad_ref):
        x = x_ref[...]                             # (BS, D) folded batch
        not_first = em_ref[:, 0:1]                 # (BS, 1): zero where z[t-1] crosses a batch edge
        not_last = em_ref[:, 1:2]                  # (BS, 1): zero where z[t+1] crosses a batch edge

        # Zero-padded conv scratch: rows [PAD : PAD+BS] hold the conv input; the
        # two border rows stay zero -> 'same' padding == static row windows.
        pad_ref[...] = jnp.zeros_like(pad_ref)

        def conv_taps(z, c):
            # Write z (BS, c) into the padded scratch and return the K shifted
            # copies as static row windows (batch-boundary rows re-zeroed).
            pad_ref[pl.ds(PAD, BS), pl.ds(0, c)] = z
            left = pad_ref[pl.ds(0, BS), pl.ds(0, c)] * not_first        # z[t-1]
            right = pad_ref[pl.ds(2 * PAD, BS), pl.ds(0, c)] * not_last  # z[t+1]
            return left, z, right

        for l in range(LAYERS):                    # both FFT blocks fused, statically unrolled
            # ---- fused QKV: one (BS, D) @ (D, 3D) matmul (scale folded into Wq/bq) ----
            qkv = jnp.dot(x, wqkv_ref[l], preferred_element_type=jnp.float32) + bqkv_ref[l]

            # ---- per-batch, per-head scaled dot-product attention ----
            ctx_parts = []
            for b in range(B):
                q_b = qkv[b * S:(b + 1) * S, 0 * D:1 * D]
                k_b = qkv[b * S:(b + 1) * S, 1 * D:2 * D]
                v_b = qkv[b * S:(b + 1) * S, 2 * D:3 * D]
                kb_b = kb_ref[b]                   # (S,) additive key-padding bias
                heads = []
                for h in range(HEADS):
                    sl = slice(h * DH, (h + 1) * DH)
                    sc = jax.lax.dot_general(      # q @ k^T without an explicit transpose
                        q_b[:, sl], k_b[:, sl],
                        dimension_numbers=(((1,), (1,)), ((), ())),
                        preferred_element_type=jnp.float32)           # (S, S)
                    p = _softmax_rows(sc + kb_b)
                    heads.append(jnp.dot(p, v_b[:, sl],
                                         preferred_element_type=jnp.float32))  # (S, DH)
                ctx_parts.append(jnp.concatenate(heads, axis=-1))     # lane-pack heads -> (S, D)
            ctx = jnp.concatenate(ctx_parts, axis=0)                  # (BS, D)

            # ---- single output projection + residual + post-LN ----
            att = jnp.dot(ctx, wo_ref[l], preferred_element_type=jnp.float32) + vec_ref[l * 6 + 0]
            y = _layernorm(att + x, vec_ref[l * 6 + 1], vec_ref[l * 6 + 2])

            # ---- conv1 (narrow input): im2col -> one (BS, K*D)@(K*D, CONV_H) matmul ----
            lft, mid, rgt = conv_taps(y, D)
            col = jnp.concatenate([lft, mid, rgt], axis=-1)           # (BS, K*D)
            h1 = jnp.maximum(
                jnp.dot(col, w1_ref[l], preferred_element_type=jnp.float32) + b1_ref[l],
                0.0)                                                  # conv1 + ReLU

            # ---- conv2 (wide input): K accumulating (BS, CONV_H)@(CONV_H, D) matmuls ----
            lft, mid, rgt = conv_taps(h1, CONV_H)
            h2 = (jnp.dot(lft, w2_ref[l * K + 0], preferred_element_type=jnp.float32)
                  + jnp.dot(mid, w2_ref[l * K + 1], preferred_element_type=jnp.float32)
                  + jnp.dot(rgt, w2_ref[l * K + 2], preferred_element_type=jnp.float32)
                  + vec_ref[l * 6 + 3])                               # conv2 (+ dropout = id)
            x = _layernorm(h2 + y, vec_ref[l * 6 + 4], vec_ref[l * 6 + 5])

        o_ref[...] = x                             # one full folded-batch store

    return kernel


# ---------------- wrapper: parameter packing + pallas_call ----------------
def pack_params(layer_params):
    """Stack all layers' params: fused QKV slab (scale folded in), im2col'd conv1,
    per-tap conv2, and 2-D packed bias/gain vectors."""
    scale = 1.0 / math.sqrt(DH)
    wqkv, bqkv, wo, w1, w2, vec, b1 = [], [], [], [], [], [], []
    for p in layer_params:
        wqkv.append(jnp.concatenate([p['wq'] * scale, p['wk'], p['wv']], axis=1))      # (D, 3D)
        bqkv.append(jnp.concatenate([p['bq'] * scale, p['bk'], p['bv']], axis=1)[0])   # (3D,)
        wo.append(p['wo'])                                   # (D, D)
        w1.append(p['w1'].reshape(K * D, CONV_H))            # (K*D, CONV_H)
        for k in range(K):
            w2.append(p['w2'][k])                            # (CONV_H, D) per tap
        for name in ('bo', 'g1', 'be1', 'b2', 'g2', 'be2'):
            vec.append(p[name][0])                           # (D,)
        b1.append(p['b1'][0])                                # (CONV_H,)
    return [jnp.stack(wqkv), jnp.stack(bqkv), jnp.stack(wo),
            jnp.stack(w1), jnp.stack(w2), jnp.stack(vec), jnp.stack(b1)]


def make_pe(d_model, max_len):
    position = jnp.arange(max_len, dtype=jnp.float32)[:, None]
    div_term = jnp.exp(jnp.arange(0, d_model, 2, dtype=jnp.float32)
                       * (-math.log(10000.0) / d_model))
    pe = jnp.zeros((max_len, 1, d_model), jnp.float32)
    pe = pe.at[:, 0, 0::2].set(jnp.sin(position * div_term))
    pe = pe.at[:, 0, 1::2].set(jnp.cos(position * div_term))
    return pe


@jax.jit
def encoder_forward(seq, emb_table, layer_params):
    B, S = seq.shape
    BS = B * S
    x = jnp.take(emb_table, seq, axis=0)                       # nn.Embedding -> (B, S, D)
    x = x + make_pe(D, max_len=B + 1)[:B]                      # reproduces pe[:x.size(0)]
    x2d = x.reshape(BS, D).astype(jnp.float32)                 # folded batch

    # key-padding mask as a rank-1 additive bias row per batch element
    key_bias = jnp.where(seq == 0, NEG, 0.0).astype(jnp.float32)          # (B, S)

    # batch-boundary masks for the padded-scratch conv windows
    pos = jnp.arange(S)
    not_first = jnp.tile((pos != 0).astype(jnp.float32), B).reshape(BS, 1)
    not_last = jnp.tile((pos != S - 1).astype(jnp.float32), B).reshape(BS, 1)
    edge_masks = jnp.concatenate([not_first, not_last], axis=1)            # (BS, 2)

    params = pack_params(layer_params)
    operands = [x2d, key_bias, edge_masks] + params

    def full_spec(a):
        nd = a.ndim
        return pl.BlockSpec(a.shape, lambda i, _nd=nd: (0,) * _nd)

    out = pl.pallas_call(
        make_encoder_kernel(B, S),
        out_shape=jax.ShapeDtypeStruct((BS, D), jnp.float32),
        grid=(1,),                                             # whole batch in one step
        in_specs=[full_spec(a) for a in operands],
        out_specs=pl.BlockSpec((BS, D), lambda i: (0, 0)),
        scratch_shapes=[pltpu.VMEM((BS + 2 * (K // 2), CONV_H), jnp.float32)],
        compiler_params=pltpu.CompilerParams(dimension_semantics=("arbitrary",)),
    )(*operands)
    return out.reshape(B, S, D)


# ---------------- pure-JAX reference (for verification) ----------------
def fft_block_ref(x, bias, p):
    def ln(z, g, b):
        mu = z.mean(-1, keepdims=True)
        var = ((z - mu) ** 2).mean(-1, keepdims=True)
        return (z - mu) / jnp.sqrt(var + EPS) * g + b

    def conv1d(z, w, b):
        pad = w.shape[0] // 2
        S = z.shape[1]
        zp = jnp.pad(z, ((0, 0), (pad, pad), (0, 0)))
        out = sum(jnp.einsum('bsc,cd->bsd', zp[:, k:k + S], w[k]) for k in range(w.shape[0]))
        return out + b

    B, S, Dm = x.shape
    dh = Dm // HEADS
    q = x @ p['wq'] + p['bq']
    k = x @ p['wk'] + p['bk']
    v = x @ p['wv'] + p['bv']
    qh = q.reshape(B, S, HEADS, dh).transpose(0, 2, 1, 3)
    kh = k.reshape(B, S, HEADS, dh).transpose(0, 2, 1, 3)
    vh = v.reshape(B, S, HEADS, dh).transpose(0, 2, 1, 3)
    s = jnp.einsum('bhqd,bhkd->bhqk', qh, kh) / math.sqrt(dh) + bias[:, None]
    a = jax.nn.softmax(s, axis=-1)
    ctx = jnp.einsum('bhqk,bhkd->bhqd', a, vh).transpose(0, 2, 1, 3).reshape(B, S, Dm)
    y = ln(ctx @ p['wo'] + p['bo'] + x, p['g1'], p['be1'])
    h1 = jax.nn.relu(conv1d(y, p['w1'], p['b1']))
    h2 = conv1d(h1, p['w2'], p['b2'])
    return ln(h2 + y, p['g2'], p['be2'])


def encoder_ref(seq, emb_table, layer_params):
    B, S = seq.shape
    x = jnp.take(emb_table, seq, axis=0)
    x = x + make_pe(D, B + 1)[:B]
    mask = (seq == 0)
    bias = jnp.broadcast_to(jnp.where(mask[:, None, :], NEG, 0.0), (B, S, S)).astype(jnp.float32)
    for p in layer_params:
        x = fft_block_ref(x, bias, p)
    return x


# ---------------- deterministic parameter init ----------------
def init_params(key):
    layers = []
    for layer in range(LAYERS):
        ks = jax.random.split(jax.random.fold_in(key, layer), 12)
        s = 0.08
        p = dict(
            wq=jax.random.normal(ks[0], (D, D), jnp.float32) * s,
            bq=jax.random.normal(ks[1], (1, D), jnp.float32) * s,
            wk=jax.random.normal(ks[2], (D, D), jnp.float32) * s,
            bk=jax.random.normal(ks[3], (1, D), jnp.float32) * s,
            wv=jax.random.normal(ks[4], (D, D), jnp.float32) * s,
            bv=jax.random.normal(ks[5], (1, D), jnp.float32) * s,
            wo=jax.random.normal(ks[6], (D, D), jnp.float32) * s,
            bo=jax.random.normal(ks[7], (1, D), jnp.float32) * s,
            g1=jnp.ones((1, D), jnp.float32),
            be1=jnp.zeros((1, D), jnp.float32),
            w1=jax.random.normal(ks[8], (K, D, CONV_H), jnp.float32) * s,
            b1=jax.random.normal(ks[9], (1, CONV_H), jnp.float32) * s,
            w2=jax.random.normal(ks[10], (K, CONV_H, D), jnp.float32) * s,
            b2=jax.random.normal(ks[11], (1, D), jnp.float32) * s,
            g2=jnp.ones((1, D), jnp.float32),
            be2=jnp.zeros((1, D), jnp.float32),
        )
        layers.append(p)
    return layers


if __name__ == "__main__":
    key = jax.random.PRNGKey(0)
    B, S = 2, 16

    emb_table = jax.random.normal(jax.random.fold_in(key, 999), (VOCAB, D), jnp.float32) * 0.1
    layer_params = init_params(key)

    seq = jax.random.randint(jax.random.fold_in(key, 123), (B, S), 1, VOCAB)
    seq = seq.at[:, -3:].set(0)   # padding tokens -> exercises the attention mask

    out = encoder_forward(seq, emb_table, layer_params)
    out = jax.block_until_ready(out)

    ref = encoder_ref(seq, emb_table, layer_params)
    assert out.shape == (B, S, D), out.shape
    # tolerance: f32 matmuls; approx EUP reciprocal + Newton step keeps f32-level accuracy
    assert jnp.allclose(out, ref, atol=3e-4, rtol=3e-4), float(jnp.max(jnp.abs(out - ref)))
    print("KERNEL_OK")
</pallas_src>

<mosaic_0001>
module attributes {stable_mosaic.version = 11 : i64} {
  func.func @kernel(%arg0: i32, %arg1: memref<32x32xf32, #tpu.memory_space<vmem>>, %arg2: memref<2x16xf32, #tpu.memory_space<vmem>>, %arg3: memref<32x2xf32, #tpu.memory_space<vmem>>, %arg4: memref<2x32x96xf32, #tpu.memory_space<vmem>>, %arg5: memref<2x96xf32, #tpu.memory_space<vmem>>, %arg6: memref<2x32x32xf32, #tpu.memory_space<vmem>>, %arg7: memref<2x96x64xf32, #tpu.memory_space<vmem>>, %arg8: memref<6x64x32xf32, #tpu.memory_space<vmem>>, %arg9: memref<12x32xf32, #tpu.memory_space<vmem>>, %arg10: memref<2x64xf32, #tpu.memory_space<vmem>>, %arg11: memref<32x32xf32, #tpu.memory_space<vmem>>, %arg12: memref<34x64xf32, #tpu.memory_space<vmem>>) attributes {dimension_semantics = [#tpu.dimension_semantics<arbitrary>], iteration_bounds = array<i64: 1>, scalar_prefetch = 0 : i64, scratch_operands = 1 : i64, tpu.core_type = #tpu.core_type<tc>, window_params = [{pipeline_mode = #tpu.pipeline_mode<synchronous>, transform_indices = @transform_0, window_bounds = array<i64: 32, 32>}, {pipeline_mode = #tpu.pipeline_mode<synchronous>, transform_indices = @transform_1, window_bounds = array<i64: 2, 16>}, {pipeline_mode = #tpu.pipeline_mode<synchronous>, transform_indices = @transform_2, window_bounds = array<i64: 32, 2>}, {pipeline_mode = #tpu.pipeline_mode<synchronous>, transform_indices = @transform_3, window_bounds = array<i64: 2, 32, 96>}, {pipeline_mode = #tpu.pipeline_mode<synchronous>, transform_indices = @transform_4, window_bounds = array<i64: 2, 96>}, {pipeline_mode = #tpu.pipeline_mode<synchronous>, transform_indices = @transform_5, window_bounds = array<i64: 2, 32, 32>}, {pipeline_mode = #tpu.pipeline_mode<synchronous>, transform_indices = @transform_6, window_bounds = array<i64: 2, 96, 64>}, {pipeline_mode = #tpu.pipeline_mode<synchronous>, transform_indices = @transform_7, window_bounds = array<i64: 6, 64, 32>}, {pipeline_mode = #tpu.pipeline_mode<synchronous>, transform_indices = @transform_8, window_bounds = array<i64: 12, 32>}, {pipeline_mode = #tpu.pipeline_mode<synchronous>, transform_indices = @transform_9, window_bounds = array<i64: 2, 64>}, {pipeline_mode = #tpu.pipeline_mode<synchronous>, transform_indices = @transform_10, window_bounds = array<i64: 32, 32>}]} {
    %c0 = arith.constant 0 : index
    %c0_0 = arith.constant 0 : index
    %0 = vector.load %arg1[%c0, %c0_0] : memref<32x32xf32, #tpu.memory_space<vmem>>, vector<32x32xf32>
    %c0_1 = arith.constant 0 : index
    %c0_2 = arith.constant 0 : index
    %1 = vector.load %arg3[%c0_1, %c0_2] : memref<32x2xf32, #tpu.memory_space<vmem>>, vector<32x1xf32>
    %c0_3 = arith.constant 0 : index
    %c1 = arith.constant 1 : index
    %2 = vector.load %arg3[%c0_3, %c1] : memref<32x2xf32, #tpu.memory_space<vmem>>, vector<32x1xf32>
    %cst = arith.constant 0.000000e+00 : f32
    %3 = vector.broadcast %cst : f32 to vector<34x64xf32>
    %c0_4 = arith.constant 0 : index
    %c0_5 = arith.constant 0 : index
    %4 = vector.load %arg12[%c0_4, %c0_5] : memref<34x64xf32, #tpu.memory_space<vmem>>, vector<34x64xf32>
    tpu.vector_store %arg12[%c0_4, %c0_5], %3 {strides = array<i32>} : memref<34x64xf32, #tpu.memory_space<vmem>>, vector<34x64xf32>,
    %c0_6 = arith.constant 0 : index
    %c0_7 = arith.constant 0 : index
    %c0_8 = arith.constant 0 : index
    %5 = vector.load %arg4[%c0_6, %c0_7, %c0_8] : memref<2x32x96xf32, #tpu.memory_space<vmem>>, vector<1x32x96xf32>
    %6 = vector.shape_cast %5 : vector<1x32x96xf32> to vector<32x96xf32>
    %cst_9 = arith.constant dense<0.000000e+00> : vector<32x96xf32>
    %7 = tpu.matmul %0, %6, %cst_9 {dimension_numbers = #tpu.dot_dimension_numbers<[1], [0], [0], [1], [0, 0, 1, 1], [], []>} : vector<32x32xf32>, vector<32x96xf32>, vector<32x96xf32> -> vector<32x96xf32>
    %c0_10 = arith.constant 0 : index
    %c0_11 = arith.constant 0 : index
    %8 = vector.load %arg5[%c0_10, %c0_11] : memref<2x96xf32, #tpu.memory_space<vmem>>, vector<1x96xf32>
    %9 = vector.shape_cast %8 : vector<1x96xf32> to vector<96xf32>
    %10 = vector.shape_cast %9 : vector<96xf32> to vector<1x96xf32>
    %11 = vector.broadcast %10 : vector<1x96xf32> to vector<32x96xf32>
    %12 = arith.addf %7, %11 : vector<32x96xf32>
    %13 = vector.extract_strided_slice %12 {offsets = [0, 0], sizes = [16, 32], strides = [1, 1]} : vector<32x96xf32> to vector<16x32xf32>
    %14 = vector.extract_strided_slice %12 {offsets = [0, 32], sizes = [16, 32], strides = [1, 1]} : vector<32x96xf32> to vector<16x32xf32>
    %15 = vector.extract_strided_slice %12 {offsets = [0, 64], sizes = [16, 32], strides = [1, 1]} : vector<32x96xf32> to vector<16x32xf32>
    %c0_12 = arith.constant 0 : index
    %c0_13 = arith.constant 0 : index
    %16 = vector.load %arg2[%c0_12, %c0_13] : memref<2x16xf32, #tpu.memory_space<vmem>>, vector<1x16xf32>
    %17 = vector.shape_cast %16 : vector<1x16xf32> to vector<16xf32>
    %18 = vector.extract_strided_slice %13 {offsets = [0, 0], sizes = [16, 16], strides = [1, 1]} : vector<16x32xf32> to vector<16x16xf32>
    %19 = vector.extract_strided_slice %14 {offsets = [0, 0], sizes = [16, 16], strides = [1, 1]} : vector<16x32xf32> to vector<16x16xf32>
    %cst_14 = arith.constant dense<0.000000e+00> : vector<16x16xf32>
    %20 = tpu.matmul %18, %19, %cst_14 {dimension_numbers = #tpu.dot_dimension_numbers<[1], [1], [0], [0], [0, 0, 1, 0], [], []>} : vector<16x16xf32>, vector<16x16xf32>, vector<16x16xf32> -> vector<16x16xf32>
    %21 = vector.shape_cast %17 : vector<16xf32> to vector<1x16xf32>
    %22 = vector.broadcast %21 : vector<1x16xf32> to vector<16x16xf32>
    %23 = arith.addf %20, %22 : vector<16x16xf32>
    %cst_15 = arith.constant dense<0xFF800000> : vector<16xf32>
    %24 = vector.multi_reduction <maximumf>, %23, %cst_15 [1] : vector<16x16xf32> to vector<16xf32>
    %25 = vector.shape_cast %24 : vector<16xf32> to vector<16x1xf32>
    %26 = vector.broadcast %25 : vector<16x1xf32> to vector<16x16xf32>
    %27 = arith.subf %23, %26 : vector<16x16xf32>
    %28 = math.exp %27 : vector<16x16xf32>
    %cst_16 = arith.constant dense<0.000000e+00> : vector<16xf32>
    %29 = vector.multi_reduction <add>, %28, %cst_16 [1] : vector<16x16xf32> to vector<16xf32>
    %30 = vector.shape_cast %29 : vector<16xf32> to vector<16x1xf32>
    %31 = tpu.reciprocal %30 {approx = true} : vector<16x1xf32> -> vector<16x1xf32>
    %32 = arith.mulf %30, %31 : vector<16x1xf32>
    %cst_17 = arith.constant 2.000000e+00 : f32
    %33 = vector.broadcast %cst_17 : f32 to vector<16x1xf32>
    %34 = arith.subf %33, %32 : vector<16x1xf32>
    %35 = arith.mulf %31, %34 : vector<16x1xf32>
    %36 = vector.broadcast %35 : vector<16x1xf32> to vector<16x16xf32>
    %37 = arith.mulf %28, %36 : vector<16x16xf32>
    %38 = vector.extract_strided_slice %15 {offsets = [0, 0], sizes = [16, 16], strides = [1, 1]} : vector<16x32xf32> to vector<16x16xf32>
    %cst_18 = arith.constant dense<0.000000e+00> : vector<16x16xf32>
    %39 = tpu.matmul %37, %38, %cst_18 {dimension_numbers = #tpu.dot_dimension_numbers<[1], [0], [0], [1], [0, 0, 1, 1], [], []>} : vector<16x16xf32>, vector<16x16xf32>, vector<16x16xf32> -> vector<16x16xf32>
    %40 = vector.extract_strided_slice %13 {offsets = [0, 16], sizes = [16, 16], strides = [1, 1]} : vector<16x32xf32> to vector<16x16xf32>
    %41 = vector.extract_strided_slice %14 {offsets = [0, 16], sizes = [16, 16], strides = [1, 1]} : vector<16x32xf32> to vector<16x16xf32>
    %cst_19 = arith.constant dense<0.000000e+00> : vector<16x16xf32>
    %42 = tpu.matmul %40, %41, %cst_19 {dimension_numbers = #tpu.dot_dimension_numbers<[1], [1], [0], [0], [0, 0, 1, 0], [], []>} : vector<16x16xf32>, vector<16x16xf32>, vector<16x16xf32> -> vector<16x16xf32>
    %43 = vector.shape_cast %17 : vector<16xf32> to vector<1x16xf32>
    %44 = vector.broadcast %43 : vector<1x16xf32> to vector<16x16xf32>
    %45 = arith.addf %42, %44 : vector<16x16xf32>
    %cst_20 = arith.constant dense<0xFF800000> : vector<16xf32>
    %46 = vector.multi_reduction <maximumf>, %45, %cst_20 [1] : vector<16x16xf32> to vector<16xf32>
    %47 = vector.shape_cast %46 : vector<16xf32> to vector<16x1xf32>
    %48 = vector.broadcast %47 : vector<16x1xf32> to vector<16x16xf32>
    %49 = arith.subf %45, %48 : vector<16x16xf32>
    %50 = math.exp %49 : vector<16x16xf32>
    %cst_21 = arith.constant dense<0.000000e+00> : vector<16xf32>
    %51 = vector.multi_reduction <add>, %50, %cst_21 [1] : vector<16x16xf32> to vector<16xf32>
    %52 = vector.shape_cast %51 : vector<16xf32> to vector<16x1xf32>
    %53 = tpu.reciprocal %52 {approx = true} : vector<16x1xf32> -> vector<16x1xf32>
    %54 = arith.mulf %52, %53 : vector<16x1xf32>
    %cst_22 = arith.constant 2.000000e+00 : f32
    %55 = vector.broadcast %cst_22 : f32 to vector<16x1xf32>
    %56 = arith.subf %55, %54 : vector<16x1xf32>
    %57 = arith.mulf %53, %56 : vector<16x1xf32>
    %58 = vector.broadcast %57 : vector<16x1xf32> to vector<16x16xf32>
    %59 = arith.mulf %50, %58 : vector<16x16xf32>
    %60 = vector.extract_strided_slice %15 {offsets = [0, 16], sizes = [16, 16], strides = [1, 1]} : vector<16x32xf32> to vector<16x16xf32>
    %cst_23 = arith.constant dense<0.000000e+00> : vector<16x16xf32>
    %61 = tpu.matmul %59, %60, %cst_23 {dimension_numbers = #tpu.dot_dimension_numbers<[1], [0], [0], [1], [0, 0, 1, 1], [], []>} : vector<16x16xf32>, vector<16x16xf32>, vector<16x16xf32> -> vector<16x16xf32>
    %62 = tpu.concatenate %39, %61 in 1 : vector<16x16xf32>, vector<16x16xf32> -> vector<16x32xf32>
    %63 = vector.extract_strided_slice %12 {offsets = [16, 0], sizes = [16, 32], strides = [1, 1]} : vector<32x96xf32> to vector<16x32xf32>
    %64 = vector.extract_strided_slice %12 {offsets = [16, 32], sizes = [16, 32], strides = [1, 1]} : vector<32x96xf32> to vector<16x32xf32>
    %65 = vector.extract_strided_slice %12 {offsets = [16, 64], sizes = [16, 32], strides = [1, 1]} : vector<32x96xf32> to vector<16x32xf32>
    %c1_24 = arith.constant 1 : index
    %c0_25 = arith.constant 0 : index
    %66 = vector.load %arg2[%c1_24, %c0_25] : memref<2x16xf32, #tpu.memory_space<vmem>>, vector<1x16xf32>
    %67 = vector.shape_cast %66 : vector<1x16xf32> to vector<16xf32>
    %68 = vector.extract_strided_slice %63 {offsets = [0, 0], sizes = [16, 16], strides = [1, 1]} : vector<16x32xf32> to vector<16x16xf32>
    %69 = vector.extract_strided_slice %64 {offsets = [0, 0], sizes = [16, 16], strides = [1, 1]} : vector<16x32xf32> to vector<16x16xf32>
    %cst_26 = arith.constant dense<0.000000e+00> : vector<16x16xf32>
    %70 = tpu.matmul %68, %69, %cst_26 {dimension_numbers = #tpu.dot_dimension_numbers<[1], [1], [0], [0], [0, 0, 1, 0], [], []>} : vector<16x16xf32>, vector<16x16xf32>, vector<16x16xf32> -> vector<16x16xf32>
    %71 = vector.shape_cast %67 : vector<16xf32> to vector<1x16xf32>
    %72 = vector.broadcast %71 : vector<1x16xf32> to vector<16x16xf32>
    %73 = arith.addf %70, %72 : vector<16x16xf32>
    %cst_27 = arith.constant dense<0xFF800000> : vector<16xf32>
    %74 = vector.multi_reduction <maximumf>, %73, %cst_27 [1] : vector<16x16xf32> to vector<16xf32>
    %75 = vector.shape_cast %74 : vector<16xf32> to vector<16x1xf32>
    %76 = vector.broadcast %75 : vector<16x1xf32> to vector<16x16xf32>
    %77 = arith.subf %73, %76 : vector<16x16xf32>
    %78 = math.exp %77 : vector<16x16xf32>
    %cst_28 = arith.constant dense<0.000000e+00> : vector<16xf32>
    %79 = vector.multi_reduction <add>, %78, %cst_28 [1] : vector<16x16xf32> to vector<16xf32>
    %80 = vector.shape_cast %79 : vector<16xf32> to vector<16x1xf32>
    %81 = tpu.reciprocal %80 {approx = true} : vector<16x1xf32> -> vector<16x1xf32>
    %82 = arith.mulf %80, %81 : vector<16x1xf32>
    %cst_29 = arith.constant 2.000000e+00 : f32
    %83 = vector.broadcast %cst_29 : f32 to vector<16x1xf32>
    %84 = arith.subf %83, %82 : vector<16x1xf32>
    %85 = arith.mulf %81, %84 : vector<16x1xf32>
    %86 = vector.broadcast %85 : vector<16x1xf32> to vector<16x16xf32>
    %87 = arith.mulf %78, %86 : vector<16x16xf32>
    %88 = vector.extract_strided_slice %65 {offsets = [0, 0], sizes = [16, 16], strides = [1, 1]} : vector<16x32xf32> to vector<16x16xf32>
    %cst_30 = arith.constant dense<0.000000e+00> : vector<16x16xf32>
    %89 = tpu.matmul %87, %88, %cst_30 {dimension_numbers = #tpu.dot_dimension_numbers<[1], [0], [0], [1], [0, 0, 1, 1], [], []>} : vector<16x16xf32>, vector<16x16xf32>, vector<16x16xf32> -> vector<16x16xf32>
    %90 = vector.extract_strided_slice %63 {offsets = [0, 16], sizes = [16, 16], strides = [1, 1]} : vector<16x32xf32> to vector<16x16xf32>
    %91 = vector.extract_strided_slice %64 {offsets = [0, 16], sizes = [16, 16], strides = [1, 1]} : vector<16x32xf32> to vector<16x16xf32>
    %cst_31 = arith.constant dense<0.000000e+00> : vector<16x16xf32>
    %92 = tpu.matmul %90, %91, %cst_31 {dimension_numbers = #tpu.dot_dimension_numbers<[1], [1], [0], [0], [0, 0, 1, 0], [], []>} : vector<16x16xf32>, vector<16x16xf32>, vector<16x16xf32> -> vector<16x16xf32>
    %93 = vector.shape_cast %67 : vector<16xf32> to vector<1x16xf32>
    %94 = vector.broadcast %93 : vector<1x16xf32> to vector<16x16xf32>
    %95 = arith.addf %92, %94 : vector<16x16xf32>
    %cst_32 = arith.constant dense<0xFF800000> : vector<16xf32>
    %96 = vector.multi_reduction <maximumf>, %95, %cst_32 [1] : vector<16x16xf32> to vector<16xf32>
    %97 = vector.shape_cast %96 : vector<16xf32> to vector<16x1xf32>
    %98 = vector.broadcast %97 : vector<16x1xf32> to vector<16x16xf32>
    %99 = arith.subf %95, %98 : vector<16x16xf32>
    %100 = math.exp %99 : vector<16x16xf32>
    %cst_33 = arith.constant dense<0.000000e+00> : vector<16xf32>
    %101 = vector.multi_reduction <add>, %100, %cst_33 [1] : vector<16x16xf32> to vector<16xf32>
    %102 = vector.shape_cast %101 : vector<16xf32> to vector<16x1xf32>
    %103 = tpu.reciprocal %102 {approx = true} : vector<16x1xf32> -> vector<16x1xf32>
    %104 = arith.mulf %102, %103 : vector<16x1xf32>
    %cst_34 = arith.constant 2.000000e+00 : f32
    %105 = vector.broadcast %cst_34 : f32 to vector<16x1xf32>
    %106 = arith.subf %105, %104 : vector<16x1xf32>
    %107 = arith.mulf %103, %106 : vector<16x1xf32>
    %108 = vector.broadcast %107 : vector<16x1xf32> to vector<16x16xf32>
    %109 = arith.mulf %100, %108 : vector<16x16xf32>
    %110 = vector.extract_strided_slice %65 {offsets = [0, 16], sizes = [16, 16], strides = [1, 1]} : vector<16x32xf32> to vector<16x16xf32>
    %cst_35 = arith.constant dense<0.000000e+00> : vector<16x16xf32>
    %111 = tpu.matmul %109, %110, %cst_35 {dimension_numbers = #tpu.dot_dimension_numbers<[1], [0], [0], [1], [0, 0, 1, 1], [], []>} : vector<16x16xf32>, vector<16x16xf32>, vector<16x16xf32> -> vector<16x16xf32>
    %112 = tpu.concatenate %89, %111 in 1 : vector<16x16xf32>, vector<16x16xf32> -> vector<16x32xf32>
    %113 = tpu.concatenate %62, %112 in 0 : vector<16x32xf32>, vector<16x32xf32> -> vector<32x32xf32>
    %c0_36 = arith.constant 0 : index
    %c0_37 = arith.constant 0 : index
    %c0_38 = arith.constant 0 : index
    %114 = vector.load %arg6[%c0_36, %c0_37, %c0_38] : memref<2x32x32xf32, #tpu.memory_space<vmem>>, vector<1x32x32xf32>
    %115 = vector.shape_cast %114 : vector<1x32x32xf32> to vector<32x32xf32>
    %cst_39 = arith.constant dense<0.000000e+00> : vector<32x32xf32>
    %116 = tpu.matmul %113, %115, %cst_39 {dimension_numbers = #tpu.dot_dimension_numbers<[1], [0], [0], [1], [0, 0, 1, 1], [], []>} : vector<32x32xf32>, vector<32x32xf32>, vector<32x32xf32> -> vector<32x32xf32>
    %c0_40 = arith.constant 0 : index
    %c0_41 = arith.constant 0 : index
    %117 = vector.load %arg9[%c0_40, %c0_41] : memref<12x32xf32, #tpu.memory_space<vmem>>, vector<1x32xf32>
    %118 = vector.shape_cast %117 : vector<1x32xf32> to vector<32xf32>
    %119 = vector.shape_cast %118 : vector<32xf32> to vector<1x32xf32>
    %120 = vector.broadcast %119 : vector<1x32xf32> to vector<32x32xf32>
    %121 = arith.addf %116, %120 : vector<32x32xf32>
    %122 = arith.addf %121, %0 : vector<32x32xf32>
    %c1_42 = arith.constant 1 : index
    %c0_43 = arith.constant 0 : index
    %123 = vector.load %arg9[%c1_42, %c0_43] : memref<12x32xf32, #tpu.memory_space<vmem>>, vector<1x32xf32>
    %124 = vector.shape_cast %123 : vector<1x32xf32> to vector<32xf32>
    %c2 = arith.constant 2 : index
    %c0_44 = arith.constant 0 : index
    %125 = vector.load %arg9[%c2, %c0_44] : memref<12x32xf32, #tpu.memory_space<vmem>>, vector<1x32xf32>
    %126 = vector.shape_cast %125 : vector<1x32xf32> to vector<32xf32>
    %cst_45 = arith.constant dense<0.000000e+00> : vector<32xf32>
    %127 = vector.multi_reduction <add>, %122, %cst_45 [1] : vector<32x32xf32> to vector<32xf32>
    %128 = vector.shape_cast %127 : vector<32xf32> to vector<32x1xf32>
    %cst_46 = arith.constant 3.200000e+01 : f32
    %129 = vector.broadcast %cst_46 : f32 to vector<32x1xf32>
    %130 = arith.divf %128, %129 : vector<32x1xf32>
    %131 = vector.broadcast %130 : vector<32x1xf32> to vector<32x32xf32>
    %132 = arith.subf %122, %131 : vector<32x32xf32>
    %133 = arith.mulf %132, %132 : vector<32x32xf32>
    %cst_47 = arith.constant dense<0.000000e+00> : vector<32xf32>
    %134 = vector.multi_reduction <add>, %133, %cst_47 [1] : vector<32x32xf32> to vector<32xf32>
    %135 = vector.shape_cast %134 : vector<32xf32> to vector<32x1xf32>
    %cst_48 = arith.constant 3.200000e+01 : f32
    %136 = vector.broadcast %cst_48 : f32 to vector<32x1xf32>
    %137 = arith.divf %135, %136 : vector<32x1xf32>
    %138 = vector.broadcast %130 : vector<32x1xf32> to vector<32x32xf32>
    %139 = arith.subf %122, %138 : vector<32x32xf32>
    %cst_49 = arith.constant 9.99999974E-6 : f32
    %140 = vector.broadcast %cst_49 : f32 to vector<32x1xf32>
    %141 = arith.addf %137, %140 : vector<32x1xf32>
    %142 = math.rsqrt %141 : vector<32x1xf32>
    %143 = vector.broadcast %142 : vector<32x1xf32> to vector<32x32xf32>
    %144 = arith.mulf %139, %143 : vector<32x32xf32>
    %145 = vector.shape_cast %124 : vector<32xf32> to vector<1x32xf32>
    %146 = vector.broadcast %145 : vector<1x32xf32> to vector<32x32xf32>
    %147 = arith.mulf %144, %146 : vector<32x32xf32>
    %148 = vector.shape_cast %126 : vector<32xf32> to vector<1x32xf32>
    %149 = vector.broadcast %148 : vector<1x32xf32> to vector<32x32xf32>
    %150 = arith.addf %147, %149 : vector<32x32xf32>
    %c1_50 = arith.constant 1 : index
    %c0_51 = arith.constant 0 : index
    %151 = vector.load %arg12[%c1_50, %c0_51] : memref<34x64xf32, #tpu.memory_space<vmem>>, vector<32x32xf32>
    tpu.vector_store %arg12[%c1_50, %c0_51], %150 {strides = array<i32>} : memref<34x64xf32, #tpu.memory_space<vmem>>, vector<32x32xf32>,
    %c0_52 = arith.constant 0 : index
    %c0_53 = arith.constant 0 : index
    %152 = vector.load %arg12[%c0_52, %c0_53] : memref<34x64xf32, #tpu.memory_space<vmem>>, vector<32x32xf32>
    %153 = vector.broadcast %1 : vector<32x1xf32> to vector<32x32xf32>
    %154 = arith.mulf %152, %153 : vector<32x32xf32>
    %c2_54 = arith.constant 2 : index
    %c0_55 = arith.constant 0 : index
    %155 = vector.load %arg12[%c2_54, %c0_55] : memref<34x64xf32, #tpu.memory_space<vmem>>, vector<32x32xf32>
    %156 = vector.broadcast %2 : vector<32x1xf32> to vector<32x32xf32>
    %157 = arith.mulf %155, %156 : vector<32x32xf32>
    %158 = tpu.concatenate %154, %150, %157 in 1 : vector<32x32xf32>, vector<32x32xf32>, vector<32x32xf32> -> vector<32x96xf32>
    %c0_56 = arith.constant 0 : index
    %c0_57 = arith.constant 0 : index
    %c0_58 = arith.constant 0 : index
    %159 = vector.load %arg7[%c0_56, %c0_57, %c0_58] : memref<2x96x64xf32, #tpu.memory_space<vmem>>, vector<1x96x64xf32>
    %160 = vector.shape_cast %159 : vector<1x96x64xf32> to vector<96x64xf32>
    %cst_59 = arith.constant dense<0.000000e+00> : vector<32x64xf32>
    %161 = tpu.matmul %158, %160, %cst_59 {dimension_numbers = #tpu.dot_dimension_numbers<[1], [0], [0], [1], [0, 0, 1, 1], [], []>} : vector<32x96xf32>, vector<96x64xf32>, vector<32x64xf32> -> vector<32x64xf32>
    %c0_60 = arith.constant 0 : index
    %c0_61 = arith.constant 0 : index
    %162 = vector.load %arg10[%c0_60, %c0_61] : memref<2x64xf32, #tpu.memory_space<vmem>>, vector<1x64xf32>
    %163 = vector.shape_cast %162 : vector<1x64xf32> to vector<64xf32>
    %164 = vector.shape_cast %163 : vector<64xf32> to vector<1x64xf32>
    %165 = vector.broadcast %164 : vector<1x64xf32> to vector<32x64xf32>
    %166 = arith.addf %161, %165 : vector<32x64xf32>
    %cst_62 = arith.constant 0.000000e+00 : f32
    %167 = vector.broadcast %cst_62 : f32 to vector<32x64xf32>
    %168 = arith.maximumf %166, %167 : vector<32x64xf32>
    %c1_63 = arith.constant 1 : index
    %c0_64 = arith.constant 0 : index
    %169 = vector.load %arg12[%c1_63, %c0_64] : memref<34x64xf32, #tpu.memory_space<vmem>>, vector<32x64xf32>
    tpu.vector_store %arg12[%c1_63, %c0_64], %168 {strides = array<i32>} : memref<34x64xf32, #tpu.memory_space<vmem>>, vector<32x64xf32>,
    %c0_65 = arith.constant 0 : index
    %c0_66 = arith.constant 0 : index
    %170 = vector.load %arg12[%c0_65, %c0_66] : memref<34x64xf32, #tpu.memory_space<vmem>>, vector<32x64xf32>
    %171 = vector.broadcast %1 : vector<32x1xf32> to vector<32x64xf32>
    %172 = arith.mulf %170, %171 : vector<32x64xf32>
    %c2_67 = arith.constant 2 : index
    %c0_68 = arith.constant 0 : index
    %173 = vector.load %arg12[%c2_67, %c0_68] : memref<34x64xf32, #tpu.memory_space<vmem>>, vector<32x64xf32>
    %174 = vector.broadcast %2 : vector<32x1xf32> to vector<32x64xf32>
    %175 = arith.mulf %173, %174 : vector<32x64xf32>
    %c0_69 = arith.constant 0 : index
    %c0_70 = arith.constant 0 : index
    %c0_71 = arith.constant 0 : index
    %176 = vector.load %arg8[%c0_69, %c0_70, %c0_71] : memref<6x64x32xf32, #tpu.memory_space<vmem>>, vector<1x64x32xf32>
    %177 = vector.shape_cast %176 : vector<1x64x32xf32> to vector<64x32xf32>
    %cst_72 = arith.constant dense<0.000000e+00> : vector<32x32xf32>
    %178 = tpu.matmul %172, %177, %cst_72 {dimension_numbers = #tpu.dot_dimension_numbers<[1], [0], [0], [1], [0, 0, 1, 1], [], []>} : vector<32x64xf32>, vector<64x32xf32>, vector<32x32xf32> -> vector<32x32xf32>
    %c1_73 = arith.constant 1 : index
    %c0_74 = arith.constant 0 : index
    %c0_75 = arith.constant 0 : index
    %179 = vector.load %arg8[%c1_73, %c0_74, %c0_75] : memref<6x64x32xf32, #tpu.memory_space<vmem>>, vector<1x64x32xf32>
    %180 = vector.shape_cast %179 : vector<1x64x32xf32> to vector<64x32xf32>
    %cst_76 = arith.constant dense<0.000000e+00> : vector<32x32xf32>
    %181 = tpu.matmul %168, %180, %cst_76 {dimension_numbers = #tpu.dot_dimension_numbers<[1], [0], [0], [1], [0, 0, 1, 1], [], []>} : vector<32x64xf32>, vector<64x32xf32>, vector<32x32xf32> -> vector<32x32xf32>
    %182 = arith.addf %178, %181 : vector<32x32xf32>
    %c2_77 = arith.constant 2 : index
    %c0_78 = arith.constant 0 : index
    %c0_79 = arith.constant 0 : index
    %183 = vector.load %arg8[%c2_77, %c0_78, %c0_79] : memref<6x64x32xf32, #tpu.memory_space<vmem>>, vector<1x64x32xf32>
    %184 = vector.shape_cast %183 : vector<1x64x32xf32> to vector<64x32xf32>
    %cst_80 = arith.constant dense<0.000000e+00> : vector<32x32xf32>
    %185 = tpu.matmul %175, %184, %cst_80 {dimension_numbers = #tpu.dot_dimension_numbers<[1], [0], [0], [1], [0, 0, 1, 1], [], []>} : vector<32x64xf32>, vector<64x32xf32>, vector<32x32xf32> -> vector<32x32xf32>
    %186 = arith.addf %182, %185 : vector<32x32xf32>
    %c3 = arith.constant 3 : index
    %c0_81 = arith.constant 0 : index
    %187 = vector.load %arg9[%c3, %c0_81] : memref<12x32xf32, #tpu.memory_space<vmem>>, vector<1x32xf32>
    %188 = vector.shape_cast %187 : vector<1x32xf32> to vector<32xf32>
    %189 = vector.shape_cast %188 : vector<32xf32> to vector<1x32xf32>
    %190 = vector.broadcast %189 : vector<1x32xf32> to vector<32x32xf32>
    %191 = arith.addf %186, %190 : vector<32x32xf32>
    %192 = arith.addf %191, %150 : vector<32x32xf32>
    %c4 = arith.constant 4 : index
    %c0_82 = arith.constant 0 : index
    %193 = vector.load %arg9[%c4, %c0_82] : memref<12x32xf32, #tpu.memory_space<vmem>>, vector<1x32xf32>
    %194 = vector.shape_cast %193 : vector<1x32xf32> to vector<32xf32>
    %c5 = arith.constant 5 : index
    %c0_83 = arith.constant 0 : index
    %195 = vector.load %arg9[%c5, %c0_83] : memref<12x32xf32, #tpu.memory_space<vmem>>, vector<1x32xf32>
    %196 = vector.shape_cast %195 : vector<1x32xf32> to vector<32xf32>
    %cst_84 = arith.constant dense<0.000000e+00> : vector<32xf32>
    %197 = vector.multi_reduction <add>, %192, %cst_84 [1] : vector<32x32xf32> to vector<32xf32>
    %198 = vector.shape_cast %197 : vector<32xf32> to vector<32x1xf32>
    %cst_85 = arith.constant 3.200000e+01 : f32
    %199 = vector.broadcast %cst_85 : f32 to vector<32x1xf32>
    %200 = arith.divf %198, %199 : vector<32x1xf32>
    %201 = vector.broadcast %200 : vector<32x1xf32> to vector<32x32xf32>
    %202 = arith.subf %192, %201 : vector<32x32xf32>
    %203 = arith.mulf %202, %202 : vector<32x32xf32>
    %cst_86 = arith.constant dense<0.000000e+00> : vector<32xf32>
    %204 = vector.multi_reduction <add>, %203, %cst_86 [1] : vector<32x32xf32> to vector<32xf32>
    %205 = vector.shape_cast %204 : vector<32xf32> to vector<32x1xf32>
    %cst_87 = arith.constant 3.200000e+01 : f32
    %206 = vector.broadcast %cst_87 : f32 to vector<32x1xf32>
    %207 = arith.divf %205, %206 : vector<32x1xf32>
    %208 = vector.broadcast %200 : vector<32x1xf32> to vector<32x32xf32>
    %209 = arith.subf %192, %208 : vector<32x32xf32>
    %cst_88 = arith.constant 9.99999974E-6 : f32
    %210 = vector.broadcast %cst_88 : f32 to vector<32x1xf32>
    %211 = arith.addf %207, %210 : vector<32x1xf32>
    %212 = math.rsqrt %211 : vector<32x1xf32>
    %213 = vector.broadcast %212 : vector<32x1xf32> to vector<32x32xf32>
    %214 = arith.mulf %209, %213 : vector<32x32xf32>
    %215 = vector.shape_cast %194 : vector<32xf32> to vector<1x32xf32>
    %216 = vector.broadcast %215 : vector<1x32xf32> to vector<32x32xf32>
    %217 = arith.mulf %214, %216 : vector<32x32xf32>
    %218 = vector.shape_cast %196 : vector<32xf32> to vector<1x32xf32>
    %219 = vector.broadcast %218 : vector<1x32xf32> to vector<32x32xf32>
    %220 = arith.addf %217, %219 : vector<32x32xf32>
    %c1_89 = arith.constant 1 : index
    %c0_90 = arith.constant 0 : index
    %c0_91 = arith.constant 0 : index
    %221 = vector.load %arg4[%c1_89, %c0_90, %c0_91] : memref<2x32x96xf32, #tpu.memory_space<vmem>>, vector<1x32x96xf32>
    %222 = vector.shape_cast %221 : vector<1x32x96xf32> to vector<32x96xf32>
    %cst_92 = arith.constant dense<0.000000e+00> : vector<32x96xf32>
    %223 = tpu.matmul %220, %222, %cst_92 {dimension_numbers = #tpu.dot_dimension_numbers<[1], [0], [0], [1], [0, 0, 1, 1], [], []>} : vector<32x32xf32>, vector<32x96xf32>, vector<32x96xf32> -> vector<32x96xf32>
    %c1_93 = arith.constant 1 : index
    %c0_94 = arith.constant 0 : index
    %224 = vector.load %arg5[%c1_93, %c0_94] : memref<2x96xf32, #tpu.memory_space<vmem>>, vector<1x96xf32>
    %225 = vector.shape_cast %224 : vector<1x96xf32> to vector<96xf32>
    %226 = vector.shape_cast %225 : vector<96xf32> to vector<1x96xf32>
    %227 = vector.broadcast %226 : vector<1x96xf32> to vector<32x96xf32>
    %228 = arith.addf %223, %227 : vector<32x96xf32>
    %229 = vector.extract_strided_slice %228 {offsets = [0, 0], sizes = [16, 32], strides = [1, 1]} : vector<32x96xf32> to vector<16x32xf32>
    %230 = vector.extract_strided_slice %228 {offsets = [0, 32], sizes = [16, 32], strides = [1, 1]} : vector<32x96xf32> to vector<16x32xf32>
    %231 = vector.extract_strided_slice %228 {offsets = [0, 64], sizes = [16, 32], strides = [1, 1]} : vector<32x96xf32> to vector<16x32xf32>
    %c0_95 = arith.constant 0 : index
    %c0_96 = arith.constant 0 : index
    %232 = vector.load %arg2[%c0_95, %c0_96] : memref<2x16xf32, #tpu.memory_space<vmem>>, vector<1x16xf32>
    %233 = vector.shape_cast %232 : vector<1x16xf32> to vector<16xf32>
    %234 = vector.extract_strided_slice %229 {offsets = [0, 0], sizes = [16, 16], strides = [1, 1]} : vector<16x32xf32> to vector<16x16xf32>
    %235 = vector.extract_strided_slice %230 {offsets = [0, 0], sizes = [16, 16], strides = [1, 1]} : vector<16x32xf32> to vector<16x16xf32>
    %cst_97 = arith.constant dense<0.000000e+00> : vector<16x16xf32>
    %236 = tpu.matmul %234, %235, %cst_97 {dimension_numbers = #tpu.dot_dimension_numbers<[1], [1], [0], [0], [0, 0, 1, 0], [], []>} : vector<16x16xf32>, vector<16x16xf32>, vector<16x16xf32> -> vector<16x16xf32>
    %237 = vector.shape_cast %233 : vector<16xf32> to vector<1x16xf32>
    %238 = vector.broadcast %237 : vector<1x16xf32> to vector<16x16xf32>
    %239 = arith.addf %236, %238 : vector<16x16xf32>
    %cst_98 = arith.constant dense<0xFF800000> : vector<16xf32>
    %240 = vector.multi_reduction <maximumf>, %239, %cst_98 [1] : vector<16x16xf32> to vector<16xf32>
    %241 = vector.shape_cast %240 : vector<16xf32> to vector<16x1xf32>
    %242 = vector.broadcast %241 : vector<16x1xf32> to vector<16x16xf32>
    %243 = arith.subf %239, %242 : vector<16x16xf32>
    %244 = math.exp %243 : vector<16x16xf32>
    %cst_99 = arith.constant dense<0.000000e+00> : vector<16xf32>
    %245 = vector.multi_reduction <add>, %244, %cst_99 [1] : vector<16x16xf32> to vector<16xf32>
    %246 = vector.shape_cast %245 : vector<16xf32> to vector<16x1xf32>
    %247 = tpu.reciprocal %246 {approx = true} : vector<16x1xf32> -> vector<16x1xf32>
    %248 = arith.mulf %246, %247 : vector<16x1xf32>
    %cst_100 = arith.constant 2.000000e+00 : f32
    %249 = vector.broadcast %cst_100 : f32 to vector<16x1xf32>
    %250 = arith.subf %249, %248 : vector<16x1xf32>
    %251 = arith.mulf %247, %250 : vector<16x1xf32>
    %252 = vector.broadcast %251 : vector<16x1xf32> to vector<16x16xf32>
    %253 = arith.mulf %244, %252 : vector<16x16xf32>
    %254 = vector.extract_strided_slice %231 {offsets = [0, 0], sizes = [16, 16], strides = [1, 1]} : vector<16x32xf32> to vector<16x16xf32>
    %cst_101 = arith.constant dense<0.000000e+00> : vector<16x16xf32>
    %255 = tpu.matmul %253, %254, %cst_101 {dimension_numbers = #tpu.dot_dimension_numbers<[1], [0], [0], [1], [0, 0, 1, 1], [], []>} : vector<16x16xf32>, vector<16x16xf32>, vector<16x16xf32> -> vector<16x16xf32>
    %256 = vector.extract_strided_slice %229 {offsets = [0, 16], sizes = [16, 16], strides = [1, 1]} : vector<16x32xf32> to vector<16x16xf32>
    %257 = vector.extract_strided_slice %230 {offsets = [0, 16], sizes = [16, 16], strides = [1, 1]} : vector<16x32xf32> to vector<16x16xf32>
    %cst_102 = arith.constant dense<0.000000e+00> : vector<16x16xf32>
    %258 = tpu.matmul %256, %257, %cst_102 {dimension_numbers = #tpu.dot_dimension_numbers<[1], [1], [0], [0], [0, 0, 1, 0], [], []>} : vector<16x16xf32>, vector<16x16xf32>, vector<16x16xf32> -> vector<16x16xf32>
    %259 = vector.shape_cast %233 : vector<16xf32> to vector<1x16xf32>
    %260 = vector.broadcast %259 : vector<1x16xf32> to vector<16x16xf32>
    %261 = arith.addf %258, %260 : vector<16x16xf32>
    %cst_103 = arith.constant dense<0xFF800000> : vector<16xf32>
    %262 = vector.multi_reduction <maximumf>, %261, %cst_103 [1] : vector<16x16xf32> to vector<16xf32>
    %263 = vector.shape_cast %262 : vector<16xf32> to vector<16x1xf32>
    %264 = vector.broadcast %263 : vector<16x1xf32> to vector<16x16xf32>
    %265 = arith.subf %261, %264 : vector<16x16xf32>
    %266 = math.exp %265 : vector<16x16xf32>
    %cst_104 = arith.constant dense<0.000000e+00> : vector<16xf32>
    %267 = vector.multi_reduction <add>, %266, %cst_104 [1] : vector<16x16xf32> to vector<16xf32>
    %268 = vector.shape_cast %267 : vector<16xf32> to vector<16x1xf32>
    %269 = tpu.reciprocal %268 {approx = true} : vector<16x1xf32> -> vector<16x1xf32>
    %270 = arith.mulf %268, %269 : vector<16x1xf32>
    %cst_105 = arith.constant 2.000000e+00 : f32
    %271 = vector.broadcast %cst_105 : f32 to vector<16x1xf32>
    %272 = arith.subf %271, %270 : vector<16x1xf32>
    %273 = arith.mulf %269, %272 : vector<16x1xf32>
    %274 = vector.broadcast %273 : vector<16x1xf32> to vector<16x16xf32>
    %275 = arith.mulf %266, %274 : vector<16x16xf32>
    %276 = vector.extract_strided_slice %231 {offsets = [0, 16], sizes = [16, 16], strides = [1, 1]} : vector<16x32xf32> to vector<16x16xf32>
    %cst_106 = arith.constant dense<0.000000e+00> : vector<16x16xf32>
    %277 = tpu.matmul %275, %276, %cst_106 {dimension_numbers = #tpu.dot_dimension_numbers<[1], [0], [0], [1], [0, 0, 1, 1], [], []>} : vector<16x16xf32>, vector<16x16xf32>, vector<16x16xf32> -> vector<16x16xf32>
    %278 = tpu.concatenate %255, %277 in 1 : vector<16x16xf32>, vector<16x16xf32> -> vector<16x32xf32>
    %279 = vector.extract_strided_slice %228 {offsets = [16, 0], sizes = [16, 32], strides = [1, 1]} : vector<32x96xf32> to vector<16x32xf32>
    %280 = vector.extract_strided_slice %228 {offsets = [16, 32], sizes = [16, 32], strides = [1, 1]} : vector<32x96xf32> to vector<16x32xf32>
    %281 = vector.extract_strided_slice %228 {offsets = [16, 64], sizes = [16, 32], strides = [1, 1]} : vector<32x96xf32> to vector<16x32xf32>
    %c1_107 = arith.constant 1 : index
    %c0_108 = arith.constant 0 : index
    %282 = vector.load %arg2[%c1_107, %c0_108] : memref<2x16xf32, #tpu.memory_space<vmem>>, vector<1x16xf32>
    %283 = vector.shape_cast %282 : vector<1x16xf32> to vector<16xf32>
    %284 = vector.extract_strided_slice %279 {offsets = [0, 0], sizes = [16, 16], strides = [1, 1]} : vector<16x32xf32> to vector<16x16xf32>
    %285 = vector.extract_strided_slice %280 {offsets = [0, 0], sizes = [16, 16], strides = [1, 1]} : vector<16x32xf32> to vector<16x16xf32>
    %cst_109 = arith.constant dense<0.000000e+00> : vector<16x16xf32>
    %286 = tpu.matmul %284, %285, %cst_109 {dimension_numbers = #tpu.dot_dimension_numbers<[1], [1], [0], [0], [0, 0, 1, 0], [], []>} : vector<16x16xf32>, vector<16x16xf32>, vector<16x16xf32> -> vector<16x16xf32>
    %287 = vector.shape_cast %283 : vector<16xf32> to vector<1x16xf32>
    %288 = vector.broadcast %287 : vector<1x16xf32> to vector<16x16xf32>
    %289 = arith.addf %286, %288 : vector<16x16xf32>
    %cst_110 = arith.constant dense<0xFF800000> : vector<16xf32>
    %290 = vector.multi_reduction <maximumf>, %289, %cst_110 [1] : vector<16x16xf32> to vector<16xf32>
    %291 = vector.shape_cast %290 : vector<16xf32> to vector<16x1xf32>
    %292 = vector.broadcast %291 : vector<16x1xf32> to vector<16x16xf32>
    %293 = arith.subf %289, %292 : vector<16x16xf32>
    %294 = math.exp %293 : vector<16x16xf32>
    %cst_111 = arith.constant dense<0.000000e+00> : vector<16xf32>
    %295 = vector.multi_reduction <add>, %294, %cst_111 [1] : vector<16x16xf32> to vector<16xf32>
    %296 = vector.shape_cast %295 : vector<16xf32> to vector<16x1xf32>
    %297 = tpu.reciprocal %296 {approx = true} : vector<16x1xf32> -> vector<16x1xf32>
    %298 = arith.mulf %296, %297 : vector<16x1xf32>
    %cst_112 = arith.constant 2.000000e+00 : f32
    %299 = vector.broadcast %cst_112 : f32 to vector<16x1xf32>
    %300 = arith.subf %299, %298 : vector<16x1xf32>
    %301 = arith.mulf %297, %300 : vector<16x1xf32>
    %302 = vector.broadcast %301 : vector<16x1xf32> to vector<16x16xf32>
    %303 = arith.mulf %294, %302 : vector<16x16xf32>
    %304 = vector.extract_strided_slice %281 {offsets = [0, 0], sizes = [16, 16], strides = [1, 1]} : vector<16x32xf32> to vector<16x16xf32>
    %cst_113 = arith.constant dense<0.000000e+00> : vector<16x16xf32>
    %305 = tpu.matmul %303, %304, %cst_113 {dimension_numbers = #tpu.dot_dimension_numbers<[1], [0], [0], [1], [0, 0, 1, 1], [], []>} : vector<16x16xf32>, vector<16x16xf32>, vector<16x16xf32> -> vector<16x16xf32>
    %306 = vector.extract_strided_slice %279 {offsets = [0, 16], sizes = [16, 16], strides = [1, 1]} : vector<16x32xf32> to vector<16x16xf32>
    %307 = vector.extract_strided_slice %280 {offsets = [0, 16], sizes = [16, 16], strides = [1, 1]} : vector<16x32xf32> to vector<16x16xf32>
    %cst_114 = arith.constant dense<0.000000e+00> : vector<16x16xf32>
    %308 = tpu.matmul %306, %307, %cst_114 {dimension_numbers = #tpu.dot_dimension_numbers<[1], [1], [0], [0], [0, 0, 1, 0], [], []>} : vector<16x16xf32>, vector<16x16xf32>, vector<16x16xf32> -> vector<16x16xf32>
    %309 = vector.shape_cast %283 : vector<16xf32> to vector<1x16xf32>
    %310 = vector.broadcast %309 : vector<1x16xf32> to vector<16x16xf32>
    %311 = arith.addf %308, %310 : vector<16x16xf32>
    %cst_115 = arith.constant dense<0xFF800000> : vector<16xf32>
    %312 = vector.multi_reduction <maximumf>, %311, %cst_115 [1] : vector<16x16xf32> to vector<16xf32>
    %313 = vector.shape_cast %312 : vector<16xf32> to vector<16x1xf32>
    %314 = vector.broadcast %313 : vector<16x1xf32> to vector<16x16xf32>
    %315 = arith.subf %311, %314 : vector<16x16xf32>
    %316 = math.exp %315 : vector<16x16xf32>
    %cst_116 = arith.constant dense<0.000000e+00> : vector<16xf32>
    %317 = vector.multi_reduction <add>, %316, %cst_116 [1] : vector<16x16xf32> to vector<16xf32>
    %318 = vector.shape_cast %317 : vector<16xf32> to vector<16x1xf32>
    %319 = tpu.reciprocal %318 {approx = true} : vector<16x1xf32> -> vector<16x1xf32>
    %320 = arith.mulf %318, %319 : vector<16x1xf32>
    %cst_117 = arith.constant 2.000000e+00 : f32
    %321 = vector.broadcast %cst_117 : f32 to vector<16x1xf32>
    %322 = arith.subf %321, %320 : vector<16x1xf32>
    %323 = arith.mulf %319, %322 : vector<16x1xf32>
    %324 = vector.broadcast %323 : vector<16x1xf32> to vector<16x16xf32>
    %325 = arith.mulf %316, %324 : vector<16x16xf32>
    %326 = vector.extract_strided_slice %281 {offsets = [0, 16], sizes = [16, 16], strides = [1, 1]} : vector<16x32xf32> to vector<16x16xf32>
    %cst_118 = arith.constant dense<0.000000e+00> : vector<16x16xf32>
    %327 = tpu.matmul %325, %326, %cst_118 {dimension_numbers = #tpu.dot_dimension_numbers<[1], [0], [0], [1], [0, 0, 1, 1], [], []>} : vector<16x16xf32>, vector<16x16xf32>, vector<16x16xf32> -> vector<16x16xf32>
    %328 = tpu.concatenate %305, %327 in 1 : vector<16x16xf32>, vector<16x16xf32> -> vector<16x32xf32>
    %329 = tpu.concatenate %278, %328 in 0 : vector<16x32xf32>, vector<16x32xf32> -> vector<32x32xf32>
    %c1_119 = arith.constant 1 : index
    %c0_120 = arith.constant 0 : index
    %c0_121 = arith.constant 0 : index
    %330 = vector.load %arg6[%c1_119, %c0_120, %c0_121] : memref<2x32x32xf32, #tpu.memory_space<vmem>>, vector<1x32x32xf32>
    %331 = vector.shape_cast %330 : vector<1x32x32xf32> to vector<32x32xf32>
    %cst_122 = arith.constant dense<0.000000e+00> : vector<32x32xf32>
    %332 = tpu.matmul %329, %331, %cst_122 {dimension_numbers = #tpu.dot_dimension_numbers<[1], [0], [0], [1], [0, 0, 1, 1], [], []>} : vector<32x32xf32>, vector<32x32xf32>, vector<32x32xf32> -> vector<32x32xf32>
    %c6 = arith.constant 6 : index
    %c0_123 = arith.constant 0 : index
    %333 = vector.load %arg9[%c6, %c0_123] : memref<12x32xf32, #tpu.memory_space<vmem>>, vector<1x32xf32>
    %334 = vector.shape_cast %333 : vector<1x32xf32> to vector<32xf32>
    %335 = vector.shape_cast %334 : vector<32xf32> to vector<1x32xf32>
    %336 = vector.broadcast %335 : vector<1x32xf32> to vector<32x32xf32>
    %337 = arith.addf %332, %336 : vector<32x32xf32>
    %338 = arith.addf %337, %220 : vector<32x32xf32>
    %c7 = arith.constant 7 : index
    %c0_124 = arith.constant 0 : index
    %339 = vector.load %arg9[%c7, %c0_124] : memref<12x32xf32, #tpu.memory_space<vmem>>, vector<1x32xf32>
    %340 = vector.shape_cast %339 : vector<1x32xf32> to vector<32xf32>
    %c8 = arith.constant 8 : index
    %c0_125 = arith.constant 0 : index
    %341 = vector.load %arg9[%c8, %c0_125] : memref<12x32xf32, #tpu.memory_space<vmem>>, vector<1x32xf32>
    %342 = vector.shape_cast %341 : vector<1x32xf32> to vector<32xf32>
    %cst_126 = arith.constant dense<0.000000e+00> : vector<32xf32>
    %343 = vector.multi_reduction <add>, %338, %cst_126 [1] : vector<32x32xf32> to vector<32xf32>
    %344 = vector.shape_cast %343 : vector<32xf32> to vector<32x1xf32>
    %cst_127 = arith.constant 3.200000e+01 : f32
    %345 = vector.broadcast %cst_127 : f32 to vector<32x1xf32>
    %346 = arith.divf %344, %345 : vector<32x1xf32>
    %347 = vector.broadcast %346 : vector<32x1xf32> to vector<32x32xf32>
    %348 = arith.subf %338, %347 : vector<32x32xf32>
    %349 = arith.mulf %348, %348 : vector<32x32xf32>
    %cst_128 = arith.constant dense<0.000000e+00> : vector<32xf32>
    %350 = vector.multi_reduction <add>, %349, %cst_128 [1] : vector<32x32xf32> to vector<32xf32>
    %351 = vector.shape_cast %350 : vector<32xf32> to vector<32x1xf32>
    %cst_129 = arith.constant 3.200000e+01 : f32
    %352 = vector.broadcast %cst_129 : f32 to vector<32x1xf32>
    %353 = arith.divf %351, %352 : vector<32x1xf32>
    %354 = vector.broadcast %346 : vector<32x1xf32> to vector<32x32xf32>
    %355 = arith.subf %338, %354 : vector<32x32xf32>
    %cst_130 = arith.constant 9.99999974E-6 : f32
    %356 = vector.broadcast %cst_130 : f32 to vector<32x1xf32>
    %357 = arith.addf %353, %356 : vector<32x1xf32>
    %358 = math.rsqrt %357 : vector<32x1xf32>
    %359 = vector.broadcast %358 : vector<32x1xf32> to vector<32x32xf32>
    %360 = arith.mulf %355, %359 : vector<32x32xf32>
    %361 = vector.shape_cast %340 : vector<32xf32> to vector<1x32xf32>
    %362 = vector.broadcast %361 : vector<1x32xf32> to vector<32x32xf32>
    %363 = arith.mulf %360, %362 : vector<32x32xf32>
    %364 = vector.shape_cast %342 : vector<32xf32> to vector<1x32xf32>
    %365 = vector.broadcast %364 : vector<1x32xf32> to vector<32x32xf32>
    %366 = arith.addf %363, %365 : vector<32x32xf32>
    %c1_131 = arith.constant 1 : index
    %c0_132 = arith.constant 0 : index
    %367 = vector.load %arg12[%c1_131, %c0_132] : memref<34x64xf32, #tpu.memory_space<vmem>>, vector<32x32xf32>
    tpu.vector_store %arg12[%c1_131, %c0_132], %366 {strides = array<i32>} : memref<34x64xf32, #tpu.memory_space<vmem>>, vector<32x32xf32>,
    %c0_133 = arith.constant 0 : index
    %c0_134 = arith.constant 0 : index
    %368 = vector.load %arg12[%c0_133, %c0_134] : memref<34x64xf32, #tpu.memory_space<vmem>>, vector<32x32xf32>
    %369 = vector.broadcast %1 : vector<32x1xf32> to vector<32x32xf32>
    %370 = arith.mulf %368, %369 : vector<32x32xf32>
    %c2_135 = arith.constant 2 : index
    %c0_136 = arith.constant 0 : index
    %371 = vector.load %arg12[%c2_135, %c0_136] : memref<34x64xf32, #tpu.memory_space<vmem>>, vector<32x32xf32>
    %372 = vector.broadcast %2 : vector<32x1xf32> to vector<32x32xf32>
    %373 = arith.mulf %371, %372 : vector<32x32xf32>
    %374 = tpu.concatenate %370, %366, %373 in 1 : vector<32x32xf32>, vector<32x32xf32>, vector<32x32xf32> -> vector<32x96xf32>
    %c1_137 = arith.constant 1 : index
    %c0_138 = arith.constant 0 : index
    %c0_139 = arith.constant 0 : index
    %375 = vector.load %arg7[%c1_137, %c0_138, %c0_139] : memref<2x96x64xf32, #tpu.memory_space<vmem>>, vector<1x96x64xf32>
    %376 = vector.shape_cast %375 : vector<1x96x64xf32> to vector<96x64xf32>
    %cst_140 = arith.constant dense<0.000000e+00> : vector<32x64xf32>
    %377 = tpu.matmul %374, %376, %cst_140 {dimension_numbers = #tpu.dot_dimension_numbers<[1], [0], [0], [1], [0, 0, 1, 1], [], []>} : vector<32x96xf32>, vector<96x64xf32>, vector<32x64xf32> -> vector<32x64xf32>
    %c1_141 = arith.constant 1 : index
    %c0_142 = arith.constant 0 : index
    %378 = vector.load %arg10[%c1_141, %c0_142] : memref<2x64xf32, #tpu.memory_space<vmem>>, vector<1x64xf32>
    %379 = vector.shape_cast %378 : vector<1x64xf32> to vector<64xf32>
    %380 = vector.shape_cast %379 : vector<64xf32> to vector<1x64xf32>
    %381 = vector.broadcast %380 : vector<1x64xf32> to vector<32x64xf32>
    %382 = arith.addf %377, %381 : vector<32x64xf32>
    %cst_143 = arith.constant 0.000000e+00 : f32
    %383 = vector.broadcast %cst_143 : f32 to vector<32x64xf32>
    %384 = arith.maximumf %382, %383 : vector<32x64xf32>
    %c1_144 = arith.constant 1 : index
    %c0_145 = arith.constant 0 : index
    %385 = vector.load %arg12[%c1_144, %c0_145] : memref<34x64xf32, #tpu.memory_space<vmem>>, vector<32x64xf32>
    tpu.vector_store %arg12[%c1_144, %c0_145], %384 {strides = array<i32>} : memref<34x64xf32, #tpu.memory_space<vmem>>, vector<32x64xf32>,
    %c0_146 = arith.constant 0 : index
    %c0_147 = arith.constant 0 : index
    %386 = vector.load %arg12[%c0_146, %c0_147] : memref<34x64xf32, #tpu.memory_space<vmem>>, vector<32x64xf32>
    %387 = vector.broadcast %1 : vector<32x1xf32> to vector<32x64xf32>
    %388 = arith.mulf %386, %387 : vector<32x64xf32>
    %c2_148 = arith.constant 2 : index
    %c0_149 = arith.constant 0 : index
    %389 = vector.load %arg12[%c2_148, %c0_149] : memref<34x64xf32, #tpu.memory_space<vmem>>, vector<32x64xf32>
    %390 = vector.broadcast %2 : vector<32x1xf32> to vector<32x64xf32>
    %391 = arith.mulf %389, %390 : vector<32x64xf32>
    %c3_150 = arith.constant 3 : index
    %c0_151 = arith.constant 0 : index
    %c0_152 = arith.constant 0 : index
    %392 = vector.load %arg8[%c3_150, %c0_151, %c0_152] : memref<6x64x32xf32, #tpu.memory_space<vmem>>, vector<1x64x32xf32>
    %393 = vector.shape_cast %392 : vector<1x64x32xf32> to vector<64x32xf32>
    %cst_153 = arith.constant dense<0.000000e+00> : vector<32x32xf32>
    %394 = tpu.matmul %388, %393, %cst_153 {dimension_numbers = #tpu.dot_dimension_numbers<[1], [0], [0], [1], [0, 0, 1, 1], [], []>} : vector<32x64xf32>, vector<64x32xf32>, vector<32x32xf32> -> vector<32x32xf32>
    %c4_154 = arith.constant 4 : index
    %c0_155 = arith.constant 0 : index
    %c0_156 = arith.constant 0 : index
    %395 = vector.load %arg8[%c4_154, %c0_155, %c0_156] : memref<6x64x32xf32, #tpu.memory_space<vmem>>, vector<1x64x32xf32>
    %396 = vector.shape_cast %395 : vector<1x64x32xf32> to vector<64x32xf32>
    %cst_157 = arith.constant dense<0.000000e+00> : vector<32x32xf32>
    %397 = tpu.matmul %384, %396, %cst_157 {dimension_numbers = #tpu.dot_dimension_numbers<[1], [0], [0], [1], [0, 0, 1, 1], [], []>} : vector<32x64xf32>, vector<64x32xf32>, vector<32x32xf32> -> vector<32x32xf32>
    %398 = arith.addf %394, %397 : vector<32x32xf32>
    %c5_158 = arith.constant 5 : index
    %c0_159 = arith.constant 0 : index
    %c0_160 = arith.constant 0 : index
    %399 = vector.load %arg8[%c5_158, %c0_159, %c0_160] : memref<6x64x32xf32, #tpu.memory_space<vmem>>, vector<1x64x32xf32>
    %400 = vector.shape_cast %399 : vector<1x64x32xf32> to vector<64x32xf32>
    %cst_161 = arith.constant dense<0.000000e+00> : vector<32x32xf32>
    %401 = tpu.matmul %391, %400, %cst_161 {dimension_numbers = #tpu.dot_dimension_numbers<[1], [0], [0], [1], [0, 0, 1, 1], [], []>} : vector<32x64xf32>, vector<64x32xf32>, vector<32x32xf32> -> vector<32x32xf32>
    %402 = arith.addf %398, %401 : vector<32x32xf32>
    %c9 = arith.constant 9 : index
    %c0_162 = arith.constant 0 : index
    %403 = vector.load %arg9[%c9, %c0_162] : memref<12x32xf32, #tpu.memory_space<vmem>>, vector<1x32xf32>
    %404 = vector.shape_cast %403 : vector<1x32xf32> to vector<32xf32>
    %405 = vector.shape_cast %404 : vector<32xf32> to vector<1x32xf32>
    %406 = vector.broadcast %405 : vector<1x32xf32> to vector<32x32xf32>
    %407 = arith.addf %402, %406 : vector<32x32xf32>
    %408 = arith.addf %407, %366 : vector<32x32xf32>
    %c10 = arith.constant 10 : index
    %c0_163 = arith.constant 0 : index
    %409 = vector.load %arg9[%c10, %c0_163] : memref<12x32xf32, #tpu.memory_space<vmem>>, vector<1x32xf32>
    %410 = vector.shape_cast %409 : vector<1x32xf32> to vector<32xf32>
    %c11 = arith.constant 11 : index
    %c0_164 = arith.constant 0 : index
    %411 = vector.load %arg9[%c11, %c0_164] : memref<12x32xf32, #tpu.memory_space<vmem>>, vector<1x32xf32>
    %412 = vector.shape_cast %411 : vector<1x32xf32> to vector<32xf32>
    %cst_165 = arith.constant dense<0.000000e+00> : vector<32xf32>
    %413 = vector.multi_reduction <add>, %408, %cst_165 [1] : vector<32x32xf32> to vector<32xf32>
    %414 = vector.shape_cast %413 : vector<32xf32> to vector<32x1xf32>
    %cst_166 = arith.constant 3.200000e+01 : f32
    %415 = vector.broadcast %cst_166 : f32 to vector<32x1xf32>
    %416 = arith.divf %414, %415 : vector<32x1xf32>
    %417 = vector.broadcast %416 : vector<32x1xf32> to vector<32x32xf32>
    %418 = arith.subf %408, %417 : vector<32x32xf32>
    %419 = arith.mulf %418, %418 : vector<32x32xf32>
    %cst_167 = arith.constant dense<0.000000e+00> : vector<32xf32>
    %420 = vector.multi_reduction <add>, %419, %cst_167 [1] : vector<32x32xf32> to vector<32xf32>
    %421 = vector.shape_cast %420 : vector<32xf32> to vector<32x1xf32>
    %cst_168 = arith.constant 3.200000e+01 : f32
    %422 = vector.broadcast %cst_168 : f32 to vector<32x1xf32>
    %423 = arith.divf %421, %422 : vector<32x1xf32>
    %424 = vector.broadcast %416 : vector<32x1xf32> to vector<32x32xf32>
    %425 = arith.subf %408, %424 : vector<32x32xf32>
    %cst_169 = arith.constant 9.99999974E-6 : f32
    %426 = vector.broadcast %cst_169 : f32 to vector<32x1xf32>
    %427 = arith.addf %423, %426 : vector<32x1xf32>
    %428 = math.rsqrt %427 : vector<32x1xf32>
    %429 = vector.broadcast %428 : vector<32x1xf32> to vector<32x32xf32>
    %430 = arith.mulf %425, %429 : vector<32x32xf32>
    %431 = vector.shape_cast %410 : vector<32xf32> to vector<1x32xf32>
    %432 = vector.broadcast %431 : vector<1x32xf32> to vector<32x32xf32>
    %433 = arith.mulf %430, %432 : vector<32x32xf32>
    %434 = vector.shape_cast %412 : vector<32xf32> to vector<1x32xf32>
    %435 = vector.broadcast %434 : vector<1x32xf32> to vector<32x32xf32>
    %436 = arith.addf %433, %435 : vector<32x32xf32>
    %c0_170 = arith.constant 0 : index
    %c0_171 = arith.constant 0 : index
    %437 = vector.load %arg11[%c0_170, %c0_171] : memref<32x32xf32, #tpu.memory_space<vmem>>, vector<32x32xf32>
    tpu.vector_store %arg11[%c0_170, %c0_171], %436 {strides = array<i32>} : memref<32x32xf32, #tpu.memory_space<vmem>>, vector<32x32xf32>,
    return
  }
  func.func @transform_0(%arg0: i32) -> (i32, i32) {
    %c0_i32 = arith.constant 0 : i32
    %c0_i32_0 = arith.constant 0 : i32
    %c0_i32_1 = arith.constant 0 : i32
    return %c0_i32, %c0_i32_0 : i32, i32
  }
  func.func @transform_1(%arg0: i32) -> (i32, i32) {
    %c0_i32 = arith.constant 0 : i32
    %c0_i32_0 = arith.constant 0 : i32
    %c0_i32_1 = arith.constant 0 : i32
    return %c0_i32, %c0_i32_0 : i32, i32
  }
  func.func @transform_2(%arg0: i32) -> (i32, i32) {
    %c0_i32 = arith.constant 0 : i32
    %c0_i32_0 = arith.constant 0 : i32
    %c0_i32_1 = arith.constant 0 : i32
    return %c0_i32, %c0_i32_0 : i32, i32
  }
  func.func @transform_3(%arg0: i32) -> (i32, i32, i32) {
    %c0_i32 = arith.constant 0 : i32
    %c0_i32_0 = arith.constant 0 : i32
    %c0_i32_1 = arith.constant 0 : i32
    %c0_i32_2 = arith.constant 0 : i32
    return %c0_i32, %c0_i32_0, %c0_i32_1 : i32, i32, i32
  }
  func.func @transform_4(%arg0: i32) -> (i32, i32) {
    %c0_i32 = arith.constant 0 : i32
    %c0_i32_0 = arith.constant 0 : i32
    %c0_i32_1 = arith.constant 0 : i32
    return %c0_i32, %c0_i32_0 : i32, i32
  }
  func.func @transform_5(%arg0: i32) -> (i32, i32, i32) {
    %c0_i32 = arith.constant 0 : i32
    %c0_i32_0 = arith.constant 0 : i32
    %c0_i32_1 = arith.constant 0 : i32
    %c0_i32_2 = arith.constant 0 : i32
    return %c0_i32, %c0_i32_0, %c0_i32_1 : i32, i32, i32
  }
  func.func @transform_6(%arg0: i32) -> (i32, i32, i32) {
    %c0_i32 = arith.constant 0 : i32
    %c0_i32_0 = arith.constant 0 : i32
    %c0_i32_1 = arith.constant 0 : i32
    %c0_i32_2 = arith.constant 0 : i32
    return %c0_i32, %c0_i32_0, %c0_i32_1 : i32, i32, i32
  }
  func.func @transform_7(%arg0: i32) -> (i32, i32, i32) {
    %c0_i32 = arith.constant 0 : i32
    %c0_i32_0 = arith.constant 0 : i32
    %c0_i32_1 = arith.constant 0 : i32
    %c0_i32_2 = arith.constant 0 : i32
    return %c0_i32, %c0_i32_0, %c0_i32_1 : i32, i32, i32
  }
  func.func @transform_8(%arg0: i32) -> (i32, i32) {
    %c0_i32 = arith.constant 0 : i32
    %c0_i32_0 = arith.constant 0 : i32
    %c0_i32_1 = arith.constant 0 : i32
    return %c0_i32, %c0_i32_0 : i32, i32
  }
  func.func @transform_9(%arg0: i32) -> (i32, i32) {
    %c0_i32 = arith.constant 0 : i32
    %c0_i32_0 = arith.constant 0 : i32
    %c0_i32_1 = arith.constant 0 : i32
    return %c0_i32, %c0_i32_0 : i32, i32
  }
  func.func @transform_10(%arg0: i32) -> (i32, i32) {
    %c0_i32 = arith.constant 0 : i32
    %c0_i32_0 = arith.constant 0 : i32
    %c0_i32_1 = arith.constant 0 : i32
    return %c0_i32, %c0_i32_0 : i32, i32
  }
}

</mosaic_0001>

<llo_original>
// kernel: tile.13
$region0: #{tile.13}
  #allocation0 [shape = 's32[1]{0}', space=sflag, size = 0x4, scoped, tag = 'scoped memory for tile.13']
  %s0 = inlined_call_operand.vmem [shape: f32[16], index: 0, kind: input, shape index: {}]
  %s1 = inlined_call_operand.vmem [shape: f32[2,16], index: 1, kind: output, shape index: {}]
  // Predicated region
  $region2: #{tile.13} parent=0 // pred_check
    _
  $region3: #{tile.13} parent=0 // pred_check_branch
    %3 = sbr.rel (0) target = $region5
  $region4: #{tile.13} parent=0 // pred_region
    _
  $region5: #{tile.13} parent=0 // pred_fallthru
    _
  %v4 = vld [vmem:[%s0] ss:$0 sm:$0xff]
  %5 = vst [vmem:[%s1] sm:$0x3] %v4

// kernel: tile.14
$region0: #{tile.14}
  %s0 = inlined_call_operand.vmem [shape: f32[2,16], index: 0, kind: input, shape index: {}]
  %s1 = inlined_call_operand.vmem [shape: f32[32,1], index: 1, kind: output, shape index: {}]
  $region1: #{tile.14} parent=0
    #allocation0 [shape = 'u8[4096]{0}', space=vmem, size = 0x1000, scoped, tag = 'scoped mem for output reshape']
    #allocation1 [shape = 'u8[4096]{0}', space=vmem, size = 0x1000, scoped, tag = 'scoped mem for input reshape']
    %s3 = sshll.u32 1, 2
    %s4 = ssub.s32 %s3, 1
    %v5 = vld [vmem:[%s0] sm:%s4]
    %6 = vst [vmem:[#allocation1] sm:%s4] %v5
    %v7 = vld [vmem:[#allocation1] sm:$0x1]
    %vm8 = vcmask 130048
    %9 = vst.msk [vmem:[#allocation0] sm:$0x1] %vm8, %v7
    %s10 = scalar_lea.vmem [#allocation1], 1
    %v11 = vld [vmem:[%s10] sm:$0x1]
    %12 = vrot.lane.b32.xlu0 %v11, 16
    %v13 = vpop.permute.xlu0 %12
    %vm14 = vcmask 261248
    %15 = vst.msk [vmem:[#allocation0] sm:$0x1] %vm14, %v13
    %s17 = sshll.u32 1, 1
    %s18 = ssub.s32 %s17, 1
    %v20 = vld [vmem:[#allocation0] sm:%s18]
    %s21 = sshll.u32 1, 1
    %s22 = ssub.s32 %s21, 1
    %23 = vst [vmem:[%s1] sm:%s22] %v20

// kernel: encoder_forward.1
$region0: #{encoder_forward.1}
  #allocation0 [shape = 'u32[]', space=smem, size = 0x4, offset = 0x4, fixed_abs, tag = 'smem constant byte address 0x4 - core index']
  #allocation1 [shape = 'u32[144,128]{1,0:T(1,128)}', space=vmem, size = 0x12000, scoped, tag = 'internal scratch']
  #allocation2 [shape = 'f32[34,64]{1,0:T(8,128)}', space=vmem, size = 0x5000, scoped, tag = 'scratch operand']
  %s0 = inlined_call_operand.vmem [shape: f32[32,32], index: 0, kind: input, shape index: {}]
  %s1 = inlined_call_operand.vmem [shape: f32[2,16], index: 1, kind: input, shape index: {}]
  %s2 = inlined_call_operand.vmem [shape: f32[32,2], index: 2, kind: input, shape index: {}]
  %s3 = inlined_call_operand.vmem [shape: f32[2,32,96], index: 3, kind: input, shape index: {}]
  %s4 = inlined_call_operand.vmem [shape: f32[2,96], index: 4, kind: input, shape index: {}]
  %s5 = inlined_call_operand.vmem [shape: f32[2,32,32], index: 5, kind: input, shape index: {}]
  %s6 = inlined_call_operand.vmem [shape: f32[2,96,64], index: 6, kind: input, shape index: {}]
  %s7 = inlined_call_operand.vmem [shape: f32[6,64,32], index: 7, kind: input, shape index: {}]
  %s8 = inlined_call_operand.vmem [shape: f32[12,32], index: 8, kind: input, shape index: {}]
  %s9 = inlined_call_operand.vmem [shape: f32[2,64], index: 9, kind: input, shape index: {}]
  %s10 = inlined_call_operand.hbm [shape: f32[32,32], index: 10, kind: output, shape index: {}]
  %s11 = sld [smem:[#allocation0]]
  $region50: #{encoder_forward.1} parent=0
    _
  %s13 = ssub.s32 1, %s11
  %s14 = scalar_select 0, %s13, %s11
  $region1: #{encoder_forward.1} parent=0
    #allocation3 [shape = 'u8[16384]{0}', space=vmem, size = 0x4000, scoped, tag = 'output window, operand 0, single buffered']
    #allocation4 [shape = 's32[1]{0}', space=sflag, size = 0x4, scoped, tag = 'scoped memory for encoder_forward.1']
    %15 = vsyncpa [#allocation4], 0
    // Predicated region
    $region2: #{encoder_forward.1} parent=1 // pred_check
      _
    $region3: #{encoder_forward.1} parent=1 // pred_check_branch
      %17 = sbr.rel (0) target = $region5
    $region4: #{encoder_forward.1} parent=1 // pred_region
      _
    $region5: #{encoder_forward.1} parent=1 // pred_fallthru
      _
    // Predicated region
    $region6: #{encoder_forward.1} parent=1 // pred_check
      _
    $region7: #{encoder_forward.1} parent=1 // pred_check_branch
      %19 = sbr.rel (0) target = $region9
    $region8: #{encoder_forward.1} parent=1 // pred_region
      _
    $region9: #{encoder_forward.1} parent=1 // pred_fallthru
      _
    // Predicated region
    $region10: #{encoder_forward.1} parent=1 // pred_check
      _
    $region11: #{encoder_forward.1} parent=1 // pred_check_branch
      %21 = sbr.rel (0) target = $region13
    $region12: #{encoder_forward.1} parent=1 // pred_region
      _
    $region13: #{encoder_forward.1} parent=1 // pred_fallthru
      _
    // Predicated region
    $region14: #{encoder_forward.1} parent=1 // pred_check
      _
    $region15: #{encoder_forward.1} parent=1 // pred_check_branch
      %23 = sbr.rel (0) target = $region17
    $region16: #{encoder_forward.1} parent=1 // pred_region
      _
    $region17: #{encoder_forward.1} parent=1 // pred_fallthru
      _
    // Predicated region
    $region18: #{encoder_forward.1} parent=1 // pred_check
      _
    $region19: #{encoder_forward.1} parent=1 // pred_check_branch
      %25 = sbr.rel (0) target = $region21
    $region20: #{encoder_forward.1} parent=1 // pred_region
      _
    $region21: #{encoder_forward.1} parent=1 // pred_fallthru
      _
    // Predicated region
    $region22: #{encoder_forward.1} parent=1 // pred_check
      _
    $region23: #{encoder_forward.1} parent=1 // pred_check_branch
      %27 = sbr.rel (0) target = $region25
    $region24: #{encoder_forward.1} parent=1 // pred_region
      _
    $region25: #{encoder_forward.1} parent=1 // pred_fallthru
      _
    // Predicated region
    $region26: #{encoder_forward.1} parent=1 // pred_check
      _
    $region27: #{encoder_forward.1} parent=1 // pred_check_branch
      %29 = sbr.rel (0) target = $region29
    $region28: #{encoder_forward.1} parent=1 // pred_region
      _
    $region29: #{encoder_forward.1} parent=1 // pred_fallthru
      _
    // Predicated region
    $region30: #{encoder_forward.1} parent=1 // pred_check
      _
    $region31: #{encoder_forward.1} parent=1 // pred_check_branch
      %31 = sbr.rel (0) target = $region33
    $region32: #{encoder_forward.1} parent=1 // pred_region
      _
    $region33: #{encoder_forward.1} parent=1 // pred_fallthru
      _
    // Predicated region
    $region34: #{encoder_forward.1} parent=1 // pred_check
      _
    $region35: #{encoder_forward.1} parent=1 // pred_check_branch
      %33 = sbr.rel (0) target = $region37
    $region36: #{encoder_forward.1} parent=1 // pred_region
      _
    $region37: #{encoder_forward.1} parent=1 // pred_fallthru
      _
    // Predicated region
    $region38: #{encoder_forward.1} parent=1 // pred_check
      _
    $region39: #{encoder_forward.1} parent=1 // pred_check_branch
      %35 = sbr.rel (0) target = $region41
    $region40: #{encoder_forward.1} parent=1 // pred_region
      _
    $region41: #{encoder_forward.1} parent=1 // pred_fallthru
      _
    %v36 = vld [vmem:[%s0] sm:$0xff]
    %v37 = vld [vmem:[%s0 + $0x8] sm:$0xff]
    %v38 = vld [vmem:[%s0 + $0x10] sm:$0xff]
    %v39 = vld [vmem:[%s0 + $0x18] sm:$0xff]
    %v40 = vld [vmem:[%s2] sm:$0xff]
    %v41 = vld [vmem:[%s2 + $0x8] sm:$0xff]
    %v42 = vld [vmem:[%s2 + $0x10] sm:$0xff]
    %v43 = vld [vmem:[%s2 + $0x18] sm:$0xff]
    %vm44 = vcmask 523264
    %45 = vst.msk [vmem:[#allocation2] sm:$0xff] %vm44, 0.0
    %46 = vst.msk [vmem:[#allocation2 + $0x8] sm:$0xff] %vm44, 0.0
    %47 = vst.msk [vmem:[#allocation2 + $0x10] sm:$0xff] %vm44, 0.0
    %48 = vst.msk [vmem:[#allocation2 + $0x18] sm:$0xff] %vm44, 0.0
    %vm49 = vcmask 517120
    %50 = vst.msk [vmem:[#allocation2 + $0x20] sm:$0x3] %vm49, 0.0
    %v51 = vld [vmem:[%s3] sm:$0xff]
    %v52 = vld [vmem:[%s3 + $0x8] sm:$0xff]
    %v53 = vld [vmem:[%s3 + $0x10] sm:$0xff]
    %v54 = vld [vmem:[%s3 + $0x18] sm:$0xff]
    %v55 = vld [vmem:[%s4] sm:$0x1]
    %v56 = vlaneseq
    %v57 = vshrl.u32 %v56, 7
    %v58 = vsub.s32 0, %v57
    %v59 = vrot.slane %v55, %v58
    %vm60 = vcmask 261120
    %v62 = vsel %vm60, %v36, 0
    %v65 = vsel %vm60, %v37, 0
    %v68 = vsel %vm60, %v38, 0
    %v71 = vsel %vm60, %v39, 0
    %73 = vmatprep.subr.mxu0 0.0
    %74 = vmatpush1.msra.mxu0 0.0
    %75 = vmatprep.subr.mxu0 0.0
    %76 = vmatpush1.msra.mxu0 0.0
    %77 = vmatprep.subr.mxu0 0.0
    %78 = vmatpush1.msra.mxu0 0.0
    %79 = vmatprep.subr.mxu0 0.0
    %80 = vmatpush1.msra.mxu0 0.0
    %81 = vmatprep.subr.mxu0 0.0
    %82 = vmatpush1.msra.mxu0 0.0
    %83 = vmatprep.subr.mxu0 0.0
    %84 = vmatpush1.msra.mxu0 0.0
    %85 = vmatprep.subr.mxu0 0.0
    %86 = vmatpush1.msra.mxu0 0.0
    %87 = vmatprep.subr.mxu0 0.0
    %88 = vmatpush1.msra.mxu0 0.0
    %89 = vmatprep.subr.mxu0 0.0
    %90 = vmatpush1.msra.mxu0 0.0
    %91 = vmatprep.subr.mxu0 0.0
    %92 = vmatpush1.msra.mxu0 0.0
    %93 = vmatprep.subr.mxu0 0.0
    %94 = vmatpush1.msra.mxu0 0.0
    %95 = vmatprep.subr.mxu0 0.0
    %96 = vmatpush1.msra.mxu0 0.0
    %97 = vmatprep.subr.mxu0 0.0
    %98 = vmatpush1.msra.mxu0 %v54
    %99 = vmatprep.subr.mxu0 0.0
    %100 = vmatpush1.msra.mxu0 %v53
    %101 = vmatprep.subr.mxu0 0.0
    %102 = vmatpush1.msra.mxu0 %v52
    %103 = vmatprep.subr.mxu0 0.0
    %104 = vmatpush1.msra.mxu0 %v51
    %105 = vmatprep.subr.mxu0 0.0
    %106 = vmatpush2.msra.mxu0 0.0
    %107 = vmatprep.subr.mxu0 0.0
    %108 = vmatpush2.msra.mxu0 0.0
    %109 = vmatprep.subr.mxu0 0.0
    %110 = vmatpush2.msra.mxu0 0.0
    %111 = vmatprep.subr.mxu0 0.0
    %112 = vmatpush2.msra.mxu0 0.0
    %113 = vmatprep.subr.mxu0 0.0
    %114 = vmatpush2.msra.mxu0 0.0
    %115 = vmatprep.subr.mxu0 0.0
    %116 = vmatpush2.msra.mxu0 0.0
    %117 = vmatprep.subr.mxu0 0.0
    %118 = vmatpush2.msra.mxu0 0.0
    %119 = vmatprep.subr.mxu0 0.0
    %120 = vmatpush2.msra.mxu0 0.0
    %121 = vmatprep.subr.mxu0 0.0
    %122 = vmatpush2.msra.mxu0 0.0
    %123 = vmatprep.subr.mxu0 0.0
    %124 = vmatpush2.msra.mxu0 0.0
    %125 = vmatprep.subr.mxu0 0.0
    %126 = vmatpush2.msra.mxu0 0.0
    %127 = vmatprep.subr.mxu0 0.0
    %128 = vmatpush2.msra.mxu0 0.0
    %129 = vmatprep.subr.mxu0 0.0
    %130 = vmatpush2.msra.mxu0 0.0
    %131 = vmatprep.subr.mxu0 0.0
    %132 = vmatpush2.msra.mxu0 0.0
    %133 = vmatprep.subr.mxu0 0.0
    %134 = vmatpush2.msra.mxu0 0.0
    %135 = vmatprep.subr.mxu0 0.0
    %136 = vmatpush2.msra.mxu0 0.0
    %137 = vmatprep.mubr.f32.mxu0 0.0
    %138 = vmatmul.mubr.f32.gmra.mxu0 %v62
    %v139 = vpop.f32.mrf.mxu0
    %v140 = vadd.f32 %v59, %v139
    %v141 = vpop.f32.mrf.mxu0
    %142 = vmatprep.mubr.f32.mxu0 0.0
    %143 = vmatmul.mubr.f32.gmra.mxu0 %v65
    %v144 = vpop.f32.mrf.mxu0
    %v145 = vadd.f32 %v59, %v144
    %v146 = vpop.f32.mrf.mxu0
    %147 = vmatprep.mubr.f32.mxu0 0.0
    %148 = vmatmul.mubr.f32.gmra.mxu0 %v68
    %v149 = vpop.f32.mrf.mxu0
    %v150 = vadd.f32 %v59, %v149
    %v151 = vpop.f32.mrf.mxu0
    %152 = vmatprep.mubr.f32.mxu0 0.0
    %153 = vmatmul.mubr.f32.gmra.mxu0 %v71
    %v154 = vpop.f32.mrf.mxu0
    %v155 = vadd.f32 %v59, %v154
    %v156 = vpop.f32.mrf.mxu0
    %157 = vdwg.mxu0
    %v158 = vld [vmem:[%s1] sm:$0x1]
    %v159 = vlaneseq
    %v160 = vshrl.u32 %v159, 7
    %v161 = vsub.s32 0, %v160
    %v162 = vrot.slane %v158, %v161
    %165 = vrot.lane.b32.xlu0 %v140, 96
    %v166 = vpop.permute.xlu0 %165
    %167 = vrot.lane.b32.xlu0 %v145, 96
    %v168 = vpop.permute.xlu0 %167
    %vm169 = vcmask 130048
    %v170 = vsel %vm169, %v140, 0
    %v172 = vsel %vm169, %v145, 0
    %v174 = vsel %vm169, %v166, 0
    %v176 = vsel %vm169, %v168, 0
    %178 = vmatprep.subr.mxu0 0.0
    %179 = vmatpush1.xpose.msra.mxu0 0.0
    %180 = vmatprep.subr.mxu0 0.0
    %181 = vmatpush1.xpose.msra.mxu0 0.0
    %182 = vmatprep.subr.mxu0 0.0
    %183 = vmatpush1.xpose.msra.mxu0 0.0
    %184 = vmatprep.subr.mxu0 0.0
    %185 = vmatpush1.xpose.msra.mxu0 0.0
    %186 = vmatprep.subr.mxu0 0.0
    %187 = vmatpush1.xpose.msra.mxu0 0.0
    %188 = vmatprep.subr.mxu0 0.0
    %189 = vmatpush1.xpose.msra.mxu0 0.0
    %190 = vmatprep.subr.mxu0 0.0
    %191 = vmatpush1.xpose.msra.mxu0 0.0
    %192 = vmatprep.subr.mxu0 0.0
    %193 = vmatpush1.xpose.msra.mxu0 0.0
    %194 = vmatprep.subr.mxu0 0.0
    %195 = vmatpush1.xpose.msra.mxu0 0.0
    %196 = vmatprep.subr.mxu0 0.0
    %197 = vmatpush1.xpose.msra.mxu0 0.0
    %198 = vmatprep.subr.mxu0 0.0
    %199 = vmatpush1.xpose.msra.mxu0 0.0
    %200 = vmatprep.subr.mxu0 0.0
    %201 = vmatpush1.xpose.msra.mxu0 0.0
    %202 = vmatprep.subr.mxu0 0.0
    %203 = vmatpush1.xpose.msra.mxu0 0.0
    %204 = vmatprep.subr.mxu0 0.0
    %205 = vmatpush1.xpose.msra.mxu0 0.0
    %206 = vmatprep.subr.mxu0 0.0
    %207 = vmatpush1.xpose.msra.mxu0 %v176
    %208 = vmatprep.subr.mxu0 0.0
    %209 = vmatpush1.xpose.msra.mxu0 %v174
    %210 = vmatprep.subr.mxu0 0.0
    %211 = vmatpush2.xpose.msra.mxu0 0.0
    %212 = vmatprep.subr.mxu0 0.0
    %213 = vmatpush2.xpose.msra.mxu0 0.0
    %214 = vmatprep.subr.mxu0 0.0
    %215 = vmatpush2.xpose.msra.mxu0 0.0
    %216 = vmatprep.subr.mxu0 0.0
    %217 = vmatpush2.xpose.msra.mxu0 0.0
    %218 = vmatprep.subr.mxu0 0.0
    %219 = vmatpush2.xpose.msra.mxu0 0.0
    %220 = vmatprep.subr.mxu0 0.0
    %221 = vmatpush2.xpose.msra.mxu0 0.0
    %222 = vmatprep.subr.mxu0 0.0
    %223 = vmatpush2.xpose.msra.mxu0 0.0
    %224 = vmatprep.subr.mxu0 0.0
    %225 = vmatpush2.xpose.msra.mxu0 0.0
    %226 = vmatprep.subr.mxu0 0.0
    %227 = vmatpush2.xpose.msra.mxu0 0.0
    %228 = vmatprep.subr.mxu0 0.0
    %229 = vmatpush2.xpose.msra.mxu0 0.0
    %230 = vmatprep.subr.mxu0 0.0
    %231 = vmatpush2.xpose.msra.mxu0 0.0
    %232 = vmatprep.subr.mxu0 0.0
    %233 = vmatpush2.xpose.msra.mxu0 0.0
    %234 = vmatprep.subr.mxu0 0.0
    %235 = vmatpush2.xpose.msra.mxu0 0.0
    %236 = vmatprep.subr.mxu0 0.0
    %237 = vmatpush2.xpose.msra.mxu0 0.0
    %238 = vmatprep.subr.mxu0 0.0
    %239 = vmatpush2.xpose.msra.mxu0 0.0
    %240 = vmatprep.subr.mxu0 0.0
    %241 = vmatpush2.xpose.msra.mxu0 0.0
    %242 = vmatprep.mubr.f32.mxu0 0.0
    %243 = vmatmul.mubr.f32.gmra.mxu0 %v170
    %v244 = vpop.f32.mrf.mxu0
    %v245 = vadd.f32 %v162, %v244
    %v246 = vpop.f32.mrf.mxu0
    %247 = vmatprep.mubr.f32.mxu0 0.0
    %248 = vmatmul.mubr.f32.gmra.mxu0 %v172
    %v249 = vpop.f32.mrf.mxu0
    %v250 = vadd.f32 %v162, %v249
    %v251 = vpop.f32.mrf.mxu0
    %252 = vdwg.mxu0
    %v253 = vsel %vm169, %v245, -inf
    %254 = vmax.xlane.f32.xlu0 %v253
    %v255 = vpop.xlane.xlu0 %254
    %v256 = vsel %vm169, %v250, -inf
    %257 = vmax.xlane.f32.xlu0 %v256
    %v258 = vpop.xlane.xlu0 %257
    %v259 = vsub.f32 %v245, %v255
    %v260 = vsub.f32 %v250, %v258
    %v261 = vmul.f32 %v259, 1.442695
    %v262 = vpow.pop %v261
    %v263 = vmul.f32 %v260, 1.442695
    %v264 = vpow.pop %v263
    %v265 = vsel %vm169, %v262, 0.0
    %266 = vadd.xlane.f32.xlu0 %v265
    %v267 = vpop.xlane.xlu0 %266
    %v268 = vsel %vm169, %v264, 0.0
    %269 = vadd.xlane.f32.xlu0 %v268
    %v270 = vpop.xlane.xlu0 %269
    %v271 = vrcp.pop %v267
    %v272 = vrcp.pop %v270
    %v273 = vmul.f32 %v267, %v271
    %v274 = vmul.f32 %v270, %v272
    %v275 = vsub.f32 2.0, %v273
    %v276 = vsub.f32 2.0, %v274
    %v277 = vmul.f32 %v271, %v275
    %v278 = vmul.f32 %v272, %v276
    %v279 = vmul.f32 %v262, %v277
    %v280 = vmul.f32 %v264, %v278
    %281 = vrot.lane.b32.xlu0 %v140, 64
    %v282 = vpop.permute.xlu0 %281
    %283 = vrot.lane.b32.xlu0 %v145, 64
    %v284 = vpop.permute.xlu0 %283
    %v288 = vsel %vm169, %v279, 0
    %v291 = vsel %vm169, %v280, 0
    %293 = vmatprep.subr.mxu0 0.0
    %294 = vmatpush1.msra.mxu0 0.0
    %295 = vmatprep.subr.mxu0 0.0
    %296 = vmatpush1.msra.mxu0 0.0
    %297 = vmatprep.subr.mxu0 0.0
    %298 = vmatpush1.msra.mxu0 0.0
    %299 = vmatprep.subr.mxu0 0.0
    %300 = vmatpush1.msra.mxu0 0.0
    %301 = vmatprep.subr.mxu0 0.0
    %302 = vmatpush1.msra.mxu0 0.0
    %303 = vmatprep.subr.mxu0 0.0
    %304 = vmatpush1.msra.mxu0 0.0
    %305 = vmatprep.subr.mxu0 0.0
    %306 = vmatpush1.msra.mxu0 0.0
    %307 = vmatprep.subr.mxu0 0.0
    %308 = vmatpush1.msra.mxu0 0.0
    %309 = vmatprep.subr.mxu0 0.0
    %310 = vmatpush1.msra.mxu0 0.0
    %311 = vmatprep.subr.mxu0 0.0
    %312 = vmatpush1.msra.mxu0 0.0
    %313 = vmatprep.subr.mxu0 0.0
    %314 = vmatpush1.msra.mxu0 0.0
    %315 = vmatprep.subr.mxu0 0.0
    %316 = vmatpush1.msra.mxu0 0.0
    %317 = vmatprep.subr.mxu0 0.0
    %318 = vmatpush1.msra.mxu0 0.0
    %319 = vmatprep.subr.mxu0 0.0
    %320 = vmatpush1.msra.mxu0 0.0
    %321 = vmatprep.subr.mxu0 0.0
    %322 = vmatpush1.msra.mxu0 %v284
    %323 = vmatprep.subr.mxu0 0.0
    %324 = vmatpush1.msra.mxu0 %v282
    %325 = vmatprep.subr.mxu0 0.0
    %326 = vmatpush2.msra.mxu0 0.0
    %327 = vmatprep.subr.mxu0 0.0
    %328 = vmatpush2.msra.mxu0 0.0
    %329 = vmatprep.subr.mxu0 0.0
    %330 = vmatpush2.msra.mxu0 0.0
    %331 = vmatprep.subr.mxu0 0.0
    %332 = vmatpush2.msra.mxu0 0.0
    %333 = vmatprep.subr.mxu0 0.0
    %334 = vmatpush2.msra.mxu0 0.0
    %335 = vmatprep.subr.mxu0 0.0
    %336 = vmatpush2.msra.mxu0 0.0
    %337 = vmatprep.subr.mxu0 0.0
    %338 = vmatpush2.msra.mxu0 0.0
    %339 = vmatprep.subr.mxu0 0.0
    %340 = vmatpush2.msra.mxu0 0.0
    %341 = vmatprep.subr.mxu0 0.0
    %342 = vmatpush2.msra.mxu0 0.0
    %343 = vmatprep.subr.mxu0 0.0
    %344 = vmatpush2.msra.mxu0 0.0
    %345 = vmatprep.subr.mxu0 0.0
    %346 = vmatpush2.msra.mxu0 0.0
    %347 = vmatprep.subr.mxu0 0.0
    %348 = vmatpush2.msra.mxu0 0.0
    %349 = vmatprep.subr.mxu0 0.0
    %350 = vmatpush2.msra.mxu0 0.0
    %351 = vmatprep.subr.mxu0 0.0
    %352 = vmatpush2.msra.mxu0 0.0
    %353 = vmatprep.subr.mxu0 0.0
    %354 = vmatpush2.msra.mxu0 0.0
    %355 = vmatprep.subr.mxu0 0.0
    %356 = vmatpush2.msra.mxu0 0.0
    %357 = vmatprep.mubr.f32.mxu0 0.0
    %358 = vmatmul.mubr.f32.gmra.mxu0 %v288
    %v359 = vpop.f32.mrf.mxu0
    %v360 = vadd.f32 0.0, %v359
    %v361 = vpop.f32.mrf.mxu0
    %362 = vmatprep.mubr.f32.mxu0 0.0
    %363 = vmatmul.mubr.f32.gmra.mxu0 %v291
    %v364 = vpop.f32.mrf.mxu0
    %v365 = vadd.f32 0.0, %v364
    %v366 = vpop.f32.mrf.mxu0
    %367 = vdwg.mxu0
    %368 = vrot.lane.b32.xlu0 %v140, 112
    %v369 = vpop.permute.xlu0 %368
    %370 = vrot.lane.b32.xlu0 %v145, 112
    %v371 = vpop.permute.xlu0 %370
    %372 = vrot.lane.b32.xlu0 %v140, 80
    %v373 = vpop.permute.xlu0 %372
    %374 = vrot.lane.b32.xlu0 %v145, 80
    %v375 = vpop.permute.xlu0 %374
    %v376 = vsel %vm169, %v369, 0
    %v378 = vsel %vm169, %v371, 0
    %v380 = vsel %vm169, %v373, 0
    %v382 = vsel %vm169, %v375, 0
    %384 = vmatprep.subr.mxu0 0.0
    %385 = vmatpush1.xpose.msra.mxu0 0.0
    %386 = vmatprep.subr.mxu0 0.0
    %387 = vmatpush1.xpose.msra.mxu0 0.0
    %388 = vmatprep.subr.mxu0 0.0
    %389 = vmatpush1.xpose.msra.mxu0 0.0
    %390 = vmatprep.subr.mxu0 0.0
    %391 = vmatpush1.xpose.msra.mxu0 0.0
    %392 = vmatprep.subr.mxu0 0.0
    %393 = vmatpush1.xpose.msra.mxu0 0.0
    %394 = vmatprep.subr.mxu0 0.0
    %395 = vmatpush1.xpose.msra.mxu0 0.0
    %396 = vmatprep.subr.mxu0 0.0
    %397 = vmatpush1.xpose.msra.mxu0 0.0
    %398 = vmatprep.subr.mxu0 0.0
    %399 = vmatpush1.xpose.msra.mxu0 0.0
    %400 = vmatprep.subr.mxu0 0.0
    %401 = vmatpush1.xpose.msra.mxu0 0.0
    %402 = vmatprep.subr.mxu0 0.0
    %403 = vmatpush1.xpose.msra.mxu0 0.0
    %404 = vmatprep.subr.mxu0 0.0
    %405 = vmatpush1.xpose.msra.mxu0 0.0
    %406 = vmatprep.subr.mxu0 0.0
    %407 = vmatpush1.xpose.msra.mxu0 0.0
    %408 = vmatprep.subr.mxu0 0.0
    %409 = vmatpush1.xpose.msra.mxu0 0.0
    %410 = vmatprep.subr.mxu0 0.0
    %411 = vmatpush1.xpose.msra.mxu0 0.0
    %412 = vmatprep.subr.mxu0 0.0
    %413 = vmatpush1.xpose.msra.mxu0 %v382
    %414 = vmatprep.subr.mxu0 0.0
    %415 = vmatpush1.xpose.msra.mxu0 %v380
    %416 = vmatprep.subr.mxu0 0.0
    %417 = vmatpush2.xpose.msra.mxu0 0.0
    %418 = vmatprep.subr.mxu0 0.0
    %419 = vmatpush2.xpose.msra.mxu0 0.0
    %420 = vmatprep.subr.mxu0 0.0
    %421 = vmatpush2.xpose.msra.mxu0 0.0
    %422 = vmatprep.subr.mxu0 0.0
    %423 = vmatpush2.xpose.msra.mxu0 0.0
    %424 = vmatprep.subr.mxu0 0.0
    %425 = vmatpush2.xpose.msra.mxu0 0.0
    %426 = vmatprep.subr.mxu0 0.0
    %427 = vmatpush2.xpose.msra.mxu0 0.0
    %428 = vmatprep.subr.mxu0 0.0
    %429 = vmatpush2.xpose.msra.mxu0 0.0
    %430 = vmatprep.subr.mxu0 0.0
    %431 = vmatpush2.xpose.msra.mxu0 0.0
    %432 = vmatprep.subr.mxu0 0.0
    %433 = vmatpush2.xpose.msra.mxu0 0.0
    %434 = vmatprep.subr.mxu0 0.0
    %435 = vmatpush2.xpose.msra.mxu0 0.0
    %436 = vmatprep.subr.mxu0 0.0
    %437 = vmatpush2.xpose.msra.mxu0 0.0
    %438 = vmatprep.subr.mxu0 0.0
    %439 = vmatpush2.xpose.msra.mxu0 0.0
    %440 = vmatprep.subr.mxu0 0.0
    %441 = vmatpush2.xpose.msra.mxu0 0.0
    %442 = vmatprep.subr.mxu0 0.0
    %443 = vmatpush2.xpose.msra.mxu0 0.0
    %444 = vmatprep.subr.mxu0 0.0
    %445 = vmatpush2.xpose.msra.mxu0 0.0
    %446 = vmatprep.subr.mxu0 0.0
    %447 = vmatpush2.xpose.msra.mxu0 0.0
    %448 = vmatprep.mubr.f32.mxu0 0.0
    %449 = vmatmul.mubr.f32.gmra.mxu0 %v376
    %v450 = vpop.f32.mrf.mxu0
    %v451 = vadd.f32 %v162, %v450
    %v452 = vpop.f32.mrf.mxu0
    %453 = vmatprep.mubr.f32.mxu0 0.0
    %454 = vmatmul.mubr.f32.gmra.mxu0 %v378
    %v455 = vpop.f32.mrf.mxu0
    %v456 = vadd.f32 %v162, %v455
    %v457 = vpop.f32.mrf.mxu0
    %458 = vdwg.mxu0
    %v459 = vsel %vm169, %v451, -inf
    %460 = vmax.xlane.f32.xlu0 %v459
    %v461 = vpop.xlane.xlu0 %460
    %v462 = vsel %vm169, %v456, -inf
    %463 = vmax.xlane.f32.xlu0 %v462
    %v464 = vpop.xlane.xlu0 %463
    %v465 = vsub.f32 %v451, %v461
    %v466 = vsub.f32 %v456, %v464
    %v467 = vmul.f32 %v465, 1.442695
    %v468 = vpow.pop %v467
    %v469 = vmul.f32 %v466, 1.442695
    %v470 = vpow.pop %v469
    %v471 = vsel %vm169, %v468, 0.0
    %472 = vadd.xlane.f32.xlu0 %v471
    %v473 = vpop.xlane.xlu0 %472
    %v474 = vsel %vm169, %v470, 0.0
    %475 = vadd.xlane.f32.xlu0 %v474
    %v476 = vpop.xlane.xlu0 %475
    %v477 = vrcp.pop %v473
    %v478 = vrcp.pop %v476
    %v479 = vmul.f32 %v473, %v477
    %v480 = vmul.f32 %v476, %v478
    %v481 = vsub.f32 2.0, %v479
    %v482 = vsub.f32 2.0, %v480
    %v483 = vmul.f32 %v477, %v481
    %v484 = vmul.f32 %v478, %v482
    %v485 = vmul.f32 %v468, %v483
    %v486 = vmul.f32 %v470, %v484
    %487 = vrot.lane.b32.xlu0 %v140, 48
    %v488 = vpop.permute.xlu0 %487
    %489 = vrot.lane.b32.xlu0 %v145, 48
    %v490 = vpop.permute.xlu0 %489
    %v494 = vsel %vm169, %v485, 0
    %v497 = vsel %vm169, %v486, 0
    %499 = vmatprep.subr.mxu0 0.0
    %500 = vmatpush1.msra.mxu0 0.0
    %501 = vmatprep.subr.mxu0 0.0
    %502 = vmatpush1.msra.mxu0 0.0
    %503 = vmatprep.subr.mxu0 0.0
    %504 = vmatpush1.msra.mxu0 0.0
    %505 = vmatprep.subr.mxu0 0.0
    %506 = vmatpush1.msra.mxu0 0.0
    %507 = vmatprep.subr.mxu0 0.0
    %508 = vmatpush1.msra.mxu0 0.0
    %509 = vmatprep.subr.mxu0 0.0
    %510 = vmatpush1.msra.mxu0 0.0
    %511 = vmatprep.subr.mxu0 0.0
    %512 = vmatpush1.msra.mxu0 0.0
    %513 = vmatprep.subr.mxu0 0.0
    %514 = vmatpush1.msra.mxu0 0.0
    %515 = vmatprep.subr.mxu0 0.0
    %516 = vmatpush1.msra.mxu0 0.0
    %517 = vmatprep.subr.mxu0 0.0
    %518 = vmatpush1.msra.mxu0 0.0
    %519 = vmatprep.subr.mxu0 0.0
    %520 = vmatpush1.msra.mxu0 0.0
    %521 = vmatprep.subr.mxu0 0.0
    %522 = vmatpush1.msra.mxu0 0.0
    %523 = vmatprep.subr.mxu0 0.0
    %524 = vmatpush1.msra.mxu0 0.0
    %525 = vmatprep.subr.mxu0 0.0
    %526 = vmatpush1.msra.mxu0 0.0
    %527 = vmatprep.subr.mxu0 0.0
    %528 = vmatpush1.msra.mxu0 %v490
    %529 = vmatprep.subr.mxu0 0.0
    %530 = vmatpush1.msra.mxu0 %v488
    %531 = vmatprep.subr.mxu0 0.0
    %532 = vmatpush2.msra.mxu0 0.0
    %533 = vmatprep.subr.mxu0 0.0
    %534 = vmatpush2.msra.mxu0 0.0
    %535 = vmatprep.subr.mxu0 0.0
    %536 = vmatpush2.msra.mxu0 0.0
    %537 = vmatprep.subr.mxu0 0.0
    %538 = vmatpush2.msra.mxu0 0.0
    %539 = vmatprep.subr.mxu0 0.0
    %540 = vmatpush2.msra.mxu0 0.0
    %541 = vmatprep.subr.mxu0 0.0
    %542 = vmatpush2.msra.mxu0 0.0
    %543 = vmatprep.subr.mxu0 0.0
    %544 = vmatpush2.msra.mxu0 0.0
    %545 = vmatprep.subr.mxu0 0.0
    %546 = vmatpush2.msra.mxu0 0.0
    %547 = vmatprep.subr.mxu0 0.0
    %548 = vmatpush2.msra.mxu0 0.0
    %549 = vmatprep.subr.mxu0 0.0
    %550 = vmatpush2.msra.mxu0 0.0
    %551 = vmatprep.subr.mxu0 0.0
    %552 = vmatpush2.msra.mxu0 0.0
    %553 = vmatprep.subr.mxu0 0.0
    %554 = vmatpush2.msra.mxu0 0.0
    %555 = vmatprep.subr.mxu0 0.0
    %556 = vmatpush2.msra.mxu0 0.0
    %557 = vmatprep.subr.mxu0 0.0
    %558 = vmatpush2.msra.mxu0 0.0
    %559 = vmatprep.subr.mxu0 0.0
    %560 = vmatpush2.msra.mxu0 0.0
    %561 = vmatprep.subr.mxu0 0.0
    %562 = vmatpush2.msra.mxu0 0.0
    %563 = vmatprep.mubr.f32.mxu0 0.0
    %564 = vmatmul.mubr.f32.gmra.mxu0 %v494
    %v565 = vpop.f32.mrf.mxu0
    %v566 = vadd.f32 0.0, %v565
    %v567 = vpop.f32.mrf.mxu0
    %568 = vmatprep.mubr.f32.mxu0 0.0
    %569 = vmatmul.mubr.f32.gmra.mxu0 %v497
    %v570 = vpop.f32.mrf.mxu0
    %v571 = vadd.f32 0.0, %v570
    %v572 = vpop.f32.mrf.mxu0
    %573 = vdwg.mxu0
    %576 = vrot.lane.b32.xlu0 %v566, 16
    %v577 = vpop.permute.xlu0 %576
    %578 = vrot.lane.b32.xlu0 %v571, 16
    %v579 = vpop.permute.xlu0 %578
    %v582 = vsel %vm169, %v360, %v577
    %v583 = vsel %vm169, %v365, %v579
    %v584 = vld [vmem:[%s1 + $0x1] sm:$0x1]
    %v585 = vlaneseq
    %v586 = vshrl.u32 %v585, 7
    %v587 = vsub.s32 0, %v586
    %v588 = vrot.slane %v584, %v587
    %591 = vrot.lane.b32.xlu0 %v150, 96
    %v592 = vpop.permute.xlu0 %591
    %593 = vrot.lane.b32.xlu0 %v155, 96
    %v594 = vpop.permute.xlu0 %593
    %v595 = vsel %vm169, %v150, 0
    %v597 = vsel %vm169, %v155, 0
    %v599 = vsel %vm169, %v592, 0
    %v601 = vsel %vm169, %v594, 0
    %603 = vmatprep.subr.mxu0 0.0
    %604 = vmatpush1.xpose.msra.mxu0 0.0
    %605 = vmatprep.subr.mxu0 0.0
    %606 = vmatpush1.xpose.msra.mxu0 0.0
    %607 = vmatprep.subr.mxu0 0.0
    %608 = vmatpush1.xpose.msra.mxu0 0.0
    %609 = vmatprep.subr.mxu0 0.0
    %610 = vmatpush1.xpose.msra.mxu0 0.0
    %611 = vmatprep.subr.mxu0 0.0
    %612 = vmatpush1.xpose.msra.mxu0 0.0
    %613 = vmatprep.subr.mxu0 0.0
    %614 = vmatpush1.xpose.msra.mxu0 0.0
    %615 = vmatprep.subr.mxu0 0.0
    %616 = vmatpush1.xpose.msra.mxu0 0.0
    %617 = vmatprep.subr.mxu0 0.0
    %618 = vmatpush1.xpose.msra.mxu0 0.0
    %619 = vmatprep.subr.mxu0 0.0
    %620 = vmatpush1.xpose.msra.mxu0 0.0
    %621 = vmatprep.subr.mxu0 0.0
    %622 = vmatpush1.xpose.msra.mxu0 0.0
    %623 = vmatprep.subr.mxu0 0.0
    %624 = vmatpush1.xpose.msra.mxu0 0.0
    %625 = vmatprep.subr.mxu0 0.0
    %626 = vmatpush1.xpose.msra.mxu0 0.0
    %627 = vmatprep.subr.mxu0 0.0
    %628 = vmatpush1.xpose.msra.mxu0 0.0
    %629 = vmatprep.subr.mxu0 0.0
    %630 = vmatpush1.xpose.msra.mxu0 0.0
    %631 = vmatprep.subr.mxu0 0.0
    %632 = vmatpush1.xpose.msra.mxu0 %v601
    %633 = vmatprep.subr.mxu0 0.0
    %634 = vmatpush1.xpose.msra.mxu0 %v599
    %635 = vmatprep.subr.mxu0 0.0
    %636 = vmatpush2.xpose.msra.mxu0 0.0
    %637 = vmatprep.subr.mxu0 0.0
    %638 = vmatpush2.xpose.msra.mxu0 0.0
    %639 = vmatprep.subr.mxu0 0.0
    %640 = vmatpush2.xpose.msra.mxu0 0.0
    %641 = vmatprep.subr.mxu0 0.0
    %642 = vmatpush2.xpose.msra.mxu0 0.0
    %643 = vmatprep.subr.mxu0 0.0
    %644 = vmatpush2.xpose.msra.mxu0 0.0
    %645 = vmatprep.subr.mxu0 0.0
    %646 = vmatpush2.xpose.msra.mxu0 0.0
    %647 = vmatprep.subr.mxu0 0.0
    %648 = vmatpush2.xpose.msra.mxu0 0.0
    %649 = vmatprep.subr.mxu0 0.0
    %650 = vmatpush2.xpose.msra.mxu0 0.0
    %651 = vmatprep.subr.mxu0 0.0
    %652 = vmatpush2.xpose.msra.mxu0 0.0
    %653 = vmatprep.subr.mxu0 0.0
    %654 = vmatpush2.xpose.msra.mxu0 0.0
    %655 = vmatprep.subr.mxu0 0.0
    %656 = vmatpush2.xpose.msra.mxu0 0.0
    %657 = vmatprep.subr.mxu0 0.0
    %658 = vmatpush2.xpose.msra.mxu0 0.0
    %659 = vmatprep.subr.mxu0 0.0
    %660 = vmatpush2.xpose.msra.mxu0 0.0
    %661 = vmatprep.subr.mxu0 0.0
    %662 = vmatpush2.xpose.msra.mxu0 0.0
    %663 = vmatprep.subr.mxu0 0.0
    %664 = vmatpush2.xpose.msra.mxu0 0.0
    %665 = vmatprep.subr.mxu0 0.0
    %666 = vmatpush2.xpose.msra.mxu0 0.0
    %667 = vmatprep.mubr.f32.mxu0 0.0
    %668 = vmatmul.mubr.f32.gmra.mxu0 %v595
    %v669 = vpop.f32.mrf.mxu0
    %v670 = vadd.f32 %v588, %v669
    %v671 = vpop.f32.mrf.mxu0
    %672 = vmatprep.mubr.f32.mxu0 0.0
    %673 = vmatmul.mubr.f32.gmra.mxu0 %v597
    %v674 = vpop.f32.mrf.mxu0
    %v675 = vadd.f32 %v588, %v674
    %v676 = vpop.f32.mrf.mxu0
    %677 = vdwg.mxu0
    %v678 = vsel %vm169, %v670, -inf
    %679 = vmax.xlane.f32.xlu0 %v678
    %v680 = vpop.xlane.xlu0 %679
    %v681 = vsel %vm169, %v675, -inf
    %682 = vmax.xlane.f32.xlu0 %v681
    %v683 = vpop.xlane.xlu0 %682
    %v684 = vsub.f32 %v670, %v680
    %v685 = vsub.f32 %v675, %v683
    %v686 = vmul.f32 %v684, 1.442695
    %v687 = vpow.pop %v686
    %v688 = vmul.f32 %v685, 1.442695
    %v689 = vpow.pop %v688
    %v690 = vsel %vm169, %v687, 0.0
    %691 = vadd.xlane.f32.xlu0 %v690
    %v692 = vpop.xlane.xlu0 %691
    %v693 = vsel %vm169, %v689, 0.0
    %694 = vadd.xlane.f32.xlu0 %v693
    %v695 = vpop.xlane.xlu0 %694
    %v696 = vrcp.pop %v692
    %v697 = vrcp.pop %v695
    %v698 = vmul.f32 %v692, %v696
    %v699 = vmul.f32 %v695, %v697
    %v700 = vsub.f32 2.0, %v698
    %v701 = vsub.f32 2.0, %v699
    %v702 = vmul.f32 %v696, %v700
    %v703 = vmul.f32 %v697, %v701
    %v704 = vmul.f32 %v687, %v702
    %v705 = vmul.f32 %v689, %v703
    %706 = vrot.lane.b32.xlu0 %v150, 64
    %v707 = vpop.permute.xlu0 %706
    %708 = vrot.lane.b32.xlu0 %v155, 64
    %v709 = vpop.permute.xlu0 %708
    %v713 = vsel %vm169, %v704, 0
    %v716 = vsel %vm169, %v705, 0
    %718 = vmatprep.subr.mxu0 0.0
    %719 = vmatpush1.msra.mxu0 0.0
    %720 = vmatprep.subr.mxu0 0.0
    %721 = vmatpush1.msra.mxu0 0.0
    %722 = vmatprep.subr.mxu0 0.0
    %723 = vmatpush1.msra.mxu0 0.0
    %724 = vmatprep.subr.mxu0 0.0
    %725 = vmatpush1.msra.mxu0 0.0
    %726 = vmatprep.subr.mxu0 0.0
    %727 = vmatpush1.msra.mxu0 0.0
    %728 = vmatprep.subr.mxu0 0.0
    %729 = vmatpush1.msra.mxu0 0.0
    %730 = vmatprep.subr.mxu0 0.0
    %731 = vmatpush1.msra.mxu0 0.0
    %732 = vmatprep.subr.mxu0 0.0
    %733 = vmatpush1.msra.mxu0 0.0
    %734 = vmatprep.subr.mxu0 0.0
    %735 = vmatpush1.msra.mxu0 0.0
    %736 = vmatprep.subr.mxu0 0.0
    %737 = vmatpush1.msra.mxu0 0.0
    %738 = vmatprep.subr.mxu0 0.0
    %739 = vmatpush1.msra.mxu0 0.0
    %740 = vmatprep.subr.mxu0 0.0
    %741 = vmatpush1.msra.mxu0 0.0
    %742 = vmatprep.subr.mxu0 0.0
    %743 = vmatpush1.msra.mxu0 0.0
    %744 = vmatprep.subr.mxu0 0.0
    %745 = vmatpush1.msra.mxu0 0.0
    %746 = vmatprep.subr.mxu0 0.0
    %747 = vmatpush1.msra.mxu0 %v709
    %748 = vmatprep.subr.mxu0 0.0
    %749 = vmatpush1.msra.mxu0 %v707
    %750 = vmatprep.subr.mxu0 0.0
    %751 = vmatpush2.msra.mxu0 0.0
    %752 = vmatprep.subr.mxu0 0.0
    %753 = vmatpush2.msra.mxu0 0.0
    %754 = vmatprep.subr.mxu0 0.0
    %755 = vmatpush2.msra.mxu0 0.0
    %756 = vmatprep.subr.mxu0 0.0
    %757 = vmatpush2.msra.mxu0 0.0
    %758 = vmatprep.subr.mxu0 0.0
    %759 = vmatpush2.msra.mxu0 0.0
    %760 = vmatprep.subr.mxu0 0.0
    %761 = vmatpush2.msra.mxu0 0.0
    %762 = vmatprep.subr.mxu0 0.0
    %763 = vmatpush2.msra.mxu0 0.0
    %764 = vmatprep.subr.mxu0 0.0
    %765 = vmatpush2.msra.mxu0 0.0
    %766 = vmatprep.subr.mxu0 0.0
    %767 = vmatpush2.msra.mxu0 0.0
    %768 = vmatprep.subr.mxu0 0.0
    %769 = vmatpush2.msra.mxu0 0.0
    %770 = vmatprep.subr.mxu0 0.0
    %771 = vmatpush2.msra.mxu0 0.0
    %772 = vmatprep.subr.mxu0 0.0
    %773 = vmatpush2.msra.mxu0 0.0
    %774 = vmatprep.subr.mxu0 0.0
    %775 = vmatpush2.msra.mxu0 0.0
    %776 = vmatprep.subr.mxu0 0.0
    %777 = vmatpush2.msra.mxu0 0.0
    %778 = vmatprep.subr.mxu0 0.0
    %779 = vmatpush2.msra.mxu0 0.0
    %780 = vmatprep.subr.mxu0 0.0
    %781 = vmatpush2.msra.mxu0 0.0
    %782 = vmatprep.mubr.f32.mxu0 0.0
    %783 = vmatmul.mubr.f32.gmra.mxu0 %v713
    %v784 = vpop.f32.mrf.mxu0
    %v785 = vadd.f32 0.0, %v784
    %v786 = vpop.f32.mrf.mxu0
    %787 = vmatprep.mubr.f32.mxu0 0.0
    %788 = vmatmul.mubr.f32.gmra.mxu0 %v716
    %v789 = vpop.f32.mrf.mxu0
    %v790 = vadd.f32 0.0, %v789
    %v791 = vpop.f32.mrf.mxu0
    %792 = vdwg.mxu0
    %793 = vrot.lane.b32.xlu0 %v150, 112
    %v794 = vpop.permute.xlu0 %793
    %795 = vrot.lane.b32.xlu0 %v155, 112
    %v796 = vpop.permute.xlu0 %795
    %797 = vrot.lane.b32.xlu0 %v150, 80
    %v798 = vpop.permute.xlu0 %797
    %799 = vrot.lane.b32.xlu0 %v155, 80
    %v800 = vpop.permute.xlu0 %799
    %v801 = vsel %vm169, %v794, 0
    %v803 = vsel %vm169, %v796, 0
    %v805 = vsel %vm169, %v798, 0
    %v807 = vsel %vm169, %v800, 0
    %809 = vmatprep.subr.mxu0 0.0
    %810 = vmatpush1.xpose.msra.mxu0 0.0
    %811 = vmatprep.subr.mxu0 0.0
    %812 = vmatpush1.xpose.msra.mxu0 0.0
    %813 = vmatprep.subr.mxu0 0.0
    %814 = vmatpush1.xpose.msra.mxu0 0.0
    %815 = vmatprep.subr.mxu0 0.0
    %816 = vmatpush1.xpose.msra.mxu0 0.0
    %817 = vmatprep.subr.mxu0 0.0
    %818 = vmatpush1.xpose.msra.mxu0 0.0
    %819 = vmatprep.subr.mxu0 0.0
    %820 = vmatpush1.xpose.msra.mxu0 0.0
    %821 = vmatprep.subr.mxu0 0.0
    %822 = vmatpush1.xpose.msra.mxu0 0.0
    %823 = vmatprep.subr.mxu0 0.0
    %824 = vmatpush1.xpose.msra.mxu0 0.0
    %825 = vmatprep.subr.mxu0 0.0
    %826 = vmatpush1.xpose.msra.mxu0 0.0
    %827 = vmatprep.subr.mxu0 0.0
    %828 = vmatpush1.xpose.msra.mxu0 0.0
    %829 = vmatprep.subr.mxu0 0.0
    %830 = vmatpush1.xpose.msra.mxu0 0.0
    %831 = vmatprep.subr.mxu0 0.0
    %832 = vmatpush1.xpose.msra.mxu0 0.0
    %833 = vmatprep.subr.mxu0 0.0
    %834 = vmatpush1.xpose.msra.mxu0 0.0
    %835 = vmatprep.subr.mxu0 0.0
    %836 = vmatpush1.xpose.msra.mxu0 0.0
    %837 = vmatprep.subr.mxu0 0.0
    %838 = vmatpush1.xpose.msra.mxu0 %v807
    %839 = vmatprep.subr.mxu0 0.0
    %840 = vmatpush1.xpose.msra.mxu0 %v805
    %841 = vmatprep.subr.mxu0 0.0
    %842 = vmatpush2.xpose.msra.mxu0 0.0
    %843 = vmatprep.subr.mxu0 0.0
    %844 = vmatpush2.xpose.msra.mxu0 0.0
    %845 = vmatprep.subr.mxu0 0.0
    %846 = vmatpush2.xpose.msra.mxu0 0.0
    %847 = vmatprep.subr.mxu0 0.0
    %848 = vmatpush2.xpose.msra.mxu0 0.0
    %849 = vmatprep.subr.mxu0 0.0
    %850 = vmatpush2.xpose.msra.mxu0 0.0
    %851 = vmatprep.subr.mxu0 0.0
    %852 = vmatpush2.xpose.msra.mxu0 0.0
    %853 = vmatprep.subr.mxu0 0.0
    %854 = vmatpush2.xpose.msra.mxu0 0.0
    %855 = vmatprep.subr.mxu0 0.0
    %856 = vmatpush2.xpose.msra.mxu0 0.0
    %857 = vmatprep.subr.mxu0 0.0
    %858 = vmatpush2.xpose.msra.mxu0 0.0
    %859 = vmatprep.subr.mxu0 0.0
    %860 = vmatpush2.xpose.msra.mxu0 0.0
    %861 = vmatprep.subr.mxu0 0.0
    %862 = vmatpush2.xpose.msra.mxu0 0.0
    %863 = vmatprep.subr.mxu0 0.0
    %864 = vmatpush2.xpose.msra.mxu0 0.0
    %865 = vmatprep.subr.mxu0 0.0
    %866 = vmatpush2.xpose.msra.mxu0 0.0
    %867 = vmatprep.subr.mxu0 0.0
    %868 = vmatpush2.xpose.msra.mxu0 0.0
    %869 = vmatprep.subr.mxu0 0.0
    %870 = vmatpush2.xpose.msra.mxu0 0.0
    %871 = vmatprep.subr.mxu0 0.0
    %872 = vmatpush2.xpose.msra.mxu0 0.0
    %873 = vmatprep.mubr.f32.mxu0 0.0
    %874 = vmatmul.mubr.f32.gmra.mxu0 %v801
    %v875 = vpop.f32.mrf.mxu0
    %v876 = vadd.f32 %v588, %v875
    %v877 = vpop.f32.mrf.mxu0
    %878 = vmatprep.mubr.f32.mxu0 0.0
    %879 = vmatmul.mubr.f32.gmra.mxu0 %v803
    %v880 = vpop.f32.mrf.mxu0
    %v881 = vadd.f32 %v588, %v880
    %v882 = vpop.f32.mrf.mxu0
    %883 = vdwg.mxu0
    %v884 = vsel %vm169, %v876, -inf
    %885 = vmax.xlane.f32.xlu0 %v884
    %v886 = vpop.xlane.xlu0 %885
    %v887 = vsel %vm169, %v881, -inf
    %888 = vmax.xlane.f32.xlu0 %v887
    %v889 = vpop.xlane.xlu0 %888
    %v890 = vsub.f32 %v876, %v886
    %v891 = vsub.f32 %v881, %v889
    %v892 = vmul.f32 %v890, 1.442695
    %v893 = vpow.pop %v892
    %v894 = vmul.f32 %v891, 1.442695
    %v895 = vpow.pop %v894
    %v896 = vsel %vm169, %v893, 0.0
    %897 = vadd.xlane.f32.xlu0 %v896
    %v898 = vpop.xlane.xlu0 %897
    %v899 = vsel %vm169, %v895, 0.0
    %900 = vadd.xlane.f32.xlu0 %v899
    %v901 = vpop.xlane.xlu0 %900
    %v902 = vrcp.pop %v898
    %v903 = vrcp.pop %v901
    %v904 = vmul.f32 %v898, %v902
    %v905 = vmul.f32 %v901, %v903
    %v906 = vsub.f32 2.0, %v904
    %v907 = vsub.f32 2.0, %v905
    %v908 = vmul.f32 %v902, %v906
    %v909 = vmul.f32 %v903, %v907
    %v910 = vmul.f32 %v893, %v908
    %v911 = vmul.f32 %v895, %v909
    %912 = vrot.lane.b32.xlu0 %v150, 48
    %v913 = vpop.permute.xlu0 %912
    %914 = vrot.lane.b32.xlu0 %v155, 48
    %v915 = vpop.permute.xlu0 %914
    %v919 = vsel %vm169, %v910, 0
    %v922 = vsel %vm169, %v911, 0
    %924 = vmatprep.subr.mxu0 0.0
    %925 = vmatpush1.msra.mxu0 0.0
    %926 = vmatprep.subr.mxu0 0.0
    %927 = vmatpush1.msra.mxu0 0.0
    %928 = vmatprep.subr.mxu0 0.0
    %929 = vmatpush1.msra.mxu0 0.0
    %930 = vmatprep.subr.mxu0 0.0
    %931 = vmatpush1.msra.mxu0 0.0
    %932 = vmatprep.subr.mxu0 0.0
    %933 = vmatpush1.msra.mxu0 0.0
    %934 = vmatprep.subr.mxu0 0.0
    %935 = vmatpush1.msra.mxu0 0.0
    %936 = vmatprep.subr.mxu0 0.0
    %937 = vmatpush1.msra.mxu0 0.0
    %938 = vmatprep.subr.mxu0 0.0
    %939 = vmatpush1.msra.mxu0 0.0
    %940 = vmatprep.subr.mxu0 0.0
    %941 = vmatpush1.msra.mxu0 0.0
    %942 = vmatprep.subr.mxu0 0.0
    %943 = vmatpush1.msra.mxu0 0.0
    %944 = vmatprep.subr.mxu0 0.0
    %945 = vmatpush1.msra.mxu0 0.0
    %946 = vmatprep.subr.mxu0 0.0
    %947 = vmatpush1.msra.mxu0 0.0
    %948 = vmatprep.subr.mxu0 0.0
    %949 = vmatpush1.msra.mxu0 0.0
    %950 = vmatprep.subr.mxu0 0.0
    %951 = vmatpush1.msra.mxu0 0.0
    %952 = vmatprep.subr.mxu0 0.0
    %953 = vmatpush1.msra.mxu0 %v915
    %954 = vmatprep.subr.mxu0 0.0
    %955 = vmatpush1.msra.mxu0 %v913
    %956 = vmatprep.subr.mxu0 0.0
    %957 = vmatpush2.msra.mxu0 0.0
    %958 = vmatprep.subr.mxu0 0.0
    %959 = vmatpush2.msra.mxu0 0.0
    %960 = vmatprep.subr.mxu0 0.0
    %961 = vmatpush2.msra.mxu0 0.0
    %962 = vmatprep.subr.mxu0 0.0
    %963 = vmatpush2.msra.mxu0 0.0
    %964 = vmatprep.subr.mxu0 0.0
    %965 = vmatpush2.msra.mxu0 0.0
    %966 = vmatprep.subr.mxu0 0.0
    %967 = vmatpush2.msra.mxu0 0.0
    %968 = vmatprep.subr.mxu0 0.0
    %969 = vmatpush2.msra.mxu0 0.0
    %970 = vmatprep.subr.mxu0 0.0
    %971 = vmatpush2.msra.mxu0 0.0
    %972 = vmatprep.subr.mxu0 0.0
    %973 = vmatpush2.msra.mxu0 0.0
    %974 = vmatprep.subr.mxu0 0.0
    %975 = vmatpush2.msra.mxu0 0.0
    %976 = vmatprep.subr.mxu0 0.0
    %977 = vmatpush2.msra.mxu0 0.0
    %978 = vmatprep.subr.mxu0 0.0
    %979 = vmatpush2.msra.mxu0 0.0
    %980 = vmatprep.subr.mxu0 0.0
    %981 = vmatpush2.msra.mxu0 0.0
    %982 = vmatprep.subr.mxu0 0.0
    %983 = vmatpush2.msra.mxu0 0.0
    %984 = vmatprep.subr.mxu0 0.0
    %985 = vmatpush2.msra.mxu0 0.0
    %986 = vmatprep.subr.mxu0 0.0
    %987 = vmatpush2.msra.mxu0 0.0
    %988 = vmatprep.mubr.f32.mxu0 0.0
    %989 = vmatmul.mubr.f32.gmra.mxu0 %v919
    %v990 = vpop.f32.mrf.mxu0
    %v991 = vadd.f32 0.0, %v990
    %v992 = vpop.f32.mrf.mxu0
    %993 = vmatprep.mubr.f32.mxu0 0.0
    %994 = vmatmul.mubr.f32.gmra.mxu0 %v922
    %v995 = vpop.f32.mrf.mxu0
    %v996 = vadd.f32 0.0, %v995
    %v997 = vpop.f32.mrf.mxu0
    %998 = vdwg.mxu0
    %1001 = vrot.lane.b32.xlu0 %v991, 16
    %v1002 = vpop.permute.xlu0 %1001
    %1003 = vrot.lane.b32.xlu0 %v996, 16
    %v1004 = vpop.permute.xlu0 %1003
    %v1007 = vsel %vm169, %v785, %v1002
    %v1008 = vsel %vm169, %v790, %v1004
    %v1009 = vld [vmem:[%s5] sm:$0xff]
    %v1010 = vld [vmem:[%s5 + $0x8] sm:$0xff]
    %v1011 = vld [vmem:[%s5 + $0x10] sm:$0xff]
    %v1012 = vld [vmem:[%s5 + $0x18] sm:$0xff]
    %v1013 = vld [vmem:[%s8] sm:$0x1]
    %v1014 = vlaneseq
    %v1015 = vshrl.u32 %v1014, 7
    %v1016 = vsub.s32 0, %v1015
    %v1017 = vrot.slane %v1013, %v1016
    %v1019 = vsel %vm60, %v582, 0
    %v1022 = vsel %vm60, %v583, 0
    %v1025 = vsel %vm60, %v1007, 0
    %v1028 = vsel %vm60, %v1008, 0
    %1030 = vmatprep.subr.mxu0 0.0
    %1031 = vmatpush1.msra.mxu0 0.0
    %1032 = vmatprep.subr.mxu0 0.0
    %1033 = vmatpush1.msra.mxu0 0.0
    %1034 = vmatprep.subr.mxu0 0.0
    %1035 = vmatpush1.msra.mxu0 0.0
    %1036 = vmatprep.subr.mxu0 0.0
    %1037 = vmatpush1.msra.mxu0 0.0
    %1038 = vmatprep.subr.mxu0 0.0
    %1039 = vmatpush1.msra.mxu0 0.0
    %1040 = vmatprep.subr.mxu0 0.0
    %1041 = vmatpush1.msra.mxu0 0.0
    %1042 = vmatprep.subr.mxu0 0.0
    %1043 = vmatpush1.msra.mxu0 0.0
    %1044 = vmatprep.subr.mxu0 0.0
    %1045 = vmatpush1.msra.mxu0 0.0
    %1046 = vmatprep.subr.mxu0 0.0
    %1047 = vmatpush1.msra.mxu0 0.0
    %1048 = vmatprep.subr.mxu0 0.0
    %1049 = vmatpush1.msra.mxu0 0.0
    %1050 = vmatprep.subr.mxu0 0.0
    %1051 = vmatpush1.msra.mxu0 0.0
    %1052 = vmatprep.subr.mxu0 0.0
    %1053 = vmatpush1.msra.mxu0 0.0
    %1054 = vmatprep.subr.mxu0 0.0
    %1055 = vmatpush1.msra.mxu0 %v1012
    %1056 = vmatprep.subr.mxu0 0.0
    %1057 = vmatpush1.msra.mxu0 %v1011
    %1058 = vmatprep.subr.mxu0 0.0
    %1059 = vmatpush1.msra.mxu0 %v1010
    %1060 = vmatprep.subr.mxu0 0.0
    %1061 = vmatpush1.msra.mxu0 %v1009
    %1062 = vmatprep.subr.mxu0 0.0
    %1063 = vmatpush2.msra.mxu0 0.0
    %1064 = vmatprep.subr.mxu0 0.0
    %1065 = vmatpush2.msra.mxu0 0.0
    %1066 = vmatprep.subr.mxu0 0.0
    %1067 = vmatpush2.msra.mxu0 0.0
    %1068 = vmatprep.subr.mxu0 0.0
    %1069 = vmatpush2.msra.mxu0 0.0
    %1070 = vmatprep.subr.mxu0 0.0
    %1071 = vmatpush2.msra.mxu0 0.0
    %1072 = vmatprep.subr.mxu0 0.0
    %1073 = vmatpush2.msra.mxu0 0.0
    %1074 = vmatprep.subr.mxu0 0.0
    %1075 = vmatpush2.msra.mxu0 0.0
    %1076 = vmatprep.subr.mxu0 0.0
    %1077 = vmatpush2.msra.mxu0 0.0
    %1078 = vmatprep.subr.mxu0 0.0
    %1079 = vmatpush2.msra.mxu0 0.0
    %1080 = vmatprep.subr.mxu0 0.0
    %1081 = vmatpush2.msra.mxu0 0.0
    %1082 = vmatprep.subr.mxu0 0.0
    %1083 = vmatpush2.msra.mxu0 0.0
    %1084 = vmatprep.subr.mxu0 0.0
    %1085 = vmatpush2.msra.mxu0 0.0
    %1086 = vmatprep.subr.mxu0 0.0
    %1087 = vmatpush2.msra.mxu0 0.0
    %1088 = vmatprep.subr.mxu0 0.0
    %1089 = vmatpush2.msra.mxu0 0.0
    %1090 = vmatprep.subr.mxu0 0.0
    %1091 = vmatpush2.msra.mxu0 0.0
    %1092 = vmatprep.subr.mxu0 0.0
    %1093 = vmatpush2.msra.mxu0 0.0
    %1094 = vmatprep.mubr.f32.mxu0 0.0
    %1095 = vmatmul.mubr.f32.gmra.mxu0 %v1019
    %v1096 = vpop.f32.mrf.mxu0
    %v1097 = vadd.f32 %v1017, %v1096
    %v1098 = vpop.f32.mrf.mxu0
    %1099 = vmatprep.mubr.f32.mxu0 0.0
    %1100 = vmatmul.mubr.f32.gmra.mxu0 %v1022
    %v1101 = vpop.f32.mrf.mxu0
    %v1102 = vadd.f32 %v1017, %v1101
    %v1103 = vpop.f32.mrf.mxu0
    %1104 = vmatprep.mubr.f32.mxu0 0.0
    %1105 = vmatmul.mubr.f32.gmra.mxu0 %v1025
    %v1106 = vpop.f32.mrf.mxu0
    %v1107 = vadd.f32 %v1017, %v1106
    %v1108 = vpop.f32.mrf.mxu0
    %1109 = vmatprep.mubr.f32.mxu0 0.0
    %1110 = vmatmul.mubr.f32.gmra.mxu0 %v1028
    %v1111 = vpop.f32.mrf.mxu0
    %v1112 = vadd.f32 %v1017, %v1111
    %v1113 = vpop.f32.mrf.mxu0
    %1114 = vdwg.mxu0
    %v1115 = vadd.f32 %v1097, %v36
    %v1116 = vadd.f32 %v1102, %v37
    %v1117 = vadd.f32 %v1107, %v38
    %v1118 = vadd.f32 %v1112, %v39
    %v1119 = vld [vmem:[%s8 + $0x1] sm:$0x1]
    %v1120 = vld [vmem:[%s8 + $0x2] sm:$0x1]
    %v1121 = vsel %vm60, %v1115, 0.0
    %1122 = vadd.xlane.f32.xlu0 %v1121
    %v1123 = vpop.xlane.xlu0 %1122
    %v1124 = vsel %vm60, %v1116, 0.0
    %1125 = vadd.xlane.f32.xlu0 %v1124
    %v1126 = vpop.xlane.xlu0 %1125
    %v1127 = vsel %vm60, %v1117, 0.0
    %1128 = vadd.xlane.f32.xlu0 %v1127
    %v1129 = vpop.xlane.xlu0 %1128
    %v1130 = vsel %vm60, %v1118, 0.0
    %1131 = vadd.xlane.f32.xlu0 %v1130
    %v1132 = vpop.xlane.xlu0 %1131
    %v1133 = vrcp.pop 32.0
    %v1134 = vmul.f32 %v1123, %v1133
    %v1135 = vmul.f32 %v1126, %v1133
    %v1136 = vmul.f32 %v1129, %v1133
    %v1137 = vmul.f32 %v1132, %v1133
    %v1138 = vsub.f32 %v1115, %v1134
    %v1139 = vsub.f32 %v1116, %v1135
    %v1140 = vsub.f32 %v1117, %v1136
    %v1141 = vsub.f32 %v1118, %v1137
    %v1142 = vmul.f32 %v1138, %v1138
    %v1143 = vmul.f32 %v1139, %v1139
    %v1144 = vmul.f32 %v1140, %v1140
    %v1145 = vmul.f32 %v1141, %v1141
    %v1146 = vsel %vm60, %v1142, 0.0
    %1147 = vadd.xlane.f32.xlu0 %v1146
    %v1148 = vpop.xlane.xlu0 %1147
    %v1149 = vsel %vm60, %v1143, 0.0
    %1150 = vadd.xlane.f32.xlu0 %v1149
    %v1151 = vpop.xlane.xlu0 %1150
    %v1152 = vsel %vm60, %v1144, 0.0
    %1153 = vadd.xlane.f32.xlu0 %v1152
    %v1154 = vpop.xlane.xlu0 %1153
    %v1155 = vsel %vm60, %v1145, 0.0
    %1156 = vadd.xlane.f32.xlu0 %v1155
    %v1157 = vpop.xlane.xlu0 %1156
    %v1158 = vmul.f32 %v1148, %v1133
    %v1159 = vmul.f32 %v1151, %v1133
    %v1160 = vmul.f32 %v1154, %v1133
    %v1161 = vmul.f32 %v1157, %v1133
    %v1162 = vadd.f32 %v1158, 1e-05
    %v1163 = vadd.f32 %v1159, 1e-05
    %v1164 = vadd.f32 %v1160, 1e-05
    %v1165 = vadd.f32 %v1161, 1e-05
    %v1166 = vrsqrt.pop %v1162
    %v1167 = vrsqrt.pop %v1163
    %v1168 = vrsqrt.pop %v1164
    %v1169 = vrsqrt.pop %v1165
    %v1170 = vmul.f32 %v1138, %v1166
    %v1171 = vmul.f32 %v1139, %v1167
    %v1172 = vmul.f32 %v1140, %v1168
    %v1173 = vmul.f32 %v1141, %v1169
    %v1174 = vlaneseq
    %v1175 = vshrl.u32 %v1174, 7
    %v1176 = vsub.s32 0, %v1175
    %v1177 = vrot.slane %v1119, %v1176
    %v1178 = vmul.f32 %v1170, %v1177
    %v1179 = vmul.f32 %v1171, %v1177
    %v1180 = vmul.f32 %v1172, %v1177
    %v1181 = vmul.f32 %v1173, %v1177
    %v1182 = vlaneseq
    %v1183 = vshrl.u32 %v1182, 7
    %v1184 = vsub.s32 0, %v1183
    %v1185 = vrot.slane %v1120, %v1184
    %v1186 = vadd.f32 %v1178, %v1185
    %v1187 = vadd.f32 %v1179, %v1185
    %v1188 = vadd.f32 %v1180, %v1185
    %v1189 = vadd.f32 %v1181, %v1185
    %1190 = vst.msk [vmem:[#allocation2 + $0x1] sm:$0xff] %vm60, %v1186
    %1191 = vst.msk [vmem:[#allocation2 + $0x9] sm:$0xff] %vm60, %v1187
    %1192 = vst.msk [vmem:[#allocation2 + $0x11] sm:$0xff] %vm60, %v1188
    %1193 = vst.msk [vmem:[#allocation2 + $0x19] sm:$0xff] %vm60, %v1189
    %v1194 = vld [vmem:[#allocation2] sm:$0xff]
    %v1195 = vld [vmem:[#allocation2 + $0x8] sm:$0xff]
    %v1196 = vld [vmem:[#allocation2 + $0x10] sm:$0xff]
    %v1197 = vld [vmem:[#allocation2 + $0x18] sm:$0xff]
    %1199 = vset.pattern.permute.xlu0 0
    %1200 = vperm.xlu0 %1199, %v40
    %v1201 = vpop.permute.xlu0 %1200
    %1204 = vset.pattern.permute.xlu0 0
    %1205 = vperm.xlu0 %1204, %v41
    %v1206 = vpop.permute.xlu0 %1205
    %1209 = vset.pattern.permute.xlu0 0
    %1210 = vperm.xlu0 %1209, %v42
    %v1211 = vpop.permute.xlu0 %1210
    %1214 = vset.pattern.permute.xlu0 0
    %1215 = vperm.xlu0 %1214, %v43
    %v1216 = vpop.permute.xlu0 %1215
    %v1218 = vmul.f32 %v1194, %v1201
    %v1219 = vmul.f32 %v1195, %v1206
    %v1220 = vmul.f32 %v1196, %v1211
    %v1221 = vmul.f32 %v1197, %v1216
    %v1222 = vld [vmem:[#allocation2 + $0x2] sm:$0xff]
    %v1223 = vld [vmem:[#allocation2 + $0xa] sm:$0xff]
    %v1224 = vld [vmem:[#allocation2 + $0x12] sm:$0xff]
    %v1225 = vld [vmem:[#allocation2 + $0x1a] sm:$0xff]
    %1226 = vset.pattern.permute.xlu0 1
    %1227 = vperm.xlu0 %1226, %v40
    %v1228 = vpop.permute.xlu0 %1227
    %1230 = vset.pattern.permute.xlu0 1
    %1231 = vperm.xlu0 %1230, %v41
    %v1232 = vpop.permute.xlu0 %1231
    %1234 = vset.pattern.permute.xlu0 1
    %1235 = vperm.xlu0 %1234, %v42
    %v1236 = vpop.permute.xlu0 %1235
    %1238 = vset.pattern.permute.xlu0 1
    %1239 = vperm.xlu0 %1238, %v43
    %v1240 = vpop.permute.xlu0 %1239
    %v1242 = vmul.f32 %v1222, %v1228
    %v1243 = vmul.f32 %v1223, %v1232
    %v1244 = vmul.f32 %v1224, %v1236
    %v1245 = vmul.f32 %v1225, %v1240
    %1250 = vrot.lane.b32.xlu0 %v1186, 32
    %v1251 = vpop.permute.xlu0 %1250
    %1252 = vrot.lane.b32.xlu0 %v1187, 32
    %v1253 = vpop.permute.xlu0 %1252
    %1254 = vrot.lane.b32.xlu0 %v1188, 32
    %v1255 = vpop.permute.xlu0 %1254
    %1256 = vrot.lane.b32.xlu0 %v1189, 32
    %v1257 = vpop.permute.xlu0 %1256
    %1266 = vrot.lane.b32.xlu0 %v1242, 64
    %v1267 = vpop.permute.xlu0 %1266
    %1268 = vrot.lane.b32.xlu0 %v1243, 64
    %v1269 = vpop.permute.xlu0 %1268
    %1270 = vrot.lane.b32.xlu0 %v1244, 64
    %v1271 = vpop.permute.xlu0 %1270
    %1272 = vrot.lane.b32.xlu0 %v1245, 64
    %v1273 = vpop.permute.xlu0 %1272
    %v1278 = vsel %vm60, %v1218, %v1251
    %v1279 = vsel %vm60, %v1219, %v1253
    %v1280 = vsel %vm60, %v1220, %v1255
    %v1281 = vsel %vm60, %v1221, %v1257
    %v1282 = vsel %vm44, %v1278, %v1267
    %v1283 = vsel %vm44, %v1279, %v1269
    %v1284 = vsel %vm44, %v1280, %v1271
    %v1285 = vsel %vm44, %v1281, %v1273
    %v1286 = vld [vmem:[%s6] sm:$0xff]
    %v1287 = vld [vmem:[%s6 + $0x8] sm:$0xff]
    %v1288 = vld [vmem:[%s6 + $0x10] sm:$0xff]
    %v1289 = vld [vmem:[%s6 + $0x18] sm:$0xff]
    %v1290 = vld [vmem:[%s6 + $0x20] sm:$0xff]
    %v1291 = vld [vmem:[%s6 + $0x28] sm:$0xff]
    %v1292 = vld [vmem:[%s6 + $0x30] sm:$0xff]
    %v1293 = vld [vmem:[%s6 + $0x38] sm:$0xff]
    %v1294 = vld [vmem:[%s6 + $0x40] sm:$0xff]
    %v1295 = vld [vmem:[%s6 + $0x48] sm:$0xff]
    %v1296 = vld [vmem:[%s6 + $0x50] sm:$0xff]
    %v1297 = vld [vmem:[%s6 + $0x58] sm:$0xff]
    %v1298 = vld [vmem:[%s9] sm:$0x1]
    %v1299 = vlaneseq
    %v1300 = vshrl.u32 %v1299, 7
    %v1301 = vsub.s32 0, %v1300
    %v1302 = vrot.slane %v1298, %v1301
    %vm1303 = vcmask 785408
    %v1305 = vsel %vm1303, %v1282, 0
    %v1308 = vsel %vm1303, %v1283, 0
    %v1311 = vsel %vm1303, %v1284, 0
    %v1314 = vsel %vm1303, %v1285, 0
    %1316 = vmatprep.subr.mxu0 0.0
    %1317 = vmatpush1.msra.mxu0 0.0
    %1318 = vmatprep.subr.mxu0 0.0
    %1319 = vmatpush1.msra.mxu0 0.0
    %1320 = vmatprep.subr.mxu0 0.0
    %1321 = vmatpush1.msra.mxu0 0.0
    %1322 = vmatprep.subr.mxu0 0.0
    %1323 = vmatpush1.msra.mxu0 0.0
    %1324 = vmatprep.subr.mxu0 0.0
    %1325 = vmatpush1.msra.mxu0 %v1297
    %1326 = vmatprep.subr.mxu0 0.0
    %1327 = vmatpush1.msra.mxu0 %v1296
    %1328 = vmatprep.subr.mxu0 0.0
    %1329 = vmatpush1.msra.mxu0 %v1295
    %1330 = vmatprep.subr.mxu0 0.0
    %1331 = vmatpush1.msra.mxu0 %v1294
    %1332 = vmatprep.subr.mxu0 0.0
    %1333 = vmatpush1.msra.mxu0 %v1293
    %1334 = vmatprep.subr.mxu0 0.0
    %1335 = vmatpush1.msra.mxu0 %v1292
    %1336 = vmatprep.subr.mxu0 0.0
    %1337 = vmatpush1.msra.mxu0 %v1291
    %1338 = vmatprep.subr.mxu0 0.0
    %1339 = vmatpush1.msra.mxu0 %v1290
    %1340 = vmatprep.subr.mxu0 0.0
    %1341 = vmatpush1.msra.mxu0 %v1289
    %1342 = vmatprep.subr.mxu0 0.0
    %1343 = vmatpush1.msra.mxu0 %v1288
    %1344 = vmatprep.subr.mxu0 0.0
    %1345 = vmatpush1.msra.mxu0 %v1287
    %1346 = vmatprep.subr.mxu0 0.0
    %1347 = vmatpush1.msra.mxu0 %v1286
    %1348 = vmatprep.subr.mxu0 0.0
    %1349 = vmatpush2.msra.mxu0 0.0
    %1350 = vmatprep.subr.mxu0 0.0
    %1351 = vmatpush2.msra.mxu0 0.0
    %1352 = vmatprep.subr.mxu0 0.0
    %1353 = vmatpush2.msra.mxu0 0.0
    %1354 = vmatprep.subr.mxu0 0.0
    %1355 = vmatpush2.msra.mxu0 0.0
    %1356 = vmatprep.subr.mxu0 0.0
    %1357 = vmatpush2.msra.mxu0 0.0
    %1358 = vmatprep.subr.mxu0 0.0
    %1359 = vmatpush2.msra.mxu0 0.0
    %1360 = vmatprep.subr.mxu0 0.0
    %1361 = vmatpush2.msra.mxu0 0.0
    %1362 = vmatprep.subr.mxu0 0.0
    %1363 = vmatpush2.msra.mxu0 0.0
    %1364 = vmatprep.subr.mxu0 0.0
    %1365 = vmatpush2.msra.mxu0 0.0
    %1366 = vmatprep.subr.mxu0 0.0
    %1367 = vmatpush2.msra.mxu0 0.0
    %1368 = vmatprep.subr.mxu0 0.0
    %1369 = vmatpush2.msra.mxu0 0.0
    %1370 = vmatprep.subr.mxu0 0.0
    %1371 = vmatpush2.msra.mxu0 0.0
    %1372 = vmatprep.subr.mxu0 0.0
    %1373 = vmatpush2.msra.mxu0 0.0
    %1374 = vmatprep.subr.mxu0 0.0
    %1375 = vmatpush2.msra.mxu0 0.0
    %1376 = vmatprep.subr.mxu0 0.0
    %1377 = vmatpush2.msra.mxu0 0.0
    %1378 = vmatprep.subr.mxu0 0.0
    %1379 = vmatpush2.msra.mxu0 0.0
    %1380 = vmatprep.mubr.f32.mxu0 0.0
    %1381 = vmatmul.mubr.f32.gmra.mxu0 %v1305
    %v1382 = vpop.f32.mrf.mxu0
    %v1383 = vadd.f32 %v1302, %v1382
    %v1384 = vpop.f32.mrf.mxu0
    %1385 = vmatprep.mubr.f32.mxu0 0.0
    %1386 = vmatmul.mubr.f32.gmra.mxu0 %v1308
    %v1387 = vpop.f32.mrf.mxu0
    %v1388 = vadd.f32 %v1302, %v1387
    %v1389 = vpop.f32.mrf.mxu0
    %1390 = vmatprep.mubr.f32.mxu0 0.0
    %1391 = vmatmul.mubr.f32.gmra.mxu0 %v1311
    %v1392 = vpop.f32.mrf.mxu0
    %v1393 = vadd.f32 %v1302, %v1392
    %v1394 = vpop.f32.mrf.mxu0
    %1395 = vmatprep.mubr.f32.mxu0 0.0
    %1396 = vmatmul.mubr.f32.gmra.mxu0 %v1314
    %v1397 = vpop.f32.mrf.mxu0
    %v1398 = vadd.f32 %v1302, %v1397
    %v1399 = vpop.f32.mrf.mxu0
    %1400 = vdwg.mxu0
    %v1401 = vmax.f32 %v1383, 0.0
    %v1402 = vmax.f32 %v1388, 0.0
    %v1403 = vmax.f32 %v1393, 0.0
    %v1404 = vmax.f32 %v1398, 0.0
    %1405 = vst.msk [vmem:[#allocation2 + $0x1] sm:$0xff] %vm44, %v1401
    %1406 = vst.msk [vmem:[#allocation2 + $0x9] sm:$0xff] %vm44, %v1402
    %1407 = vst.msk [vmem:[#allocation2 + $0x11] sm:$0xff] %vm44, %v1403
    %1408 = vst.msk [vmem:[#allocation2 + $0x19] sm:$0xff] %vm44, %v1404
    %v1409 = vld [vmem:[#allocation2] sm:$0xff]
    %v1410 = vld [vmem:[#allocation2 + $0x8] sm:$0xff]
    %v1411 = vld [vmem:[#allocation2 + $0x10] sm:$0xff]
    %v1412 = vld [vmem:[#allocation2 + $0x18] sm:$0xff]
    %v1413 = vmul.f32 %v1409, %v1201
    %v1414 = vmul.f32 %v1410, %v1206
    %v1415 = vmul.f32 %v1411, %v1211
    %v1416 = vmul.f32 %v1412, %v1216
    %v1417 = vld [vmem:[#allocation2 + $0x2] sm:$0xff]
    %v1418 = vld [vmem:[#allocation2 + $0xa] sm:$0xff]
    %v1419 = vld [vmem:[#allocation2 + $0x12] sm:$0xff]
    %v1420 = vld [vmem:[#allocation2 + $0x1a] sm:$0xff]
    %v1421 = vmul.f32 %v1417, %v1228
    %v1422 = vmul.f32 %v1418, %v1232
    %v1423 = vmul.f32 %v1419, %v1236
    %v1424 = vmul.f32 %v1420, %v1240
    %v1425 = vld [vmem:[%s7] sm:$0xff]
    %v1426 = vld [vmem:[%s7 + $0x8] sm:$0xff]
    %v1427 = vld [vmem:[%s7 + $0x10] sm:$0xff]
    %v1428 = vld [vmem:[%s7 + $0x18] sm:$0xff]
    %v1429 = vld [vmem:[%s7 + $0x20] sm:$0xff]
    %v1430 = vld [vmem:[%s7 + $0x28] sm:$0xff]
    %v1431 = vld [vmem:[%s7 + $0x30] sm:$0xff]
    %v1432 = vld [vmem:[%s7 + $0x38] sm:$0xff]
    %s1433 = scalar_lea.vmem %s7, 64
    %v1434 = vld [vmem:[%s1433] sm:$0xff]
    %v1435 = vld [vmem:[%s1433 + $0x8] sm:$0xff]
    %v1436 = vld [vmem:[%s1433 + $0x10] sm:$0xff]
    %v1437 = vld [vmem:[%s1433 + $0x18] sm:$0xff]
    %v1438 = vld [vmem:[%s1433 + $0x20] sm:$0xff]
    %v1439 = vld [vmem:[%s1433 + $0x28] sm:$0xff]
    %v1440 = vld [vmem:[%s1433 + $0x30] sm:$0xff]
    %v1441 = vld [vmem:[%s1433 + $0x38] sm:$0xff]
    %v1443 = vsel %vm44, %v1401, 0
    %v1446 = vsel %vm44, %v1402, 0
    %v1449 = vsel %vm44, %v1403, 0
    %v1452 = vsel %vm44, %v1404, 0
    %1454 = vmatprep.subr.mxu0 0.0
    %1455 = vmatpush1.msra.mxu0 0.0
    %1456 = vmatprep.subr.mxu0 0.0
    %1457 = vmatpush1.msra.mxu0 0.0
    %1458 = vmatprep.subr.mxu0 0.0
    %1459 = vmatpush1.msra.mxu0 0.0
    %1460 = vmatprep.subr.mxu0 0.0
    %1461 = vmatpush1.msra.mxu0 0.0
    %1462 = vmatprep.subr.mxu0 0.0
    %1463 = vmatpush1.msra.mxu0 0.0
    %1464 = vmatprep.subr.mxu0 0.0
    %1465 = vmatpush1.msra.mxu0 0.0
    %1466 = vmatprep.subr.mxu0 0.0
    %1467 = vmatpush1.msra.mxu0 0.0
    %1468 = vmatprep.subr.mxu0 0.0
    %1469 = vmatpush1.msra.mxu0 0.0
    %1470 = vmatprep.subr.mxu0 0.0
    %1471 = vmatpush1.msra.mxu0 %v1441
    %1472 = vmatprep.subr.mxu0 0.0
    %1473 = vmatpush1.msra.mxu0 %v1440
    %1474 = vmatprep.subr.mxu0 0.0
    %1475 = vmatpush1.msra.mxu0 %v1439
    %1476 = vmatprep.subr.mxu0 0.0
    %1477 = vmatpush1.msra.mxu0 %v1438
    %1478 = vmatprep.subr.mxu0 0.0
    %1479 = vmatpush1.msra.mxu0 %v1437
    %1480 = vmatprep.subr.mxu0 0.0
    %1481 = vmatpush1.msra.mxu0 %v1436
    %1482 = vmatprep.subr.mxu0 0.0
    %1483 = vmatpush1.msra.mxu0 %v1435
    %1484 = vmatprep.subr.mxu0 0.0
    %1485 = vmatpush1.msra.mxu0 %v1434
    %1486 = vmatprep.subr.mxu0 0.0
    %1487 = vmatpush2.msra.mxu0 0.0
    %1488 = vmatprep.subr.mxu0 0.0
    %1489 = vmatpush2.msra.mxu0 0.0
    %1490 = vmatprep.subr.mxu0 0.0
    %1491 = vmatpush2.msra.mxu0 0.0
    %1492 = vmatprep.subr.mxu0 0.0
    %1493 = vmatpush2.msra.mxu0 0.0
    %1494 = vmatprep.subr.mxu0 0.0
    %1495 = vmatpush2.msra.mxu0 0.0
    %1496 = vmatprep.subr.mxu0 0.0
    %1497 = vmatpush2.msra.mxu0 0.0
    %1498 = vmatprep.subr.mxu0 0.0
    %1499 = vmatpush2.msra.mxu0 0.0
    %1500 = vmatprep.subr.mxu0 0.0
    %1501 = vmatpush2.msra.mxu0 0.0
    %1502 = vmatprep.subr.mxu0 0.0
    %1503 = vmatpush2.msra.mxu0 0.0
    %1504 = vmatprep.subr.mxu0 0.0
    %1505 = vmatpush2.msra.mxu0 0.0
    %1506 = vmatprep.subr.mxu0 0.0
    %1507 = vmatpush2.msra.mxu0 0.0
    %1508 = vmatprep.subr.mxu0 0.0
    %1509 = vmatpush2.msra.mxu0 0.0
    %1510 = vmatprep.subr.mxu0 0.0
    %1511 = vmatpush2.msra.mxu0 0.0
    %1512 = vmatprep.subr.mxu0 0.0
    %1513 = vmatpush2.msra.mxu0 0.0
    %1514 = vmatprep.subr.mxu0 0.0
    %1515 = vmatpush2.msra.mxu0 0.0
    %1516 = vmatprep.subr.mxu0 0.0
    %1517 = vmatpush2.msra.mxu0 0.0
    %1518 = vmatprep.mubr.f32.mxu0 0.0
    %1519 = vmatmul.mubr.f32.gmra.mxu0 %v1443
    %v1520 = vpop.f32.mrf.mxu0
    %v1521 = vadd.f32 0.0, %v1520
    %v1522 = vpop.f32.mrf.mxu0
    %1523 = vmatprep.mubr.f32.mxu0 0.0
    %1524 = vmatmul.mubr.f32.gmra.mxu0 %v1446
    %v1525 = vpop.f32.mrf.mxu0
    %v1526 = vadd.f32 0.0, %v1525
    %v1527 = vpop.f32.mrf.mxu0
    %1528 = vmatprep.mubr.f32.mxu0 0.0
    %1529 = vmatmul.mubr.f32.gmra.mxu0 %v1449
    %v1530 = vpop.f32.mrf.mxu0
    %v1531 = vadd.f32 0.0, %v1530
    %v1532 = vpop.f32.mrf.mxu0
    %1533 = vmatprep.mubr.f32.mxu0 0.0
    %1534 = vmatmul.mubr.f32.gmra.mxu0 %v1452
    %v1535 = vpop.f32.mrf.mxu0
    %v1536 = vadd.f32 0.0, %v1535
    %v1537 = vpop.f32.mrf.mxu0
    %1538 = vdwg.mxu0
    %v1540 = vsel %vm44, %v1413, 0
    %v1543 = vsel %vm44, %v1414, 0
    %v1546 = vsel %vm44, %v1415, 0
    %v1549 = vsel %vm44, %v1416, 0
    %1551 = vmatprep.subr.mxu0 0.0
    %1552 = vmatpush1.msra.mxu0 0.0
    %1553 = vmatprep.subr.mxu0 0.0
    %1554 = vmatpush1.msra.mxu0 0.0
    %1555 = vmatprep.subr.mxu0 0.0
    %1556 = vmatpush1.msra.mxu0 0.0
    %1557 = vmatprep.subr.mxu0 0.0
    %1558 = vmatpush1.msra.mxu0 0.0
    %1559 = vmatprep.subr.mxu0 0.0
    %1560 = vmatpush1.msra.mxu0 0.0
    %1561 = vmatprep.subr.mxu0 0.0
    %1562 = vmatpush1.msra.mxu0 0.0
    %1563 = vmatprep.subr.mxu0 0.0
    %1564 = vmatpush1.msra.mxu0 0.0
    %1565 = vmatprep.subr.mxu0 0.0
    %1566 = vmatpush1.msra.mxu0 0.0
    %1567 = vmatprep.subr.mxu0 0.0
    %1568 = vmatpush1.msra.mxu0 %v1432
    %1569 = vmatprep.subr.mxu0 0.0
    %1570 = vmatpush1.msra.mxu0 %v1431
    %1571 = vmatprep.subr.mxu0 0.0
    %1572 = vmatpush1.msra.mxu0 %v1430
    %1573 = vmatprep.subr.mxu0 0.0
    %1574 = vmatpush1.msra.mxu0 %v1429
    %1575 = vmatprep.subr.mxu0 0.0
    %1576 = vmatpush1.msra.mxu0 %v1428
    %1577 = vmatprep.subr.mxu0 0.0
    %1578 = vmatpush1.msra.mxu0 %v1427
    %1579 = vmatprep.subr.mxu0 0.0
    %1580 = vmatpush1.msra.mxu0 %v1426
    %1581 = vmatprep.subr.mxu0 0.0
    %1582 = vmatpush1.msra.mxu0 %v1425
    %1583 = vmatprep.subr.mxu0 0.0
    %1584 = vmatpush2.msra.mxu0 0.0
    %1585 = vmatprep.subr.mxu0 0.0
    %1586 = vmatpush2.msra.mxu0 0.0
    %1587 = vmatprep.subr.mxu0 0.0
    %1588 = vmatpush2.msra.mxu0 0.0
    %1589 = vmatprep.subr.mxu0 0.0
    %1590 = vmatpush2.msra.mxu0 0.0
    %1591 = vmatprep.subr.mxu0 0.0
    %1592 = vmatpush2.msra.mxu0 0.0
    %1593 = vmatprep.subr.mxu0 0.0
    %1594 = vmatpush2.msra.mxu0 0.0
    %1595 = vmatprep.subr.mxu0 0.0
    %1596 = vmatpush2.msra.mxu0 0.0
    %1597 = vmatprep.subr.mxu0 0.0
    %1598 = vmatpush2.msra.mxu0 0.0
    %1599 = vmatprep.subr.mxu0 0.0
    %1600 = vmatpush2.msra.mxu0 0.0
    %1601 = vmatprep.subr.mxu0 0.0
    %1602 = vmatpush2.msra.mxu0 0.0
    %1603 = vmatprep.subr.mxu0 0.0
    %1604 = vmatpush2.msra.mxu0 0.0
    %1605 = vmatprep.subr.mxu0 0.0
    %1606 = vmatpush2.msra.mxu0 0.0
    %1607 = vmatprep.subr.mxu0 0.0
    %1608 = vmatpush2.msra.mxu0 0.0
    %1609 = vmatprep.subr.mxu0 0.0
    %1610 = vmatpush2.msra.mxu0 0.0
    %1611 = vmatprep.subr.mxu0 0.0
    %1612 = vmatpush2.msra.mxu0 0.0
    %1613 = vmatprep.subr.mxu0 0.0
    %1614 = vmatpush2.msra.mxu0 0.0
    %1615 = vmatprep.mubr.f32.mxu0 0.0
    %1616 = vmatmul.mubr.f32.gmra.mxu0 %v1540
    %v1617 = vpop.f32.mrf.mxu0
    %v1618 = vadd.f32 %v1521, %v1617
    %v1619 = vpop.f32.mrf.mxu0
    %1620 = vmatprep.mubr.f32.mxu0 0.0
    %1621 = vmatmul.mubr.f32.gmra.mxu0 %v1543
    %v1622 = vpop.f32.mrf.mxu0
    %v1623 = vadd.f32 %v1526, %v1622
    %v1624 = vpop.f32.mrf.mxu0
    %1625 = vmatprep.mubr.f32.mxu0 0.0
    %1626 = vmatmul.mubr.f32.gmra.mxu0 %v1546
    %v1627 = vpop.f32.mrf.mxu0
    %v1628 = vadd.f32 %v1531, %v1627
    %v1629 = vpop.f32.mrf.mxu0
    %1630 = vmatprep.mubr.f32.mxu0 0.0
    %1631 = vmatmul.mubr.f32.gmra.mxu0 %v1549
    %v1632 = vpop.f32.mrf.mxu0
    %v1633 = vadd.f32 %v1536, %v1632
    %v1634 = vpop.f32.mrf.mxu0
    %1635 = vdwg.mxu0
    %s1636 = scalar_lea.vmem %s7, 128
    %v1637 = vld [vmem:[%s1636] sm:$0xff]
    %v1638 = vld [vmem:[%s1636 + $0x8] sm:$0xff]
    %v1639 = vld [vmem:[%s1636 + $0x10] sm:$0xff]
    %v1640 = vld [vmem:[%s1636 + $0x18] sm:$0xff]
    %v1641 = vld [vmem:[%s1636 + $0x20] sm:$0xff]
    %v1642 = vld [vmem:[%s1636 + $0x28] sm:$0xff]
    %v1643 = vld [vmem:[%s1636 + $0x30] sm:$0xff]
    %v1644 = vld [vmem:[%s1636 + $0x38] sm:$0xff]
    %v1646 = vsel %vm44, %v1421, 0
    %v1649 = vsel %vm44, %v1422, 0
    %v1652 = vsel %vm44, %v1423, 0
    %v1655 = vsel %vm44, %v1424, 0
    %1657 = vmatprep.subr.mxu0 0.0
    %1658 = vmatpush1.msra.mxu0 0.0
    %1659 = vmatprep.subr.mxu0 0.0
    %1660 = vmatpush1.msra.mxu0 0.0
    %1661 = vmatprep.subr.mxu0 0.0
    %1662 = vmatpush1.msra.mxu0 0.0
    %1663 = vmatprep.subr.mxu0 0.0
    %1664 = vmatpush1.msra.mxu0 0.0
    %1665 = vmatprep.subr.mxu0 0.0
    %1666 = vmatpush1.msra.mxu0 0.0
    %1667 = vmatprep.subr.mxu0 0.0
    %1668 = vmatpush1.msra.mxu0 0.0
    %1669 = vmatprep.subr.mxu0 0.0
    %1670 = vmatpush1.msra.mxu0 0.0
    %1671 = vmatprep.subr.mxu0 0.0
    %1672 = vmatpush1.msra.mxu0 0.0
    %1673 = vmatprep.subr.mxu0 0.0
    %1674 = vmatpush1.msra.mxu0 %v1644
    %1675 = vmatprep.subr.mxu0 0.0
    %1676 = vmatpush1.msra.mxu0 %v1643
    %1677 = vmatprep.subr.mxu0 0.0
    %1678 = vmatpush1.msra.mxu0 %v1642
    %1679 = vmatprep.subr.mxu0 0.0
    %1680 = vmatpush1.msra.mxu0 %v1641
    %1681 = vmatprep.subr.mxu0 0.0
    %1682 = vmatpush1.msra.mxu0 %v1640
    %1683 = vmatprep.subr.mxu0 0.0
    %1684 = vmatpush1.msra.mxu0 %v1639
    %1685 = vmatprep.subr.mxu0 0.0
    %1686 = vmatpush1.msra.mxu0 %v1638
    %1687 = vmatprep.subr.mxu0 0.0
    %1688 = vmatpush1.msra.mxu0 %v1637
    %1689 = vmatprep.subr.mxu0 0.0
    %1690 = vmatpush2.msra.mxu0 0.0
    %1691 = vmatprep.subr.mxu0 0.0
    %1692 = vmatpush2.msra.mxu0 0.0
    %1693 = vmatprep.subr.mxu0 0.0
    %1694 = vmatpush2.msra.mxu0 0.0
    %1695 = vmatprep.subr.mxu0 0.0
    %1696 = vmatpush2.msra.mxu0 0.0
    %1697 = vmatprep.subr.mxu0 0.0
    %1698 = vmatpush2.msra.mxu0 0.0
    %1699 = vmatprep.subr.mxu0 0.0
    %1700 = vmatpush2.msra.mxu0 0.0
    %1701 = vmatprep.subr.mxu0 0.0
    %1702 = vmatpush2.msra.mxu0 0.0
    %1703 = vmatprep.subr.mxu0 0.0
    %1704 = vmatpush2.msra.mxu0 0.0
    %1705 = vmatprep.subr.mxu0 0.0
    %1706 = vmatpush2.msra.mxu0 0.0
    %1707 = vmatprep.subr.mxu0 0.0
    %1708 = vmatpush2.msra.mxu0 0.0
    %1709 = vmatprep.subr.mxu0 0.0
    %1710 = vmatpush2.msra.mxu0 0.0
    %1711 = vmatprep.subr.mxu0 0.0
    %1712 = vmatpush2.msra.mxu0 0.0
    %1713 = vmatprep.subr.mxu0 0.0
    %1714 = vmatpush2.msra.mxu0 0.0
    %1715 = vmatprep.subr.mxu0 0.0
    %1716 = vmatpush2.msra.mxu0 0.0
    %1717 = vmatprep.subr.mxu0 0.0
    %1718 = vmatpush2.msra.mxu0 0.0
    %1719 = vmatprep.subr.mxu0 0.0
    %1720 = vmatpush2.msra.mxu0 0.0
    %1721 = vmatprep.mubr.f32.mxu0 0.0
    %1722 = vmatmul.mubr.f32.gmra.mxu0 %v1646
    %v1723 = vpop.f32.mrf.mxu0
    %v1724 = vadd.f32 0.0, %v1723
    %v1725 = vpop.f32.mrf.mxu0
    %1726 = vmatprep.mubr.f32.mxu0 0.0
    %1727 = vmatmul.mubr.f32.gmra.mxu0 %v1649
    %v1728 = vpop.f32.mrf.mxu0
    %v1729 = vadd.f32 0.0, %v1728
    %v1730 = vpop.f32.mrf.mxu0
    %1731 = vmatprep.mubr.f32.mxu0 0.0
    %1732 = vmatmul.mubr.f32.gmra.mxu0 %v1652
    %v1733 = vpop.f32.mrf.mxu0
    %v1734 = vadd.f32 0.0, %v1733
    %v1735 = vpop.f32.mrf.mxu0
    %1736 = vmatprep.mubr.f32.mxu0 0.0
    %1737 = vmatmul.mubr.f32.gmra.mxu0 %v1655
    %v1738 = vpop.f32.mrf.mxu0
    %v1739 = vadd.f32 0.0, %v1738
    %v1740 = vpop.f32.mrf.mxu0
    %1741 = vdwg.mxu0
    %v1742 = vadd.f32 %v1618, %v1724
    %v1743 = vadd.f32 %v1623, %v1729
    %v1744 = vadd.f32 %v1628, %v1734
    %v1745 = vadd.f32 %v1633, %v1739
    %v1746 = vld [vmem:[%s8 + $0x3] sm:$0x1]
    %v1747 = vlaneseq
    %v1748 = vshrl.u32 %v1747, 7
    %v1749 = vsub.s32 0, %v1748
    %v1750 = vrot.slane %v1746, %v1749
    %v1751 = vadd.f32 %v1742, %v1750
    %v1752 = vadd.f32 %v1743, %v1750
    %v1753 = vadd.f32 %v1744, %v1750
    %v1754 = vadd.f32 %v1745, %v1750
    %v1755 = vadd.f32 %v1751, %v1186
    %v1756 = vadd.f32 %v1752, %v1187
    %v1757 = vadd.f32 %v1753, %v1188
    %v1758 = vadd.f32 %v1754, %v1189
    %v1759 = vld [vmem:[%s8 + $0x4] sm:$0x1]
    %v1760 = vld [vmem:[%s8 + $0x5] sm:$0x1]
    %v1761 = vsel %vm60, %v1755, 0.0
    %1762 = vadd.xlane.f32.xlu0 %v1761
    %v1763 = vpop.xlane.xlu0 %1762
    %v1764 = vsel %vm60, %v1756, 0.0
    %1765 = vadd.xlane.f32.xlu0 %v1764
    %v1766 = vpop.xlane.xlu0 %1765
    %v1767 = vsel %vm60, %v1757, 0.0
    %1768 = vadd.xlane.f32.xlu0 %v1767
    %v1769 = vpop.xlane.xlu0 %1768
    %v1770 = vsel %vm60, %v1758, 0.0
    %1771 = vadd.xlane.f32.xlu0 %v1770
    %v1772 = vpop.xlane.xlu0 %1771
    %v1773 = vmul.f32 %v1763, %v1133
    %v1774 = vmul.f32 %v1766, %v1133
    %v1775 = vmul.f32 %v1769, %v1133
    %v1776 = vmul.f32 %v1772, %v1133
    %v1777 = vsub.f32 %v1755, %v1773
    %v1778 = vsub.f32 %v1756, %v1774
    %v1779 = vsub.f32 %v1757, %v1775
    %v1780 = vsub.f32 %v1758, %v1776
    %v1781 = vmul.f32 %v1777, %v1777
    %v1782 = vmul.f32 %v1778, %v1778
    %v1783 = vmul.f32 %v1779, %v1779
    %v1784 = vmul.f32 %v1780, %v1780
    %v1785 = vsel %vm60, %v1781, 0.0
    %1786 = vadd.xlane.f32.xlu0 %v1785
    %v1787 = vpop.xlane.xlu0 %1786
    %v1788 = vsel %vm60, %v1782, 0.0
    %1789 = vadd.xlane.f32.xlu0 %v1788
    %v1790 = vpop.xlane.xlu0 %1789
    %v1791 = vsel %vm60, %v1783, 0.0
    %1792 = vadd.xlane.f32.xlu0 %v1791
    %v1793 = vpop.xlane.xlu0 %1792
    %v1794 = vsel %vm60, %v1784, 0.0
    %1795 = vadd.xlane.f32.xlu0 %v1794
    %v1796 = vpop.xlane.xlu0 %1795
    %v1797 = vmul.f32 %v1787, %v1133
    %v1798 = vmul.f32 %v1790, %v1133
    %v1799 = vmul.f32 %v1793, %v1133
    %v1800 = vmul.f32 %v1796, %v1133
    %v1801 = vadd.f32 %v1797, 1e-05
    %v1802 = vadd.f32 %v1798, 1e-05
    %v1803 = vadd.f32 %v1799, 1e-05
    %v1804 = vadd.f32 %v1800, 1e-05
    %v1805 = vrsqrt.pop %v1801
    %v1806 = vrsqrt.pop %v1802
    %v1807 = vrsqrt.pop %v1803
    %v1808 = vrsqrt.pop %v1804
    %v1809 = vmul.f32 %v1777, %v1805
    %v1810 = vmul.f32 %v1778, %v1806
    %v1811 = vmul.f32 %v1779, %v1807
    %v1812 = vmul.f32 %v1780, %v1808
    %v1813 = vlaneseq
    %v1814 = vshrl.u32 %v1813, 7
    %v1815 = vsub.s32 0, %v1814
    %v1816 = vrot.slane %v1759, %v1815
    %v1817 = vmul.f32 %v1809, %v1816
    %v1818 = vmul.f32 %v1810, %v1816
    %v1819 = vmul.f32 %v1811, %v1816
    %v1820 = vmul.f32 %v1812, %v1816
    %v1821 = vlaneseq
    %v1822 = vshrl.u32 %v1821, 7
    %v1823 = vsub.s32 0, %v1822
    %v1824 = vrot.slane %v1760, %v1823
    %v1825 = vadd.f32 %v1817, %v1824
    %v1826 = vadd.f32 %v1818, %v1824
    %v1827 = vadd.f32 %v1819, %v1824
    %v1828 = vadd.f32 %v1820, %v1824
    %s1829 = scalar_lea.vmem %s3, 32
    %v1830 = vld [vmem:[%s1829] sm:$0xff]
    %v1831 = vld [vmem:[%s1829 + $0x8] sm:$0xff]
    %v1832 = vld [vmem:[%s1829 + $0x10] sm:$0xff]
    %v1833 = vld [vmem:[%s1829 + $0x18] sm:$0xff]
    %v1834 = vld [vmem:[%s4 + $0x1] sm:$0x1]
    %v1835 = vlaneseq
    %v1836 = vshrl.u32 %v1835, 7
    %v1837 = vsub.s32 0, %v1836
    %v1838 = vrot.slane %v1834, %v1837
    %v1840 = vsel %vm60, %v1825, 0
    %v1843 = vsel %vm60, %v1826, 0
    %v1846 = vsel %vm60, %v1827, 0
    %v1849 = vsel %vm60, %v1828, 0
    %1851 = vmatprep.subr.mxu0 0.0
    %1852 = vmatpush1.msra.mxu0 0.0
    %1853 = vmatprep.subr.mxu0 0.0
    %1854 = vmatpush1.msra.mxu0 0.0
    %1855 = vmatprep.subr.mxu0 0.0
    %1856 = vmatpush1.msra.mxu0 0.0
    %1857 = vmatprep.subr.mxu0 0.0
    %1858 = vmatpush1.msra.mxu0 0.0
    %1859 = vmatprep.subr.mxu0 0.0
    %1860 = vmatpush1.msra.mxu0 0.0
    %1861 = vmatprep.subr.mxu0 0.0
    %1862 = vmatpush1.msra.mxu0 0.0
    %1863 = vmatprep.subr.mxu0 0.0
    %1864 = vmatpush1.msra.mxu0 0.0
    %1865 = vmatprep.subr.mxu0 0.0
    %1866 = vmatpush1.msra.mxu0 0.0
    %1867 = vmatprep.subr.mxu0 0.0
    %1868 = vmatpush1.msra.mxu0 0.0
    %1869 = vmatprep.subr.mxu0 0.0
    %1870 = vmatpush1.msra.mxu0 0.0
    %1871 = vmatprep.subr.mxu0 0.0
    %1872 = vmatpush1.msra.mxu0 0.0
    %1873 = vmatprep.subr.mxu0 0.0
    %1874 = vmatpush1.msra.mxu0 0.0
    %1875 = vmatprep.subr.mxu0 0.0
    %1876 = vmatpush1.msra.mxu0 %v1833
    %1877 = vmatprep.subr.mxu0 0.0
    %1878 = vmatpush1.msra.mxu0 %v1832
    %1879 = vmatprep.subr.mxu0 0.0
    %1880 = vmatpush1.msra.mxu0 %v1831
    %1881 = vmatprep.subr.mxu0 0.0
    %1882 = vmatpush1.msra.mxu0 %v1830
    %1883 = vmatprep.subr.mxu0 0.0
    %1884 = vmatpush2.msra.mxu0 0.0
    %1885 = vmatprep.subr.mxu0 0.0
    %1886 = vmatpush2.msra.mxu0 0.0
    %1887 = vmatprep.subr.mxu0 0.0
    %1888 = vmatpush2.msra.mxu0 0.0
    %1889 = vmatprep.subr.mxu0 0.0
    %1890 = vmatpush2.msra.mxu0 0.0
    %1891 = vmatprep.subr.mxu0 0.0
    %1892 = vmatpush2.msra.mxu0 0.0
    %1893 = vmatprep.subr.mxu0 0.0
    %1894 = vmatpush2.msra.mxu0 0.0
    %1895 = vmatprep.subr.mxu0 0.0
    %1896 = vmatpush2.msra.mxu0 0.0
    %1897 = vmatprep.subr.mxu0 0.0
    %1898 = vmatpush2.msra.mxu0 0.0
    %1899 = vmatprep.subr.mxu0 0.0
    %1900 = vmatpush2.msra.mxu0 0.0
    %1901 = vmatprep.subr.mxu0 0.0
    %1902 = vmatpush2.msra.mxu0 0.0
    %1903 = vmatprep.subr.mxu0 0.0
    %1904 = vmatpush2.msra.mxu0 0.0
    %1905 = vmatprep.subr.mxu0 0.0
    %1906 = vmatpush2.msra.mxu0 0.0
    %1907 = vmatprep.subr.mxu0 0.0
    %1908 = vmatpush2.msra.mxu0 0.0
    %1909 = vmatprep.subr.mxu0 0.0
    %1910 = vmatpush2.msra.mxu0 0.0
    %1911 = vmatprep.subr.mxu0 0.0
    %1912 = vmatpush2.msra.mxu0 0.0
    %1913 = vmatprep.subr.mxu0 0.0
    %1914 = vmatpush2.msra.mxu0 0.0
    %1915 = vmatprep.mubr.f32.mxu0 0.0
    %1916 = vmatmul.mubr.f32.gmra.mxu0 %v1840
    %v1917 = vpop.f32.mrf.mxu0
    %v1918 = vadd.f32 %v1838, %v1917
    %v1919 = vpop.f32.mrf.mxu0
    %1920 = vmatprep.mubr.f32.mxu0 0.0
    %1921 = vmatmul.mubr.f32.gmra.mxu0 %v1843
    %v1922 = vpop.f32.mrf.mxu0
    %v1923 = vadd.f32 %v1838, %v1922
    %v1924 = vpop.f32.mrf.mxu0
    %1925 = vmatprep.mubr.f32.mxu0 0.0
    %1926 = vmatmul.mubr.f32.gmra.mxu0 %v1846
    %v1927 = vpop.f32.mrf.mxu0
    %v1928 = vadd.f32 %v1838, %v1927
    %v1929 = vpop.f32.mrf.mxu0
    %1930 = vmatprep.mubr.f32.mxu0 0.0
    %1931 = vmatmul.mubr.f32.gmra.mxu0 %v1849
    %v1932 = vpop.f32.mrf.mxu0
    %v1933 = vadd.f32 %v1838, %v1932
    %v1934 = vpop.f32.mrf.mxu0
    %1935 = vdwg.mxu0
    %v1936 = vld [vmem:[%s1] sm:$0x1]
    %v1937 = vlaneseq
    %v1938 = vshrl.u32 %v1937, 7
    %v1939 = vsub.s32 0, %v1938
    %v1940 = vrot.slane %v1936, %v1939
    %1943 = vrot.lane.b32.xlu0 %v1918, 96
    %v1944 = vpop.permute.xlu0 %1943
    %1945 = vrot.lane.b32.xlu0 %v1923, 96
    %v1946 = vpop.permute.xlu0 %1945
    %v1947 = vsel %vm169, %v1918, 0
    %v1949 = vsel %vm169, %v1923, 0
    %v1951 = vsel %vm169, %v1944, 0
    %v1953 = vsel %vm169, %v1946, 0
    %1955 = vmatprep.subr.mxu0 0.0
    %1956 = vmatpush1.xpose.msra.mxu0 0.0
    %1957 = vmatprep.subr.mxu0 0.0
    %1958 = vmatpush1.xpose.msra.mxu0 0.0
    %1959 = vmatprep.subr.mxu0 0.0
    %1960 = vmatpush1.xpose.msra.mxu0 0.0
    %1961 = vmatprep.subr.mxu0 0.0
    %1962 = vmatpush1.xpose.msra.mxu0 0.0
    %1963 = vmatprep.subr.mxu0 0.0
    %1964 = vmatpush1.xpose.msra.mxu0 0.0
    %1965 = vmatprep.subr.mxu0 0.0
    %1966 = vmatpush1.xpose.msra.mxu0 0.0
    %1967 = vmatprep.subr.mxu0 0.0
    %1968 = vmatpush1.xpose.msra.mxu0 0.0
    %1969 = vmatprep.subr.mxu0 0.0
    %1970 = vmatpush1.xpose.msra.mxu0 0.0
    %1971 = vmatprep.subr.mxu0 0.0
    %1972 = vmatpush1.xpose.msra.mxu0 0.0
    %1973 = vmatprep.subr.mxu0 0.0
    %1974 = vmatpush1.xpose.msra.mxu0 0.0
    %1975 = vmatprep.subr.mxu0 0.0
    %1976 = vmatpush1.xpose.msra.mxu0 0.0
    %1977 = vmatprep.subr.mxu0 0.0
    %1978 = vmatpush1.xpose.msra.mxu0 0.0
    %1979 = vmatprep.subr.mxu0 0.0
    %1980 = vmatpush1.xpose.msra.mxu0 0.0
    %1981 = vmatprep.subr.mxu0 0.0
    %1982 = vmatpush1.xpose.msra.mxu0 0.0
    %1983 = vmatprep.subr.mxu0 0.0
    %1984 = vmatpush1.xpose.msra.mxu0 %v1953
    %1985 = vmatprep.subr.mxu0 0.0
    %1986 = vmatpush1.xpose.msra.mxu0 %v1951
    %1987 = vmatprep.subr.mxu0 0.0
    %1988 = vmatpush2.xpose.msra.mxu0 0.0
    %1989 = vmatprep.subr.mxu0 0.0
    %1990 = vmatpush2.xpose.msra.mxu0 0.0
    %1991 = vmatprep.subr.mxu0 0.0
    %1992 = vmatpush2.xpose.msra.mxu0 0.0
    %1993 = vmatprep.subr.mxu0 0.0
    %1994 = vmatpush2.xpose.msra.mxu0 0.0
    %1995 = vmatprep.subr.mxu0 0.0
    %1996 = vmatpush2.xpose.msra.mxu0 0.0
    %1997 = vmatprep.subr.mxu0 0.0
    %1998 = vmatpush2.xpose.msra.mxu0 0.0
    %1999 = vmatprep.subr.mxu0 0.0
    %2000 = vmatpush2.xpose.msra.mxu0 0.0
    %2001 = vmatprep.subr.mxu0 0.0
    %2002 = vmatpush2.xpose.msra.mxu0 0.0
    %2003 = vmatprep.subr.mxu0 0.0
    %2004 = vmatpush2.xpose.msra.mxu0 0.0
    %2005 = vmatprep.subr.mxu0 0.0
    %2006 = vmatpush2.xpose.msra.mxu0 0.0
    %2007 = vmatprep.subr.mxu0 0.0
    %2008 = vmatpush2.xpose.msra.mxu0 0.0
    %2009 = vmatprep.subr.mxu0 0.0
    %2010 = vmatpush2.xpose.msra.mxu0 0.0
    %2011 = vmatprep.subr.mxu0 0.0
    %2012 = vmatpush2.xpose.msra.mxu0 0.0
    %2013 = vmatprep.subr.mxu0 0.0
    %2014 = vmatpush2.xpose.msra.mxu0 0.0
    %2015 = vmatprep.subr.mxu0 0.0
    %2016 = vmatpush2.xpose.msra.mxu0 0.0
    %2017 = vmatprep.subr.mxu0 0.0
    %2018 = vmatpush2.xpose.msra.mxu0 0.0
    %2019 = vmatprep.mubr.f32.mxu0 0.0
    %2020 = vmatmul.mubr.f32.gmra.mxu0 %v1947
    %v2021 = vpop.f32.mrf.mxu0
    %v2022 = vadd.f32 %v1940, %v2021
    %v2023 = vpop.f32.mrf.mxu0
    %2024 = vmatprep.mubr.f32.mxu0 0.0
    %2025 = vmatmul.mubr.f32.gmra.mxu0 %v1949
    %v2026 = vpop.f32.mrf.mxu0
    %v2027 = vadd.f32 %v1940, %v2026
    %v2028 = vpop.f32.mrf.mxu0
    %2029 = vdwg.mxu0
    %v2030 = vsel %vm169, %v2022, -inf
    %2031 = vmax.xlane.f32.xlu0 %v2030
    %v2032 = vpop.xlane.xlu0 %2031
    %v2033 = vsel %vm169, %v2027, -inf
    %2034 = vmax.xlane.f32.xlu0 %v2033
    %v2035 = vpop.xlane.xlu0 %2034
    %v2036 = vsub.f32 %v2022, %v2032
    %v2037 = vsub.f32 %v2027, %v2035
    %v2038 = vmul.f32 %v2036, 1.442695
    %v2039 = vpow.pop %v2038
    %v2040 = vmul.f32 %v2037, 1.442695
    %v2041 = vpow.pop %v2040
    %v2042 = vsel %vm169, %v2039, 0.0
    %2043 = vadd.xlane.f32.xlu0 %v2042
    %v2044 = vpop.xlane.xlu0 %2043
    %v2045 = vsel %vm169, %v2041, 0.0
    %2046 = vadd.xlane.f32.xlu0 %v2045
    %v2047 = vpop.xlane.xlu0 %2046
    %v2048 = vrcp.pop %v2044
    %v2049 = vrcp.pop %v2047
    %v2050 = vmul.f32 %v2044, %v2048
    %v2051 = vmul.f32 %v2047, %v2049
    %v2052 = vsub.f32 2.0, %v2050
    %v2053 = vsub.f32 2.0, %v2051
    %v2054 = vmul.f32 %v2048, %v2052
    %v2055 = vmul.f32 %v2049, %v2053
    %v2056 = vmul.f32 %v2039, %v2054
    %v2057 = vmul.f32 %v2041, %v2055
    %2058 = vrot.lane.b32.xlu0 %v1918, 64
    %v2059 = vpop.permute.xlu0 %2058
    %2060 = vrot.lane.b32.xlu0 %v1923, 64
    %v2061 = vpop.permute.xlu0 %2060
    %v2065 = vsel %vm169, %v2056, 0
    %v2068 = vsel %vm169, %v2057, 0
    %2070 = vmatprep.subr.mxu0 0.0
    %2071 = vmatpush1.msra.mxu0 0.0
    %2072 = vmatprep.subr.mxu0 0.0
    %2073 = vmatpush1.msra.mxu0 0.0
    %2074 = vmatprep.subr.mxu0 0.0
    %2075 = vmatpush1.msra.mxu0 0.0
    %2076 = vmatprep.subr.mxu0 0.0
    %2077 = vmatpush1.msra.mxu0 0.0
    %2078 = vmatprep.subr.mxu0 0.0
    %2079 = vmatpush1.msra.mxu0 0.0
    %2080 = vmatprep.subr.mxu0 0.0
    %2081 = vmatpush1.msra.mxu0 0.0
    %2082 = vmatprep.subr.mxu0 0.0
    %2083 = vmatpush1.msra.mxu0 0.0
    %2084 = vmatprep.subr.mxu0 0.0
    %2085 = vmatpush1.msra.mxu0 0.0
    %2086 = vmatprep.subr.mxu0 0.0
    %2087 = vmatpush1.msra.mxu0 0.0
    %2088 = vmatprep.subr.mxu0 0.0
    %2089 = vmatpush1.msra.mxu0 0.0
    %2090 = vmatprep.subr.mxu0 0.0
    %2091 = vmatpush1.msra.mxu0 0.0
    %2092 = vmatprep.subr.mxu0 0.0
    %2093 = vmatpush1.msra.mxu0 0.0
    %2094 = vmatprep.subr.mxu0 0.0
    %2095 = vmatpush1.msra.mxu0 0.0
    %2096 = vmatprep.subr.mxu0 0.0
    %2097 = vmatpush1.msra.mxu0 0.0
    %2098 = vmatprep.subr.mxu0 0.0
    %2099 = vmatpush1.msra.mxu0 %v2061
    %2100 = vmatprep.subr.mxu0 0.0
    %2101 = vmatpush1.msra.mxu0 %v2059
    %2102 = vmatprep.subr.mxu0 0.0
    %2103 = vmatpush2.msra.mxu0 0.0
    %2104 = vmatprep.subr.mxu0 0.0
    %2105 = vmatpush2.msra.mxu0 0.0
    %2106 = vmatprep.subr.mxu0 0.0
    %2107 = vmatpush2.msra.mxu0 0.0
    %2108 = vmatprep.subr.mxu0 0.0
    %2109 = vmatpush2.msra.mxu0 0.0
    %2110 = vmatprep.subr.mxu0 0.0
    %2111 = vmatpush2.msra.mxu0 0.0
    %2112 = vmatprep.subr.mxu0 0.0
    %2113 = vmatpush2.msra.mxu0 0.0
    %2114 = vmatprep.subr.mxu0 0.0
    %2115 = vmatpush2.msra.mxu0 0.0
    %2116 = vmatprep.subr.mxu0 0.0
    %2117 = vmatpush2.msra.mxu0 0.0
    %2118 = vmatprep.subr.mxu0 0.0
    %2119 = vmatpush2.msra.mxu0 0.0
    %2120 = vmatprep.subr.mxu0 0.0
    %2121 = vmatpush2.msra.mxu0 0.0
    %2122 = vmatprep.subr.mxu0 0.0
    %2123 = vmatpush2.msra.mxu0 0.0
    %2124 = vmatprep.subr.mxu0 0.0
    %2125 = vmatpush2.msra.mxu0 0.0
    %2126 = vmatprep.subr.mxu0 0.0
    %2127 = vmatpush2.msra.mxu0 0.0
    %2128 = vmatprep.subr.mxu0 0.0
    %2129 = vmatpush2.msra.mxu0 0.0
    %2130 = vmatprep.subr.mxu0 0.0
    %2131 = vmatpush2.msra.mxu0 0.0
    %2132 = vmatprep.subr.mxu0 0.0
    %2133 = vmatpush2.msra.mxu0 0.0
    %2134 = vmatprep.mubr.f32.mxu0 0.0
    %2135 = vmatmul.mubr.f32.gmra.mxu0 %v2065
    %v2136 = vpop.f32.mrf.mxu0
    %v2137 = vadd.f32 0.0, %v2136
    %v2138 = vpop.f32.mrf.mxu0
    %2139 = vmatprep.mubr.f32.mxu0 0.0
    %2140 = vmatmul.mubr.f32.gmra.mxu0 %v2068
    %v2141 = vpop.f32.mrf.mxu0
    %v2142 = vadd.f32 0.0, %v2141
    %v2143 = vpop.f32.mrf.mxu0
    %2144 = vdwg.mxu0
    %2145 = vrot.lane.b32.xlu0 %v1918, 112
    %v2146 = vpop.permute.xlu0 %2145
    %2147 = vrot.lane.b32.xlu0 %v1923, 112
    %v2148 = vpop.permute.xlu0 %2147
    %2149 = vrot.lane.b32.xlu0 %v1918, 80
    %v2150 = vpop.permute.xlu0 %2149
    %2151 = vrot.lane.b32.xlu0 %v1923, 80
    %v2152 = vpop.permute.xlu0 %2151
    %v2153 = vsel %vm169, %v2146, 0
    %v2155 = vsel %vm169, %v2148, 0
    %v2157 = vsel %vm169, %v2150, 0
    %v2159 = vsel %vm169, %v2152, 0
    %2161 = vmatprep.subr.mxu0 0.0
    %2162 = vmatpush1.xpose.msra.mxu0 0.0
    %2163 = vmatprep.subr.mxu0 0.0
    %2164 = vmatpush1.xpose.msra.mxu0 0.0
    %2165 = vmatprep.subr.mxu0 0.0
    %2166 = vmatpush1.xpose.msra.mxu0 0.0
    %2167 = vmatprep.subr.mxu0 0.0
    %2168 = vmatpush1.xpose.msra.mxu0 0.0
    %2169 = vmatprep.subr.mxu0 0.0
    %2170 = vmatpush1.xpose.msra.mxu0 0.0
    %2171 = vmatprep.subr.mxu0 0.0
    %2172 = vmatpush1.xpose.msra.mxu0 0.0
    %2173 = vmatprep.subr.mxu0 0.0
    %2174 = vmatpush1.xpose.msra.mxu0 0.0
    %2175 = vmatprep.subr.mxu0 0.0
    %2176 = vmatpush1.xpose.msra.mxu0 0.0
    %2177 = vmatprep.subr.mxu0 0.0
    %2178 = vmatpush1.xpose.msra.mxu0 0.0
    %2179 = vmatprep.subr.mxu0 0.0
    %2180 = vmatpush1.xpose.msra.mxu0 0.0
    %2181 = vmatprep.subr.mxu0 0.0
    %2182 = vmatpush1.xpose.msra.mxu0 0.0
    %2183 = vmatprep.subr.mxu0 0.0
    %2184 = vmatpush1.xpose.msra.mxu0 0.0
    %2185 = vmatprep.subr.mxu0 0.0
    %2186 = vmatpush1.xpose.msra.mxu0 0.0
    %2187 = vmatprep.subr.mxu0 0.0
    %2188 = vmatpush1.xpose.msra.mxu0 0.0
    %2189 = vmatprep.subr.mxu0 0.0
    %2190 = vmatpush1.xpose.msra.mxu0 %v2159
    %2191 = vmatprep.subr.mxu0 0.0
    %2192 = vmatpush1.xpose.msra.mxu0 %v2157
    %2193 = vmatprep.subr.mxu0 0.0
    %2194 = vmatpush2.xpose.msra.mxu0 0.0
    %2195 = vmatprep.subr.mxu0 0.0
    %2196 = vmatpush2.xpose.msra.mxu0 0.0
    %2197 = vmatprep.subr.mxu0 0.0
    %2198 = vmatpush2.xpose.msra.mxu0 0.0
    %2199 = vmatprep.subr.mxu0 0.0
    %2200 = vmatpush2.xpose.msra.mxu0 0.0
    %2201 = vmatprep.subr.mxu0 0.0
    %2202 = vmatpush2.xpose.msra.mxu0 0.0
    %2203 = vmatprep.subr.mxu0 0.0
    %2204 = vmatpush2.xpose.msra.mxu0 0.0
    %2205 = vmatprep.subr.mxu0 0.0
    %2206 = vmatpush2.xpose.msra.mxu0 0.0
    %2207 = vmatprep.subr.mxu0 0.0
    %2208 = vmatpush2.xpose.msra.mxu0 0.0
    %2209 = vmatprep.subr.mxu0 0.0
    %2210 = vmatpush2.xpose.msra.mxu0 0.0
    %2211 = vmatprep.subr.mxu0 0.0
    %2212 = vmatpush2.xpose.msra.mxu0 0.0
    %2213 = vmatprep.subr.mxu0 0.0
    %2214 = vmatpush2.xpose.msra.mxu0 0.0
    %2215 = vmatprep.subr.mxu0 0.0
    %2216 = vmatpush2.xpose.msra.mxu0 0.0
    %2217 = vmatprep.subr.mxu0 0.0
    %2218 = vmatpush2.xpose.msra.mxu0 0.0
    %2219 = vmatprep.subr.mxu0 0.0
    %2220 = vmatpush2.xpose.msra.mxu0 0.0
    %2221 = vmatprep.subr.mxu0 0.0
    %2222 = vmatpush2.xpose.msra.mxu0 0.0
    %2223 = vmatprep.subr.mxu0 0.0
    %2224 = vmatpush2.xpose.msra.mxu0 0.0
    %2225 = vmatprep.mubr.f32.mxu0 0.0
    %2226 = vmatmul.mubr.f32.gmra.mxu0 %v2153
    %v2227 = vpop.f32.mrf.mxu0
    %v2228 = vadd.f32 %v1940, %v2227
    %v2229 = vpop.f32.mrf.mxu0
    %2230 = vmatprep.mubr.f32.mxu0 0.0
    %2231 = vmatmul.mubr.f32.gmra.mxu0 %v2155
    %v2232 = vpop.f32.mrf.mxu0
    %v2233 = vadd.f32 %v1940, %v2232
    %v2234 = vpop.f32.mrf.mxu0
    %2235 = vdwg.mxu0
    %v2236 = vsel %vm169, %v2228, -inf
    %2237 = vmax.xlane.f32.xlu0 %v2236
    %v2238 = vpop.xlane.xlu0 %2237
    %v2239 = vsel %vm169, %v2233, -inf
    %2240 = vmax.xlane.f32.xlu0 %v2239
    %v2241 = vpop.xlane.xlu0 %2240
    %v2242 = vsub.f32 %v2228, %v2238
    %v2243 = vsub.f32 %v2233, %v2241
    %v2244 = vmul.f32 %v2242, 1.442695
    %v2245 = vpow.pop %v2244
    %v2246 = vmul.f32 %v2243, 1.442695
    %v2247 = vpow.pop %v2246
    %v2248 = vsel %vm169, %v2245, 0.0
    %2249 = vadd.xlane.f32.xlu0 %v2248
    %v2250 = vpop.xlane.xlu0 %2249
    %v2251 = vsel %vm169, %v2247, 0.0
    %2252 = vadd.xlane.f32.xlu0 %v2251
    %v2253 = vpop.xlane.xlu0 %2252
    %v2254 = vrcp.pop %v2250
    %v2255 = vrcp.pop %v2253
    %v2256 = vmul.f32 %v2250, %v2254
    %v2257 = vmul.f32 %v2253, %v2255
    %v2258 = vsub.f32 2.0, %v2256
    %v2259 = vsub.f32 2.0, %v2257
    %v2260 = vmul.f32 %v2254, %v2258
    %v2261 = vmul.f32 %v2255, %v2259
    %v2262 = vmul.f32 %v2245, %v2260
    %v2263 = vmul.f32 %v2247, %v2261
    %2264 = vrot.lane.b32.xlu0 %v1918, 48
    %v2265 = vpop.permute.xlu0 %2264
    %2266 = vrot.lane.b32.xlu0 %v1923, 48
    %v2267 = vpop.permute.xlu0 %2266
    %v2271 = vsel %vm169, %v2262, 0
    %v2274 = vsel %vm169, %v2263, 0
    %2276 = vmatprep.subr.mxu0 0.0
    %2277 = vmatpush1.msra.mxu0 0.0
    %2278 = vmatprep.subr.mxu0 0.0
    %2279 = vmatpush1.msra.mxu0 0.0
    %2280 = vmatprep.subr.mxu0 0.0
    %2281 = vmatpush1.msra.mxu0 0.0
    %2282 = vmatprep.subr.mxu0 0.0
    %2283 = vmatpush1.msra.mxu0 0.0
    %2284 = vmatprep.subr.mxu0 0.0
    %2285 = vmatpush1.msra.mxu0 0.0
    %2286 = vmatprep.subr.mxu0 0.0
    %2287 = vmatpush1.msra.mxu0 0.0
    %2288 = vmatprep.subr.mxu0 0.0
    %2289 = vmatpush1.msra.mxu0 0.0
    %2290 = vmatprep.subr.mxu0 0.0
    %2291 = vmatpush1.msra.mxu0 0.0
    %2292 = vmatprep.subr.mxu0 0.0
    %2293 = vmatpush1.msra.mxu0 0.0
    %2294 = vmatprep.subr.mxu0 0.0
    %2295 = vmatpush1.msra.mxu0 0.0
    %2296 = vmatprep.subr.mxu0 0.0
    %2297 = vmatpush1.msra.mxu0 0.0
    %2298 = vmatprep.subr.mxu0 0.0
    %2299 = vmatpush1.msra.mxu0 0.0
    %2300 = vmatprep.subr.mxu0 0.0
    %2301 = vmatpush1.msra.mxu0 0.0
    %2302 = vmatprep.subr.mxu0 0.0
    %2303 = vmatpush1.msra.mxu0 0.0
    %2304 = vmatprep.subr.mxu0 0.0
    %2305 = vmatpush1.msra.mxu0 %v2267
    %2306 = vmatprep.subr.mxu0 0.0
    %2307 = vmatpush1.msra.mxu0 %v2265
    %2308 = vmatprep.subr.mxu0 0.0
    %2309 = vmatpush2.msra.mxu0 0.0
    %2310 = vmatprep.subr.mxu0 0.0
    %2311 = vmatpush2.msra.mxu0 0.0
    %2312 = vmatprep.subr.mxu0 0.0
    %2313 = vmatpush2.msra.mxu0 0.0
    %2314 = vmatprep.subr.mxu0 0.0
    %2315 = vmatpush2.msra.mxu0 0.0
    %2316 = vmatprep.subr.mxu0 0.0
    %2317 = vmatpush2.msra.mxu0 0.0
    %2318 = vmatprep.subr.mxu0 0.0
    %2319 = vmatpush2.msra.mxu0 0.0
    %2320 = vmatprep.subr.mxu0 0.0
    %2321 = vmatpush2.msra.mxu0 0.0
    %2322 = vmatprep.subr.mxu0 0.0
    %2323 = vmatpush2.msra.mxu0 0.0
    %2324 = vmatprep.subr.mxu0 0.0
    %2325 = vmatpush2.msra.mxu0 0.0
    %2326 = vmatprep.subr.mxu0 0.0
    %2327 = vmatpush2.msra.mxu0 0.0
    %2328 = vmatprep.subr.mxu0 0.0
    %2329 = vmatpush2.msra.mxu0 0.0
    %2330 = vmatprep.subr.mxu0 0.0
    %2331 = vmatpush2.msra.mxu0 0.0
    %2332 = vmatprep.subr.mxu0 0.0
    %2333 = vmatpush2.msra.mxu0 0.0
    %2334 = vmatprep.subr.mxu0 0.0
    %2335 = vmatpush2.msra.mxu0 0.0
    %2336 = vmatprep.subr.mxu0 0.0
    %2337 = vmatpush2.msra.mxu0 0.0
    %2338 = vmatprep.subr.mxu0 0.0
    %2339 = vmatpush2.msra.mxu0 0.0
    %2340 = vmatprep.mubr.f32.mxu0 0.0
    %2341 = vmatmul.mubr.f32.gmra.mxu0 %v2271
    %v2342 = vpop.f32.mrf.mxu0
    %v2343 = vadd.f32 0.0, %v2342
    %v2344 = vpop.f32.mrf.mxu0
    %2345 = vmatprep.mubr.f32.mxu0 0.0
    %2346 = vmatmul.mubr.f32.gmra.mxu0 %v2274
    %v2347 = vpop.f32.mrf.mxu0
    %v2348 = vadd.f32 0.0, %v2347
    %v2349 = vpop.f32.mrf.mxu0
    %2350 = vdwg.mxu0
    %2353 = vrot.lane.b32.xlu0 %v2343, 16
    %v2354 = vpop.permute.xlu0 %2353
    %2355 = vrot.lane.b32.xlu0 %v2348, 16
    %v2356 = vpop.permute.xlu0 %2355
    %v2359 = vsel %vm169, %v2137, %v2354
    %v2360 = vsel %vm169, %v2142, %v2356
    %v2361 = vld [vmem:[%s1 + $0x1] sm:$0x1]
    %v2362 = vlaneseq
    %v2363 = vshrl.u32 %v2362, 7
    %v2364 = vsub.s32 0, %v2363
    %v2365 = vrot.slane %v2361, %v2364
    %2368 = vrot.lane.b32.xlu0 %v1928, 96
    %v2369 = vpop.permute.xlu0 %2368
    %2370 = vrot.lane.b32.xlu0 %v1933, 96
    %v2371 = vpop.permute.xlu0 %2370
    %v2372 = vsel %vm169, %v1928, 0
    %v2374 = vsel %vm169, %v1933, 0
    %v2376 = vsel %vm169, %v2369, 0
    %v2378 = vsel %vm169, %v2371, 0
    %2380 = vmatprep.subr.mxu0 0.0
    %2381 = vmatpush1.xpose.msra.mxu0 0.0
    %2382 = vmatprep.subr.mxu0 0.0
    %2383 = vmatpush1.xpose.msra.mxu0 0.0
    %2384 = vmatprep.subr.mxu0 0.0
    %2385 = vmatpush1.xpose.msra.mxu0 0.0
    %2386 = vmatprep.subr.mxu0 0.0
    %2387 = vmatpush1.xpose.msra.mxu0 0.0
    %2388 = vmatprep.subr.mxu0 0.0
    %2389 = vmatpush1.xpose.msra.mxu0 0.0
    %2390 = vmatprep.subr.mxu0 0.0
    %2391 = vmatpush1.xpose.msra.mxu0 0.0
    %2392 = vmatprep.subr.mxu0 0.0
    %2393 = vmatpush1.xpose.msra.mxu0 0.0
    %2394 = vmatprep.subr.mxu0 0.0
    %2395 = vmatpush1.xpose.msra.mxu0 0.0
    %2396 = vmatprep.subr.mxu0 0.0
    %2397 = vmatpush1.xpose.msra.mxu0 0.0
    %2398 = vmatprep.subr.mxu0 0.0
    %2399 = vmatpush1.xpose.msra.mxu0 0.0
    %2400 = vmatprep.subr.mxu0 0.0
    %2401 = vmatpush1.xpose.msra.mxu0 0.0
    %2402 = vmatprep.subr.mxu0 0.0
    %2403 = vmatpush1.xpose.msra.mxu0 0.0
    %2404 = vmatprep.subr.mxu0 0.0
    %2405 = vmatpush1.xpose.msra.mxu0 0.0
    %2406 = vmatprep.subr.mxu0 0.0
    %2407 = vmatpush1.xpose.msra.mxu0 0.0
    %2408 = vmatprep.subr.mxu0 0.0
    %2409 = vmatpush1.xpose.msra.mxu0 %v2378
    %2410 = vmatprep.subr.mxu0 0.0
    %2411 = vmatpush1.xpose.msra.mxu0 %v2376
    %2412 = vmatprep.subr.mxu0 0.0
    %2413 = vmatpush2.xpose.msra.mxu0 0.0
    %2414 = vmatprep.subr.mxu0 0.0
    %2415 = vmatpush2.xpose.msra.mxu0 0.0
    %2416 = vmatprep.subr.mxu0 0.0
    %2417 = vmatpush2.xpose.msra.mxu0 0.0
    %2418 = vmatprep.subr.mxu0 0.0
    %2419 = vmatpush2.xpose.msra.mxu0 0.0
    %2420 = vmatprep.subr.mxu0 0.0
    %2421 = vmatpush2.xpose.msra.mxu0 0.0
    %2422 = vmatprep.subr.mxu0 0.0
    %2423 = vmatpush2.xpose.msra.mxu0 0.0
    %2424 = vmatprep.subr.mxu0 0.0
    %2425 = vmatpush2.xpose.msra.mxu0 0.0
    %2426 = vmatprep.subr.mxu0 0.0
    %2427 = vmatpush2.xpose.msra.mxu0 0.0
    %2428 = vmatprep.subr.mxu0 0.0
    %2429 = vmatpush2.xpose.msra.mxu0 0.0
    %2430 = vmatprep.subr.mxu0 0.0
    %2431 = vmatpush2.xpose.msra.mxu0 0.0
    %2432 = vmatprep.subr.mxu0 0.0
    %2433 = vmatpush2.xpose.msra.mxu0 0.0
    %2434 = vmatprep.subr.mxu0 0.0
    %2435 = vmatpush2.xpose.msra.mxu0 0.0
    %2436 = vmatprep.subr.mxu0 0.0
    %2437 = vmatpush2.xpose.msra.mxu0 0.0
    %2438 = vmatprep.subr.mxu0 0.0
    %2439 = vmatpush2.xpose.msra.mxu0 0.0
    %2440 = vmatprep.subr.mxu0 0.0
    %2441 = vmatpush2.xpose.msra.mxu0 0.0
    %2442 = vmatprep.subr.mxu0 0.0
    %2443 = vmatpush2.xpose.msra.mxu0 0.0
    %2444 = vmatprep.mubr.f32.mxu0 0.0
    %2445 = vmatmul.mubr.f32.gmra.mxu0 %v2372
    %v2446 = vpop.f32.mrf.mxu0
    %v2447 = vadd.f32 %v2365, %v2446
    %v2448 = vpop.f32.mrf.mxu0
    %2449 = vmatprep.mubr.f32.mxu0 0.0
    %2450 = vmatmul.mubr.f32.gmra.mxu0 %v2374
    %v2451 = vpop.f32.mrf.mxu0
    %v2452 = vadd.f32 %v2365, %v2451
    %v2453 = vpop.f32.mrf.mxu0
    %2454 = vdwg.mxu0
    %v2455 = vsel %vm169, %v2447, -inf
    %2456 = vmax.xlane.f32.xlu0 %v2455
    %v2457 = vpop.xlane.xlu0 %2456
    %v2458 = vsel %vm169, %v2452, -inf
    %2459 = vmax.xlane.f32.xlu0 %v2458
    %v2460 = vpop.xlane.xlu0 %2459
    %v2461 = vsub.f32 %v2447, %v2457
    %v2462 = vsub.f32 %v2452, %v2460
    %v2463 = vmul.f32 %v2461, 1.442695
    %v2464 = vpow.pop %v2463
    %v2465 = vmul.f32 %v2462, 1.442695
    %v2466 = vpow.pop %v2465
    %v2467 = vsel %vm169, %v2464, 0.0
    %2468 = vadd.xlane.f32.xlu0 %v2467
    %v2469 = vpop.xlane.xlu0 %2468
    %v2470 = vsel %vm169, %v2466, 0.0
    %2471 = vadd.xlane.f32.xlu0 %v2470
    %v2472 = vpop.xlane.xlu0 %2471
    %v2473 = vrcp.pop %v2469
    %v2474 = vrcp.pop %v2472
    %v2475 = vmul.f32 %v2469, %v2473
    %v2476 = vmul.f32 %v2472, %v2474
    %v2477 = vsub.f32 2.0, %v2475
    %v2478 = vsub.f32 2.0, %v2476
    %v2479 = vmul.f32 %v2473, %v2477
    %v2480 = vmul.f32 %v2474, %v2478
    %v2481 = vmul.f32 %v2464, %v2479
    %v2482 = vmul.f32 %v2466, %v2480
    %2483 = vrot.lane.b32.xlu0 %v1928, 64
    %v2484 = vpop.permute.xlu0 %2483
    %2485 = vrot.lane.b32.xlu0 %v1933, 64
    %v2486 = vpop.permute.xlu0 %2485
    %v2490 = vsel %vm169, %v2481, 0
    %v2493 = vsel %vm169, %v2482, 0
    %2495 = vmatprep.subr.mxu0 0.0
    %2496 = vmatpush1.msra.mxu0 0.0
    %2497 = vmatprep.subr.mxu0 0.0
    %2498 = vmatpush1.msra.mxu0 0.0
    %2499 = vmatprep.subr.mxu0 0.0
    %2500 = vmatpush1.msra.mxu0 0.0
    %2501 = vmatprep.subr.mxu0 0.0
    %2502 = vmatpush1.msra.mxu0 0.0
    %2503 = vmatprep.subr.mxu0 0.0
    %2504 = vmatpush1.msra.mxu0 0.0
    %2505 = vmatprep.subr.mxu0 0.0
    %2506 = vmatpush1.msra.mxu0 0.0
    %2507 = vmatprep.subr.mxu0 0.0
    %2508 = vmatpush1.msra.mxu0 0.0
    %2509 = vmatprep.subr.mxu0 0.0
    %2510 = vmatpush1.msra.mxu0 0.0
    %2511 = vmatprep.subr.mxu0 0.0
    %2512 = vmatpush1.msra.mxu0 0.0
    %2513 = vmatprep.subr.mxu0 0.0
    %2514 = vmatpush1.msra.mxu0 0.0
    %2515 = vmatprep.subr.mxu0 0.0
    %2516 = vmatpush1.msra.mxu0 0.0
    %2517 = vmatprep.subr.mxu0 0.0
    %2518 = vmatpush1.msra.mxu0 0.0
    %2519 = vmatprep.subr.mxu0 0.0
    %2520 = vmatpush1.msra.mxu0 0.0
    %2521 = vmatprep.subr.mxu0 0.0
    %2522 = vmatpush1.msra.mxu0 0.0
    %2523 = vmatprep.subr.mxu0 0.0
    %2524 = vmatpush1.msra.mxu0 %v2486
    %2525 = vmatprep.subr.mxu0 0.0
    %2526 = vmatpush1.msra.mxu0 %v2484
    %2527 = vmatprep.subr.mxu0 0.0
    %2528 = vmatpush2.msra.mxu0 0.0
    %2529 = vmatprep.subr.mxu0 0.0
    %2530 = vmatpush2.msra.mxu0 0.0
    %2531 = vmatprep.subr.mxu0 0.0
    %2532 = vmatpush2.msra.mxu0 0.0
    %2533 = vmatprep.subr.mxu0 0.0
    %2534 = vmatpush2.msra.mxu0 0.0
    %2535 = vmatprep.subr.mxu0 0.0
    %2536 = vmatpush2.msra.mxu0 0.0
    %2537 = vmatprep.subr.mxu0 0.0
    %2538 = vmatpush2.msra.mxu0 0.0
    %2539 = vmatprep.subr.mxu0 0.0
    %2540 = vmatpush2.msra.mxu0 0.0
    %2541 = vmatprep.subr.mxu0 0.0
    %2542 = vmatpush2.msra.mxu0 0.0
    %2543 = vmatprep.subr.mxu0 0.0
    %2544 = vmatpush2.msra.mxu0 0.0
    %2545 = vmatprep.subr.mxu0 0.0
    %2546 = vmatpush2.msra.mxu0 0.0
    %2547 = vmatprep.subr.mxu0 0.0
    %2548 = vmatpush2.msra.mxu0 0.0
    %2549 = vmatprep.subr.mxu0 0.0
    %2550 = vmatpush2.msra.mxu0 0.0
    %2551 = vmatprep.subr.mxu0 0.0
    %2552 = vmatpush2.msra.mxu0 0.0
    %2553 = vmatprep.subr.mxu0 0.0
    %2554 = vmatpush2.msra.mxu0 0.0
    %2555 = vmatprep.subr.mxu0 0.0
    %2556 = vmatpush2.msra.mxu0 0.0
    %2557 = vmatprep.subr.mxu0 0.0
    %2558 = vmatpush2.msra.mxu0 0.0
    %2559 = vmatprep.mubr.f32.mxu0 0.0
    %2560 = vmatmul.mubr.f32.gmra.mxu0 %v2490
    %v2561 = vpop.f32.mrf.mxu0
    %v2562 = vadd.f32 0.0, %v2561
    %v2563 = vpop.f32.mrf.mxu0
    %2564 = vmatprep.mubr.f32.mxu0 0.0
    %2565 = vmatmul.mubr.f32.gmra.mxu0 %v2493
    %v2566 = vpop.f32.mrf.mxu0
    %v2567 = vadd.f32 0.0, %v2566
    %v2568 = vpop.f32.mrf.mxu0
    %2569 = vdwg.mxu0
    %2570 = vrot.lane.b32.xlu0 %v1928, 112
    %v2571 = vpop.permute.xlu0 %2570
    %2572 = vrot.lane.b32.xlu0 %v1933, 112
    %v2573 = vpop.permute.xlu0 %2572
    %2574 = vrot.lane.b32.xlu0 %v1928, 80
    %v2575 = vpop.permute.xlu0 %2574
    %2576 = vrot.lane.b32.xlu0 %v1933, 80
    %v2577 = vpop.permute.xlu0 %2576
    %v2578 = vsel %vm169, %v2571, 0
    %v2580 = vsel %vm169, %v2573, 0
    %v2582 = vsel %vm169, %v2575, 0
    %v2584 = vsel %vm169, %v2577, 0
    %2586 = vmatprep.subr.mxu0 0.0
    %2587 = vmatpush1.xpose.msra.mxu0 0.0
    %2588 = vmatprep.subr.mxu0 0.0
    %2589 = vmatpush1.xpose.msra.mxu0 0.0
    %2590 = vmatprep.subr.mxu0 0.0
    %2591 = vmatpush1.xpose.msra.mxu0 0.0
    %2592 = vmatprep.subr.mxu0 0.0
    %2593 = vmatpush1.xpose.msra.mxu0 0.0
    %2594 = vmatprep.subr.mxu0 0.0
    %2595 = vmatpush1.xpose.msra.mxu0 0.0
    %2596 = vmatprep.subr.mxu0 0.0
    %2597 = vmatpush1.xpose.msra.mxu0 0.0
    %2598 = vmatprep.subr.mxu0 0.0
    %2599 = vmatpush1.xpose.msra.mxu0 0.0
    %2600 = vmatprep.subr.mxu0 0.0
    %2601 = vmatpush1.xpose.msra.mxu0 0.0
    %2602 = vmatprep.subr.mxu0 0.0
    %2603 = vmatpush1.xpose.msra.mxu0 0.0
    %2604 = vmatprep.subr.mxu0 0.0
    %2605 = vmatpush1.xpose.msra.mxu0 0.0
    %2606 = vmatprep.subr.mxu0 0.0
    %2607 = vmatpush1.xpose.msra.mxu0 0.0
    %2608 = vmatprep.subr.mxu0 0.0
    %2609 = vmatpush1.xpose.msra.mxu0 0.0
    %2610 = vmatprep.subr.mxu0 0.0
    %2611 = vmatpush1.xpose.msra.mxu0 0.0
    %2612 = vmatprep.subr.mxu0 0.0
    %2613 = vmatpush1.xpose.msra.mxu0 0.0
    %2614 = vmatprep.subr.mxu0 0.0
    %2615 = vmatpush1.xpose.msra.mxu0 %v2584
    %2616 = vmatprep.subr.mxu0 0.0
    %2617 = vmatpush1.xpose.msra.mxu0 %v2582
    %2618 = vmatprep.subr.mxu0 0.0
    %2619 = vmatpush2.xpose.msra.mxu0 0.0
    %2620 = vmatprep.subr.mxu0 0.0
    %2621 = vmatpush2.xpose.msra.mxu0 0.0
    %2622 = vmatprep.subr.mxu0 0.0
    %2623 = vmatpush2.xpose.msra.mxu0 0.0
    %2624 = vmatprep.subr.mxu0 0.0
    %2625 = vmatpush2.xpose.msra.mxu0 0.0
    %2626 = vmatprep.subr.mxu0 0.0
    %2627 = vmatpush2.xpose.msra.mxu0 0.0
    %2628 = vmatprep.subr.mxu0 0.0
    %2629 = vmatpush2.xpose.msra.mxu0 0.0
    %2630 = vmatprep.subr.mxu0 0.0
    %2631 = vmatpush2.xpose.msra.mxu0 0.0
    %2632 = vmatprep.subr.mxu0 0.0
    %2633 = vmatpush2.xpose.msra.mxu0 0.0
    %2634 = vmatprep.subr.mxu0 0.0
    %2635 = vmatpush2.xpose.msra.mxu0 0.0
    %2636 = vmatprep.subr.mxu0 0.0
    %2637 = vmatpush2.xpose.msra.mxu0 0.0
    %2638 = vmatprep.subr.mxu0 0.0
    %2639 = vmatpush2.xpose.msra.mxu0 0.0
    %2640 = vmatprep.subr.mxu0 0.0
    %2641 = vmatpush2.xpose.msra.mxu0 0.0
    %2642 = vmatprep.subr.mxu0 0.0
    %2643 = vmatpush2.xpose.msra.mxu0 0.0
    %2644 = vmatprep.subr.mxu0 0.0
    %2645 = vmatpush2.xpose.msra.mxu0 0.0
    %2646 = vmatprep.subr.mxu0 0.0
    %2647 = vmatpush2.xpose.msra.mxu0 0.0
    %2648 = vmatprep.subr.mxu0 0.0
    %2649 = vmatpush2.xpose.msra.mxu0 0.0
    %2650 = vmatprep.mubr.f32.mxu0 0.0
    %2651 = vmatmul.mubr.f32.gmra.mxu0 %v2578
    %v2652 = vpop.f32.mrf.mxu0
    %v2653 = vadd.f32 %v2365, %v2652
    %v2654 = vpop.f32.mrf.mxu0
    %2655 = vmatprep.mubr.f32.mxu0 0.0
    %2656 = vmatmul.mubr.f32.gmra.mxu0 %v2580
    %v2657 = vpop.f32.mrf.mxu0
    %v2658 = vadd.f32 %v2365, %v2657
    %v2659 = vpop.f32.mrf.mxu0
    %2660 = vdwg.mxu0
    %v2661 = vsel %vm169, %v2653, -inf
    %2662 = vmax.xlane.f32.xlu0 %v2661
    %v2663 = vpop.xlane.xlu0 %2662
    %v2664 = vsel %vm169, %v2658, -inf
    %2665 = vmax.xlane.f32.xlu0 %v2664
    %v2666 = vpop.xlane.xlu0 %2665
    %v2667 = vsub.f32 %v2653, %v2663
    %v2668 = vsub.f32 %v2658, %v2666
    %v2669 = vmul.f32 %v2667, 1.442695
    %v2670 = vpow.pop %v2669
    %v2671 = vmul.f32 %v2668, 1.442695
    %v2672 = vpow.pop %v2671
    %v2673 = vsel %vm169, %v2670, 0.0
    %2674 = vadd.xlane.f32.xlu0 %v2673
    %v2675 = vpop.xlane.xlu0 %2674
    %v2676 = vsel %vm169, %v2672, 0.0
    %2677 = vadd.xlane.f32.xlu0 %v2676
    %v2678 = vpop.xlane.xlu0 %2677
    %v2679 = vrcp.pop %v2675
    %v2680 = vrcp.pop %v2678
    %v2681 = vmul.f32 %v2675, %v2679
    %v2682 = vmul.f32 %v2678, %v2680
    %v2683 = vsub.f32 2.0, %v2681
    %v2684 = vsub.f32 2.0, %v2682
    %v2685 = vmul.f32 %v2679, %v2683
    %v2686 = vmul.f32 %v2680, %v2684
    %v2687 = vmul.f32 %v2670, %v2685
    %v2688 = vmul.f32 %v2672, %v2686
    %2689 = vrot.lane.b32.xlu0 %v1928, 48
    %v2690 = vpop.permute.xlu0 %2689
    %2691 = vrot.lane.b32.xlu0 %v1933, 48
    %v2692 = vpop.permute.xlu0 %2691
    %v2696 = vsel %vm169, %v2687, 0
    %v2699 = vsel %vm169, %v2688, 0
    %2701 = vmatprep.subr.mxu0 0.0
    %2702 = vmatpush1.msra.mxu0 0.0
    %2703 = vmatprep.subr.mxu0 0.0
    %2704 = vmatpush1.msra.mxu0 0.0
    %2705 = vmatprep.subr.mxu0 0.0
    %2706 = vmatpush1.msra.mxu0 0.0
    %2707 = vmatprep.subr.mxu0 0.0
    %2708 = vmatpush1.msra.mxu0 0.0
    %2709 = vmatprep.subr.mxu0 0.0
    %2710 = vmatpush1.msra.mxu0 0.0
    %2711 = vmatprep.subr.mxu0 0.0
    %2712 = vmatpush1.msra.mxu0 0.0
    %2713 = vmatprep.subr.mxu0 0.0
    %2714 = vmatpush1.msra.mxu0 0.0
    %2715 = vmatprep.subr.mxu0 0.0
    %2716 = vmatpush1.msra.mxu0 0.0
    %2717 = vmatprep.subr.mxu0 0.0
    %2718 = vmatpush1.msra.mxu0 0.0
    %2719 = vmatprep.subr.mxu0 0.0
    %2720 = vmatpush1.msra.mxu0 0.0
    %2721 = vmatprep.subr.mxu0 0.0
    %2722 = vmatpush1.msra.mxu0 0.0
    %2723 = vmatprep.subr.mxu0 0.0
    %2724 = vmatpush1.msra.mxu0 0.0
    %2725 = vmatprep.subr.mxu0 0.0
    %2726 = vmatpush1.msra.mxu0 0.0
    %2727 = vmatprep.subr.mxu0 0.0
    %2728 = vmatpush1.msra.mxu0 0.0
    %2729 = vmatprep.subr.mxu0 0.0
    %2730 = vmatpush1.msra.mxu0 %v2692
    %2731 = vmatprep.subr.mxu0 0.0
    %2732 = vmatpush1.msra.mxu0 %v2690
    %2733 = vmatprep.subr.mxu0 0.0
    %2734 = vmatpush2.msra.mxu0 0.0
    %2735 = vmatprep.subr.mxu0 0.0
    %2736 = vmatpush2.msra.mxu0 0.0
    %2737 = vmatprep.subr.mxu0 0.0
    %2738 = vmatpush2.msra.mxu0 0.0
    %2739 = vmatprep.subr.mxu0 0.0
    %2740 = vmatpush2.msra.mxu0 0.0
    %2741 = vmatprep.subr.mxu0 0.0
    %2742 = vmatpush2.msra.mxu0 0.0
    %2743 = vmatprep.subr.mxu0 0.0
    %2744 = vmatpush2.msra.mxu0 0.0
    %2745 = vmatprep.subr.mxu0 0.0
    %2746 = vmatpush2.msra.mxu0 0.0
    %2747 = vmatprep.subr.mxu0 0.0
    %2748 = vmatpush2.msra.mxu0 0.0
    %2749 = vmatprep.subr.mxu0 0.0
    %2750 = vmatpush2.msra.mxu0 0.0
    %2751 = vmatprep.subr.mxu0 0.0
    %2752 = vmatpush2.msra.mxu0 0.0
    %2753 = vmatprep.subr.mxu0 0.0
    %2754 = vmatpush2.msra.mxu0 0.0
    %2755 = vmatprep.subr.mxu0 0.0
    %2756 = vmatpush2.msra.mxu0 0.0
    %2757 = vmatprep.subr.mxu0 0.0
    %2758 = vmatpush2.msra.mxu0 0.0
    %2759 = vmatprep.subr.mxu0 0.0
    %2760 = vmatpush2.msra.mxu0 0.0
    %2761 = vmatprep.subr.mxu0 0.0
    %2762 = vmatpush2.msra.mxu0 0.0
    %2763 = vmatprep.subr.mxu0 0.0
    %2764 = vmatpush2.msra.mxu0 0.0
    %2765 = vmatprep.mubr.f32.mxu0 0.0
    %2766 = vmatmul.mubr.f32.gmra.mxu0 %v2696
    %v2767 = vpop.f32.mrf.mxu0
    %v2768 = vadd.f32 0.0, %v2767
    %v2769 = vpop.f32.mrf.mxu0
    %2770 = vmatprep.mubr.f32.mxu0 0.0
    %2771 = vmatmul.mubr.f32.gmra.mxu0 %v2699
    %v2772 = vpop.f32.mrf.mxu0
    %v2773 = vadd.f32 0.0, %v2772
    %v2774 = vpop.f32.mrf.mxu0
    %2775 = vdwg.mxu0
    %2778 = vrot.lane.b32.xlu0 %v2768, 16
    %v2779 = vpop.permute.xlu0 %2778
    %2780 = vrot.lane.b32.xlu0 %v2773, 16
    %v2781 = vpop.permute.xlu0 %2780
    %v2784 = vsel %vm169, %v2562, %v2779
    %v2785 = vsel %vm169, %v2567, %v2781
    %s2786 = scalar_lea.vmem %s5, 32
    %v2787 = vld [vmem:[%s2786] sm:$0xff]
    %v2788 = vld [vmem:[%s2786 + $0x8] sm:$0xff]
    %v2789 = vld [vmem:[%s2786 + $0x10] sm:$0xff]
    %v2790 = vld [vmem:[%s2786 + $0x18] sm:$0xff]
    %v2791 = vld [vmem:[%s8 + $0x6] sm:$0x1]
    %v2792 = vlaneseq
    %v2793 = vshrl.u32 %v2792, 7
    %v2794 = vsub.s32 0, %v2793
    %v2795 = vrot.slane %v2791, %v2794
    %v2797 = vsel %vm60, %v2359, 0
    %v2800 = vsel %vm60, %v2360, 0
    %v2803 = vsel %vm60, %v2784, 0
    %v2806 = vsel %vm60, %v2785, 0
    %2808 = vmatprep.subr.mxu0 0.0
    %2809 = vmatpush1.msra.mxu0 0.0
    %2810 = vmatprep.subr.mxu0 0.0
    %2811 = vmatpush1.msra.mxu0 0.0
    %2812 = vmatprep.subr.mxu0 0.0
    %2813 = vmatpush1.msra.mxu0 0.0
    %2814 = vmatprep.subr.mxu0 0.0
    %2815 = vmatpush1.msra.mxu0 0.0
    %2816 = vmatprep.subr.mxu0 0.0
    %2817 = vmatpush1.msra.mxu0 0.0
    %2818 = vmatprep.subr.mxu0 0.0
    %2819 = vmatpush1.msra.mxu0 0.0
    %2820 = vmatprep.subr.mxu0 0.0
    %2821 = vmatpush1.msra.mxu0 0.0
    %2822 = vmatprep.subr.mxu0 0.0
    %2823 = vmatpush1.msra.mxu0 0.0
    %2824 = vmatprep.subr.mxu0 0.0
    %2825 = vmatpush1.msra.mxu0 0.0
    %2826 = vmatprep.subr.mxu0 0.0
    %2827 = vmatpush1.msra.mxu0 0.0
    %2828 = vmatprep.subr.mxu0 0.0
    %2829 = vmatpush1.msra.mxu0 0.0
    %2830 = vmatprep.subr.mxu0 0.0
    %2831 = vmatpush1.msra.mxu0 0.0
    %2832 = vmatprep.subr.mxu0 0.0
    %2833 = vmatpush1.msra.mxu0 %v2790
    %2834 = vmatprep.subr.mxu0 0.0
    %2835 = vmatpush1.msra.mxu0 %v2789
    %2836 = vmatprep.subr.mxu0 0.0
    %2837 = vmatpush1.msra.mxu0 %v2788
    %2838 = vmatprep.subr.mxu0 0.0
    %2839 = vmatpush1.msra.mxu0 %v2787
    %2840 = vmatprep.subr.mxu0 0.0
    %2841 = vmatpush2.msra.mxu0 0.0
    %2842 = vmatprep.subr.mxu0 0.0
    %2843 = vmatpush2.msra.mxu0 0.0
    %2844 = vmatprep.subr.mxu0 0.0
    %2845 = vmatpush2.msra.mxu0 0.0
    %2846 = vmatprep.subr.mxu0 0.0
    %2847 = vmatpush2.msra.mxu0 0.0
    %2848 = vmatprep.subr.mxu0 0.0
    %2849 = vmatpush2.msra.mxu0 0.0
    %2850 = vmatprep.subr.mxu0 0.0
    %2851 = vmatpush2.msra.mxu0 0.0
    %2852 = vmatprep.subr.mxu0 0.0
    %2853 = vmatpush2.msra.mxu0 0.0
    %2854 = vmatprep.subr.mxu0 0.0
    %2855 = vmatpush2.msra.mxu0 0.0
    %2856 = vmatprep.subr.mxu0 0.0
    %2857 = vmatpush2.msra.mxu0 0.0
    %2858 = vmatprep.subr.mxu0 0.0
    %2859 = vmatpush2.msra.mxu0 0.0
    %2860 = vmatprep.subr.mxu0 0.0
    %2861 = vmatpush2.msra.mxu0 0.0
    %2862 = vmatprep.subr.mxu0 0.0
    %2863 = vmatpush2.msra.mxu0 0.0
    %2864 = vmatprep.subr.mxu0 0.0
    %2865 = vmatpush2.msra.mxu0 0.0
    %2866 = vmatprep.subr.mxu0 0.0
    %2867 = vmatpush2.msra.mxu0 0.0
    %2868 = vmatprep.subr.mxu0 0.0
    %2869 = vmatpush2.msra.mxu0 0.0
    %2870 = vmatprep.subr.mxu0 0.0
    %2871 = vmatpush2.msra.mxu0 0.0
    %2872 = vmatprep.mubr.f32.mxu0 0.0
    %2873 = vmatmul.mubr.f32.gmra.mxu0 %v2797
    %v2874 = vpop.f32.mrf.mxu0
    %v2875 = vadd.f32 %v2795, %v2874
    %v2876 = vpop.f32.mrf.mxu0
    %2877 = vmatprep.mubr.f32.mxu0 0.0
    %2878 = vmatmul.mubr.f32.gmra.mxu0 %v2800
    %v2879 = vpop.f32.mrf.mxu0
    %v2880 = vadd.f32 %v2795, %v2879
    %v2881 = vpop.f32.mrf.mxu0
    %2882 = vmatprep.mubr.f32.mxu0 0.0
    %2883 = vmatmul.mubr.f32.gmra.mxu0 %v2803
    %v2884 = vpop.f32.mrf.mxu0
    %v2885 = vadd.f32 %v2795, %v2884
    %v2886 = vpop.f32.mrf.mxu0
    %2887 = vmatprep.mubr.f32.mxu0 0.0
    %2888 = vmatmul.mubr.f32.gmra.mxu0 %v2806
    %v2889 = vpop.f32.mrf.mxu0
    %v2890 = vadd.f32 %v2795, %v2889
    %v2891 = vpop.f32.mrf.mxu0
    %2892 = vdwg.mxu0
    %v2893 = vadd.f32 %v2875, %v1825
    %v2894 = vadd.f32 %v2880, %v1826
    %v2895 = vadd.f32 %v2885, %v1827
    %v2896 = vadd.f32 %v2890, %v1828
    %v2897 = vld [vmem:[%s8 + $0x7] sm:$0x1]
    %v2898 = vld [vmem:[%s8 + $0x8] sm:$0x1]
    %v2899 = vsel %vm60, %v2893, 0.0
    %2900 = vadd.xlane.f32.xlu0 %v2899
    %v2901 = vpop.xlane.xlu0 %2900
    %v2902 = vsel %vm60, %v2894, 0.0
    %2903 = vadd.xlane.f32.xlu0 %v2902
    %v2904 = vpop.xlane.xlu0 %2903
    %v2905 = vsel %vm60, %v2895, 0.0
    %2906 = vadd.xlane.f32.xlu0 %v2905
    %v2907 = vpop.xlane.xlu0 %2906
    %v2908 = vsel %vm60, %v2896, 0.0
    %2909 = vadd.xlane.f32.xlu0 %v2908
    %v2910 = vpop.xlane.xlu0 %2909
    %v2911 = vmul.f32 %v2901, %v1133
    %v2912 = vmul.f32 %v2904, %v1133
    %v2913 = vmul.f32 %v2907, %v1133
    %v2914 = vmul.f32 %v2910, %v1133
    %v2915 = vsub.f32 %v2893, %v2911
    %v2916 = vsub.f32 %v2894, %v2912
    %v2917 = vsub.f32 %v2895, %v2913
    %v2918 = vsub.f32 %v2896, %v2914
    %v2919 = vmul.f32 %v2915, %v2915
    %v2920 = vmul.f32 %v2916, %v2916
    %v2921 = vmul.f32 %v2917, %v2917
    %v2922 = vmul.f32 %v2918, %v2918
    %v2923 = vsel %vm60, %v2919, 0.0
    %2924 = vadd.xlane.f32.xlu0 %v2923
    %v2925 = vpop.xlane.xlu0 %2924
    %v2926 = vsel %vm60, %v2920, 0.0
    %2927 = vadd.xlane.f32.xlu0 %v2926
    %v2928 = vpop.xlane.xlu0 %2927
    %v2929 = vsel %vm60, %v2921, 0.0
    %2930 = vadd.xlane.f32.xlu0 %v2929
    %v2931 = vpop.xlane.xlu0 %2930
    %v2932 = vsel %vm60, %v2922, 0.0
    %2933 = vadd.xlane.f32.xlu0 %v2932
    %v2934 = vpop.xlane.xlu0 %2933
    %v2935 = vmul.f32 %v2925, %v1133
    %v2936 = vmul.f32 %v2928, %v1133
    %v2937 = vmul.f32 %v2931, %v1133
    %v2938 = vmul.f32 %v2934, %v1133
    %v2939 = vadd.f32 %v2935, 1e-05
    %v2940 = vadd.f32 %v2936, 1e-05
    %v2941 = vadd.f32 %v2937, 1e-05
    %v2942 = vadd.f32 %v2938, 1e-05
    %v2943 = vrsqrt.pop %v2939
    %v2944 = vrsqrt.pop %v2940
    %v2945 = vrsqrt.pop %v2941
    %v2946 = vrsqrt.pop %v2942
    %v2947 = vmul.f32 %v2915, %v2943
    %v2948 = vmul.f32 %v2916, %v2944
    %v2949 = vmul.f32 %v2917, %v2945
    %v2950 = vmul.f32 %v2918, %v2946
    %v2951 = vlaneseq
    %v2952 = vshrl.u32 %v2951, 7
    %v2953 = vsub.s32 0, %v2952
    %v2954 = vrot.slane %v2897, %v2953
    %v2955 = vmul.f32 %v2947, %v2954
    %v2956 = vmul.f32 %v2948, %v2954
    %v2957 = vmul.f32 %v2949, %v2954
    %v2958 = vmul.f32 %v2950, %v2954
    %v2959 = vlaneseq
    %v2960 = vshrl.u32 %v2959, 7
    %v2961 = vsub.s32 0, %v2960
    %v2962 = vrot.slane %v2898, %v2961
    %v2963 = vadd.f32 %v2955, %v2962
    %v2964 = vadd.f32 %v2956, %v2962
    %v2965 = vadd.f32 %v2957, %v2962
    %v2966 = vadd.f32 %v2958, %v2962
    %2967 = vst.msk [vmem:[#allocation2 + $0x1] sm:$0xff] %vm60, %v2963
    %2968 = vst.msk [vmem:[#allocation2 + $0x9] sm:$0xff] %vm60, %v2964
    %2969 = vst.msk [vmem:[#allocation2 + $0x11] sm:$0xff] %vm60, %v2965
    %2970 = vst.msk [vmem:[#allocation2 + $0x19] sm:$0xff] %vm60, %v2966
    %v2971 = vld [vmem:[#allocation2] sm:$0xff]
    %v2972 = vld [vmem:[#allocation2 + $0x8] sm:$0xff]
    %v2973 = vld [vmem:[#allocation2 + $0x10] sm:$0xff]
    %v2974 = vld [vmem:[#allocation2 + $0x18] sm:$0xff]
    %v2975 = vmul.f32 %v2971, %v1201
    %v2976 = vmul.f32 %v2972, %v1206
    %v2977 = vmul.f32 %v2973, %v1211
    %v2978 = vmul.f32 %v2974, %v1216
    %v2979 = vld [vmem:[#allocation2 + $0x2] sm:$0xff]
    %v2980 = vld [vmem:[#allocation2 + $0xa] sm:$0xff]
    %v2981 = vld [vmem:[#allocation2 + $0x12] sm:$0xff]
    %v2982 = vld [vmem:[#allocation2 + $0x1a] sm:$0xff]
    %v2983 = vmul.f32 %v2979, %v1228
    %v2984 = vmul.f32 %v2980, %v1232
    %v2985 = vmul.f32 %v2981, %v1236
    %v2986 = vmul.f32 %v2982, %v1240
    %2991 = vrot.lane.b32.xlu0 %v2963, 32
    %v2992 = vpop.permute.xlu0 %2991
    %2993 = vrot.lane.b32.xlu0 %v2964, 32
    %v2994 = vpop.permute.xlu0 %2993
    %2995 = vrot.lane.b32.xlu0 %v2965, 32
    %v2996 = vpop.permute.xlu0 %2995
    %2997 = vrot.lane.b32.xlu0 %v2966, 32
    %v2998 = vpop.permute.xlu0 %2997
    %3007 = vrot.lane.b32.xlu0 %v2983, 64
    %v3008 = vpop.permute.xlu0 %3007
    %3009 = vrot.lane.b32.xlu0 %v2984, 64
    %v3010 = vpop.permute.xlu0 %3009
    %3011 = vrot.lane.b32.xlu0 %v2985, 64
    %v3012 = vpop.permute.xlu0 %3011
    %3013 = vrot.lane.b32.xlu0 %v2986, 64
    %v3014 = vpop.permute.xlu0 %3013
    %v3019 = vsel %vm60, %v2975, %v2992
    %v3020 = vsel %vm60, %v2976, %v2994
    %v3021 = vsel %vm60, %v2977, %v2996
    %v3022 = vsel %vm60, %v2978, %v2998
    %v3023 = vsel %vm44, %v3019, %v3008
    %v3024 = vsel %vm44, %v3020, %v3010
    %v3025 = vsel %vm44, %v3021, %v3012
    %v3026 = vsel %vm44, %v3022, %v3014
    %s3027 = scalar_lea.vmem %s6, 96
    %v3028 = vld [vmem:[%s3027] sm:$0xff]
    %v3029 = vld [vmem:[%s3027 + $0x8] sm:$0xff]
    %v3030 = vld [vmem:[%s3027 + $0x10] sm:$0xff]
    %v3031 = vld [vmem:[%s3027 + $0x18] sm:$0xff]
    %v3032 = vld [vmem:[%s3027 + $0x20] sm:$0xff]
    %v3033 = vld [vmem:[%s3027 + $0x28] sm:$0xff]
    %v3034 = vld [vmem:[%s3027 + $0x30] sm:$0xff]
    %v3035 = vld [vmem:[%s3027 + $0x38] sm:$0xff]
    %v3036 = vld [vmem:[%s3027 + $0x40] sm:$0xff]
    %v3037 = vld [vmem:[%s3027 + $0x48] sm:$0xff]
    %v3038 = vld [vmem:[%s3027 + $0x50] sm:$0xff]
    %v3039 = vld [vmem:[%s3027 + $0x58] sm:$0xff]
    %v3040 = vld [vmem:[%s9 + $0x1] sm:$0x1]
    %v3041 = vlaneseq
    %v3042 = vshrl.u32 %v3041, 7
    %v3043 = vsub.s32 0, %v3042
    %v3044 = vrot.slane %v3040, %v3043
    %v3046 = vsel %vm1303, %v3023, 0
    %v3049 = vsel %vm1303, %v3024, 0
    %v3052 = vsel %vm1303, %v3025, 0
    %v3055 = vsel %vm1303, %v3026, 0
    %3057 = vmatprep.subr.mxu0 0.0
    %3058 = vmatpush1.msra.mxu0 0.0
    %3059 = vmatprep.subr.mxu0 0.0
    %3060 = vmatpush1.msra.mxu0 0.0
    %3061 = vmatprep.subr.mxu0 0.0
    %3062 = vmatpush1.msra.mxu0 0.0
    %3063 = vmatprep.subr.mxu0 0.0
    %3064 = vmatpush1.msra.mxu0 0.0
    %3065 = vmatprep.subr.mxu0 0.0
    %3066 = vmatpush1.msra.mxu0 %v3039
    %3067 = vmatprep.subr.mxu0 0.0
    %3068 = vmatpush1.msra.mxu0 %v3038
    %3069 = vmatprep.subr.mxu0 0.0
    %3070 = vmatpush1.msra.mxu0 %v3037
    %3071 = vmatprep.subr.mxu0 0.0
    %3072 = vmatpush1.msra.mxu0 %v3036
    %3073 = vmatprep.subr.mxu0 0.0
    %3074 = vmatpush1.msra.mxu0 %v3035
    %3075 = vmatprep.subr.mxu0 0.0
    %3076 = vmatpush1.msra.mxu0 %v3034
    %3077 = vmatprep.subr.mxu0 0.0
    %3078 = vmatpush1.msra.mxu0 %v3033
    %3079 = vmatprep.subr.mxu0 0.0
    %3080 = vmatpush1.msra.mxu0 %v3032
    %3081 = vmatprep.subr.mxu0 0.0
    %3082 = vmatpush1.msra.mxu0 %v3031
    %3083 = vmatprep.subr.mxu0 0.0
    %3084 = vmatpush1.msra.mxu0 %v3030
    %3085 = vmatprep.subr.mxu0 0.0
    %3086 = vmatpush1.msra.mxu0 %v3029
    %3087 = vmatprep.subr.mxu0 0.0
    %3088 = vmatpush1.msra.mxu0 %v3028
    %3089 = vmatprep.subr.mxu0 0.0
    %3090 = vmatpush2.msra.mxu0 0.0
    %3091 = vmatprep.subr.mxu0 0.0
    %3092 = vmatpush2.msra.mxu0 0.0
    %3093 = vmatprep.subr.mxu0 0.0
    %3094 = vmatpush2.msra.mxu0 0.0
    %3095 = vmatprep.subr.mxu0 0.0
    %3096 = vmatpush2.msra.mxu0 0.0
    %3097 = vmatprep.subr.mxu0 0.0
    %3098 = vmatpush2.msra.mxu0 0.0
    %3099 = vmatprep.subr.mxu0 0.0
    %3100 = vmatpush2.msra.mxu0 0.0
    %3101 = vmatprep.subr.mxu0 0.0
    %3102 = vmatpush2.msra.mxu0 0.0
    %3103 = vmatprep.subr.mxu0 0.0
    %3104 = vmatpush2.msra.mxu0 0.0
    %3105 = vmatprep.subr.mxu0 0.0
    %3106 = vmatpush2.msra.mxu0 0.0
    %3107 = vmatprep.subr.mxu0 0.0
    %3108 = vmatpush2.msra.mxu0 0.0
    %3109 = vmatprep.subr.mxu0 0.0
    %3110 = vmatpush2.msra.mxu0 0.0
    %3111 = vmatprep.subr.mxu0 0.0
    %3112 = vmatpush2.msra.mxu0 0.0
    %3113 = vmatprep.subr.mxu0 0.0
    %3114 = vmatpush2.msra.mxu0 0.0
    %3115 = vmatprep.subr.mxu0 0.0
    %3116 = vmatpush2.msra.mxu0 0.0
    %3117 = vmatprep.subr.mxu0 0.0
    %3118 = vmatpush2.msra.mxu0 0.0
    %3119 = vmatprep.subr.mxu0 0.0
    %3120 = vmatpush2.msra.mxu0 0.0
    %3121 = vmatprep.mubr.f32.mxu0 0.0
    %3122 = vmatmul.mubr.f32.gmra.mxu0 %v3046
    %v3123 = vpop.f32.mrf.mxu0
    %v3124 = vadd.f32 %v3044, %v3123
    %v3125 = vpop.f32.mrf.mxu0
    %3126 = vmatprep.mubr.f32.mxu0 0.0
    %3127 = vmatmul.mubr.f32.gmra.mxu0 %v3049
    %v3128 = vpop.f32.mrf.mxu0
    %v3129 = vadd.f32 %v3044, %v3128
    %v3130 = vpop.f32.mrf.mxu0
    %3131 = vmatprep.mubr.f32.mxu0 0.0
    %3132 = vmatmul.mubr.f32.gmra.mxu0 %v3052
    %v3133 = vpop.f32.mrf.mxu0
    %v3134 = vadd.f32 %v3044, %v3133
    %v3135 = vpop.f32.mrf.mxu0
    %3136 = vmatprep.mubr.f32.mxu0 0.0
    %3137 = vmatmul.mubr.f32.gmra.mxu0 %v3055
    %v3138 = vpop.f32.mrf.mxu0
    %v3139 = vadd.f32 %v3044, %v3138
    %v3140 = vpop.f32.mrf.mxu0
    %3141 = vdwg.mxu0
    %v3142 = vmax.f32 %v3124, 0.0
    %v3143 = vmax.f32 %v3129, 0.0
    %v3144 = vmax.f32 %v3134, 0.0
    %v3145 = vmax.f32 %v3139, 0.0
    %3146 = vst.msk [vmem:[#allocation2 + $0x1] sm:$0xff] %vm44, %v3142
    %3147 = vst.msk [vmem:[#allocation2 + $0x9] sm:$0xff] %vm44, %v3143
    %3148 = vst.msk [vmem:[#allocation2 + $0x11] sm:$0xff] %vm44, %v3144
    %3149 = vst.msk [vmem:[#allocation2 + $0x19] sm:$0xff] %vm44, %v3145
    %v3150 = vld [vmem:[#allocation2] sm:$0xff]
    %v3151 = vld [vmem:[#allocation2 + $0x8] sm:$0xff]
    %v3152 = vld [vmem:[#allocation2 + $0x10] sm:$0xff]
    %v3153 = vld [vmem:[#allocation2 + $0x18] sm:$0xff]
    %v3154 = vmul.f32 %v3150, %v1201
    %v3155 = vmul.f32 %v3151, %v1206
    %v3156 = vmul.f32 %v3152, %v1211
    %v3157 = vmul.f32 %v3153, %v1216
    %v3158 = vld [vmem:[#allocation2 + $0x2] sm:$0xff]
    %v3159 = vld [vmem:[#allocation2 + $0xa] sm:$0xff]
    %v3160 = vld [vmem:[#allocation2 + $0x12] sm:$0xff]
    %v3161 = vld [vmem:[#allocation2 + $0x1a] sm:$0xff]
    %v3162 = vmul.f32 %v3158, %v1228
    %v3163 = vmul.f32 %v3159, %v1232
    %v3164 = vmul.f32 %v3160, %v1236
    %v3165 = vmul.f32 %v3161, %v1240
    %s3166 = scalar_lea.vmem %s7, 192
    %v3167 = vld [vmem:[%s3166] sm:$0xff]
    %v3168 = vld [vmem:[%s3166 + $0x8] sm:$0xff]
    %v3169 = vld [vmem:[%s3166 + $0x10] sm:$0xff]
    %v3170 = vld [vmem:[%s3166 + $0x18] sm:$0xff]
    %v3171 = vld [vmem:[%s3166 + $0x20] sm:$0xff]
    %v3172 = vld [vmem:[%s3166 + $0x28] sm:$0xff]
    %v3173 = vld [vmem:[%s3166 + $0x30] sm:$0xff]
    %v3174 = vld [vmem:[%s3166 + $0x38] sm:$0xff]
    %s3175 = scalar_lea.vmem %s7, 256
    %v3176 = vld [vmem:[%s3175] sm:$0xff]
    %v3177 = vld [vmem:[%s3175 + $0x8] sm:$0xff]
    %v3178 = vld [vmem:[%s3175 + $0x10] sm:$0xff]
    %v3179 = vld [vmem:[%s3175 + $0x18] sm:$0xff]
    %v3180 = vld [vmem:[%s3175 + $0x20] sm:$0xff]
    %v3181 = vld [vmem:[%s3175 + $0x28] sm:$0xff]
    %v3182 = vld [vmem:[%s3175 + $0x30] sm:$0xff]
    %v3183 = vld [vmem:[%s3175 + $0x38] sm:$0xff]
    %v3185 = vsel %vm44, %v3142, 0
    %v3188 = vsel %vm44, %v3143, 0
    %v3191 = vsel %vm44, %v3144, 0
    %v3194 = vsel %vm44, %v3145, 0
    %3196 = vmatprep.subr.mxu0 0.0
    %3197 = vmatpush1.msra.mxu0 0.0
    %3198 = vmatprep.subr.mxu0 0.0
    %3199 = vmatpush1.msra.mxu0 0.0
    %3200 = vmatprep.subr.mxu0 0.0
    %3201 = vmatpush1.msra.mxu0 0.0
    %3202 = vmatprep.subr.mxu0 0.0
    %3203 = vmatpush1.msra.mxu0 0.0
    %3204 = vmatprep.subr.mxu0 0.0
    %3205 = vmatpush1.msra.mxu0 0.0
    %3206 = vmatprep.subr.mxu0 0.0
    %3207 = vmatpush1.msra.mxu0 0.0
    %3208 = vmatprep.subr.mxu0 0.0
    %3209 = vmatpush1.msra.mxu0 0.0
    %3210 = vmatprep.subr.mxu0 0.0
    %3211 = vmatpush1.msra.mxu0 0.0
    %3212 = vmatprep.subr.mxu0 0.0
    %3213 = vmatpush1.msra.mxu0 %v3183
    %3214 = vmatprep.subr.mxu0 0.0
    %3215 = vmatpush1.msra.mxu0 %v3182
    %3216 = vmatprep.subr.mxu0 0.0
    %3217 = vmatpush1.msra.mxu0 %v3181
    %3218 = vmatprep.subr.mxu0 0.0
    %3219 = vmatpush1.msra.mxu0 %v3180
    %3220 = vmatprep.subr.mxu0 0.0
    %3221 = vmatpush1.msra.mxu0 %v3179
    %3222 = vmatprep.subr.mxu0 0.0
    %3223 = vmatpush1.msra.mxu0 %v3178
    %3224 = vmatprep.subr.mxu0 0.0
    %3225 = vmatpush1.msra.mxu0 %v3177
    %3226 = vmatprep.subr.mxu0 0.0
    %3227 = vmatpush1.msra.mxu0 %v3176
    %3228 = vmatprep.subr.mxu0 0.0
    %3229 = vmatpush2.msra.mxu0 0.0
    %3230 = vmatprep.subr.mxu0 0.0
    %3231 = vmatpush2.msra.mxu0 0.0
    %3232 = vmatprep.subr.mxu0 0.0
    %3233 = vmatpush2.msra.mxu0 0.0
    %3234 = vmatprep.subr.mxu0 0.0
    %3235 = vmatpush2.msra.mxu0 0.0
    %3236 = vmatprep.subr.mxu0 0.0
    %3237 = vmatpush2.msra.mxu0 0.0
    %3238 = vmatprep.subr.mxu0 0.0
    %3239 = vmatpush2.msra.mxu0 0.0
    %3240 = vmatprep.subr.mxu0 0.0
    %3241 = vmatpush2.msra.mxu0 0.0
    %3242 = vmatprep.subr.mxu0 0.0
    %3243 = vmatpush2.msra.mxu0 0.0
    %3244 = vmatprep.subr.mxu0 0.0
    %3245 = vmatpush2.msra.mxu0 0.0
    %3246 = vmatprep.subr.mxu0 0.0
    %3247 = vmatpush2.msra.mxu0 0.0
    %3248 = vmatprep.subr.mxu0 0.0
    %3249 = vmatpush2.msra.mxu0 0.0
    %3250 = vmatprep.subr.mxu0 0.0
    %3251 = vmatpush2.msra.mxu0 0.0
    %3252 = vmatprep.subr.mxu0 0.0
    %3253 = vmatpush2.msra.mxu0 0.0
    %3254 = vmatprep.subr.mxu0 0.0
    %3255 = vmatpush2.msra.mxu0 0.0
    %3256 = vmatprep.subr.mxu0 0.0
    %3257 = vmatpush2.msra.mxu0 0.0
    %3258 = vmatprep.subr.mxu0 0.0
    %3259 = vmatpush2.msra.mxu0 0.0
    %3260 = vmatprep.mubr.f32.mxu0 0.0
    %3261 = vmatmul.mubr.f32.gmra.mxu0 %v3185
    %v3262 = vpop.f32.mrf.mxu0
    %v3263 = vadd.f32 0.0, %v3262
    %v3264 = vpop.f32.mrf.mxu0
    %3265 = vmatprep.mubr.f32.mxu0 0.0
    %3266 = vmatmul.mubr.f32.gmra.mxu0 %v3188
    %v3267 = vpop.f32.mrf.mxu0
    %v3268 = vadd.f32 0.0, %v3267
    %v3269 = vpop.f32.mrf.mxu0
    %3270 = vmatprep.mubr.f32.mxu0 0.0
    %3271 = vmatmul.mubr.f32.gmra.mxu0 %v3191
    %v3272 = vpop.f32.mrf.mxu0
    %v3273 = vadd.f32 0.0, %v3272
    %v3274 = vpop.f32.mrf.mxu0
    %3275 = vmatprep.mubr.f32.mxu0 0.0
    %3276 = vmatmul.mubr.f32.gmra.mxu0 %v3194
    %v3277 = vpop.f32.mrf.mxu0
    %v3278 = vadd.f32 0.0, %v3277
    %v3279 = vpop.f32.mrf.mxu0
    %3280 = vdwg.mxu0
    %v3282 = vsel %vm44, %v3154, 0
    %v3285 = vsel %vm44, %v3155, 0
    %v3288 = vsel %vm44, %v3156, 0
    %v3291 = vsel %vm44, %v3157, 0
    %3293 = vmatprep.subr.mxu0 0.0
    %3294 = vmatpush1.msra.mxu0 0.0
    %3295 = vmatprep.subr.mxu0 0.0
    %3296 = vmatpush1.msra.mxu0 0.0
    %3297 = vmatprep.subr.mxu0 0.0
    %3298 = vmatpush1.msra.mxu0 0.0
    %3299 = vmatprep.subr.mxu0 0.0
    %3300 = vmatpush1.msra.mxu0 0.0
    %3301 = vmatprep.subr.mxu0 0.0
    %3302 = vmatpush1.msra.mxu0 0.0
    %3303 = vmatprep.subr.mxu0 0.0
    %3304 = vmatpush1.msra.mxu0 0.0
    %3305 = vmatprep.subr.mxu0 0.0
    %3306 = vmatpush1.msra.mxu0 0.0
    %3307 = vmatprep.subr.mxu0 0.0
    %3308 = vmatpush1.msra.mxu0 0.0
    %3309 = vmatprep.subr.mxu0 0.0
    %3310 = vmatpush1.msra.mxu0 %v3174
    %3311 = vmatprep.subr.mxu0 0.0
    %3312 = vmatpush1.msra.mxu0 %v3173
    %3313 = vmatprep.subr.mxu0 0.0
    %3314 = vmatpush1.msra.mxu0 %v3172
    %3315 = vmatprep.subr.mxu0 0.0
    %3316 = vmatpush1.msra.mxu0 %v3171
    %3317 = vmatprep.subr.mxu0 0.0
    %3318 = vmatpush1.msra.mxu0 %v3170
    %3319 = vmatprep.subr.mxu0 0.0
    %3320 = vmatpush1.msra.mxu0 %v3169
    %3321 = vmatprep.subr.mxu0 0.0
    %3322 = vmatpush1.msra.mxu0 %v3168
    %3323 = vmatprep.subr.mxu0 0.0
    %3324 = vmatpush1.msra.mxu0 %v3167
    %3325 = vmatprep.subr.mxu0 0.0
    %3326 = vmatpush2.msra.mxu0 0.0
    %3327 = vmatprep.subr.mxu0 0.0
    %3328 = vmatpush2.msra.mxu0 0.0
    %3329 = vmatprep.subr.mxu0 0.0
    %3330 = vmatpush2.msra.mxu0 0.0
    %3331 = vmatprep.subr.mxu0 0.0
    %3332 = vmatpush2.msra.mxu0 0.0
    %3333 = vmatprep.subr.mxu0 0.0
    %3334 = vmatpush2.msra.mxu0 0.0
    %3335 = vmatprep.subr.mxu0 0.0
    %3336 = vmatpush2.msra.mxu0 0.0
    %3337 = vmatprep.subr.mxu0 0.0
    %3338 = vmatpush2.msra.mxu0 0.0
    %3339 = vmatprep.subr.mxu0 0.0
    %3340 = vmatpush2.msra.mxu0 0.0
    %3341 = vmatprep.subr.mxu0 0.0
    %3342 = vmatpush2.msra.mxu0 0.0
    %3343 = vmatprep.subr.mxu0 0.0
    %3344 = vmatpush2.msra.mxu0 0.0
    %3345 = vmatprep.subr.mxu0 0.0
    %3346 = vmatpush2.msra.mxu0 0.0
    %3347 = vmatprep.subr.mxu0 0.0
    %3348 = vmatpush2.msra.mxu0 0.0
    %3349 = vmatprep.subr.mxu0 0.0
    %3350 = vmatpush2.msra.mxu0 0.0
    %3351 = vmatprep.subr.mxu0 0.0
    %3352 = vmatpush2.msra.mxu0 0.0
    %3353 = vmatprep.subr.mxu0 0.0
    %3354 = vmatpush2.msra.mxu0 0.0
    %3355 = vmatprep.subr.mxu0 0.0
    %3356 = vmatpush2.msra.mxu0 0.0
    %3357 = vmatprep.mubr.f32.mxu0 0.0
    %3358 = vmatmul.mubr.f32.gmra.mxu0 %v3282
    %v3359 = vpop.f32.mrf.mxu0
    %v3360 = vadd.f32 %v3263, %v3359
    %v3361 = vpop.f32.mrf.mxu0
    %3362 = vmatprep.mubr.f32.mxu0 0.0
    %3363 = vmatmul.mubr.f32.gmra.mxu0 %v3285
    %v3364 = vpop.f32.mrf.mxu0
    %v3365 = vadd.f32 %v3268, %v3364
    %v3366 = vpop.f32.mrf.mxu0
    %3367 = vmatprep.mubr.f32.mxu0 0.0
    %3368 = vmatmul.mubr.f32.gmra.mxu0 %v3288
    %v3369 = vpop.f32.mrf.mxu0
    %v3370 = vadd.f32 %v3273, %v3369
    %v3371 = vpop.f32.mrf.mxu0
    %3372 = vmatprep.mubr.f32.mxu0 0.0
    %3373 = vmatmul.mubr.f32.gmra.mxu0 %v3291
    %v3374 = vpop.f32.mrf.mxu0
    %v3375 = vadd.f32 %v3278, %v3374
    %v3376 = vpop.f32.mrf.mxu0
    %3377 = vdwg.mxu0
    %s3378 = scalar_lea.vmem %s7, 320
    %v3379 = vld [vmem:[%s3378] sm:$0xff]
    %v3380 = vld [vmem:[%s3378 + $0x8] sm:$0xff]
    %v3381 = vld [vmem:[%s3378 + $0x10] sm:$0xff]
    %v3382 = vld [vmem:[%s3378 + $0x18] sm:$0xff]
    %v3383 = vld [vmem:[%s3378 + $0x20] sm:$0xff]
    %v3384 = vld [vmem:[%s3378 + $0x28] sm:$0xff]
    %v3385 = vld [vmem:[%s3378 + $0x30] sm:$0xff]
    %v3386 = vld [vmem:[%s3378 + $0x38] sm:$0xff]
    %v3388 = vsel %vm44, %v3162, 0
    %v3391 = vsel %vm44, %v3163, 0
    %v3394 = vsel %vm44, %v3164, 0
    %v3397 = vsel %vm44, %v3165, 0
    %3399 = vmatprep.subr.mxu0 0.0
    %3400 = vmatpush1.msra.mxu0 0.0
    %3401 = vmatprep.subr.mxu0 0.0
    %3402 = vmatpush1.msra.mxu0 0.0
    %3403 = vmatprep.subr.mxu0 0.0
    %3404 = vmatpush1.msra.mxu0 0.0
    %3405 = vmatprep.subr.mxu0 0.0
    %3406 = vmatpush1.msra.mxu0 0.0
    %3407 = vmatprep.subr.mxu0 0.0
    %3408 = vmatpush1.msra.mxu0 0.0
    %3409 = vmatprep.subr.mxu0 0.0
    %3410 = vmatpush1.msra.mxu0 0.0
    %3411 = vmatprep.subr.mxu0 0.0
    %3412 = vmatpush1.msra.mxu0 0.0
    %3413 = vmatprep.subr.mxu0 0.0
    %3414 = vmatpush1.msra.mxu0 0.0
    %3415 = vmatprep.subr.mxu0 0.0
    %3416 = vmatpush1.msra.mxu0 %v3386
    %3417 = vmatprep.subr.mxu0 0.0
    %3418 = vmatpush1.msra.mxu0 %v3385
    %3419 = vmatprep.subr.mxu0 0.0
    %3420 = vmatpush1.msra.mxu0 %v3384
    %3421 = vmatprep.subr.mxu0 0.0
    %3422 = vmatpush1.msra.mxu0 %v3383
    %3423 = vmatprep.subr.mxu0 0.0
    %3424 = vmatpush1.msra.mxu0 %v3382
    %3425 = vmatprep.subr.mxu0 0.0
    %3426 = vmatpush1.msra.mxu0 %v3381
    %3427 = vmatprep.subr.mxu0 0.0
    %3428 = vmatpush1.msra.mxu0 %v3380
    %3429 = vmatprep.subr.mxu0 0.0
    %3430 = vmatpush1.msra.mxu0 %v3379
    %3431 = vmatprep.subr.mxu0 0.0
    %3432 = vmatpush2.msra.mxu0 0.0
    %3433 = vmatprep.subr.mxu0 0.0
    %3434 = vmatpush2.msra.mxu0 0.0
    %3435 = vmatprep.subr.mxu0 0.0
    %3436 = vmatpush2.msra.mxu0 0.0
    %3437 = vmatprep.subr.mxu0 0.0
    %3438 = vmatpush2.msra.mxu0 0.0
    %3439 = vmatprep.subr.mxu0 0.0
    %3440 = vmatpush2.msra.mxu0 0.0
    %3441 = vmatprep.subr.mxu0 0.0
    %3442 = vmatpush2.msra.mxu0 0.0
    %3443 = vmatprep.subr.mxu0 0.0
    %3444 = vmatpush2.msra.mxu0 0.0
    %3445 = vmatprep.subr.mxu0 0.0
    %3446 = vmatpush2.msra.mxu0 0.0
    %3447 = vmatprep.subr.mxu0 0.0
    %3448 = vmatpush2.msra.mxu0 0.0
    %3449 = vmatprep.subr.mxu0 0.0
    %3450 = vmatpush2.msra.mxu0 0.0
    %3451 = vmatprep.subr.mxu0 0.0
    %3452 = vmatpush2.msra.mxu0 0.0
    %3453 = vmatprep.subr.mxu0 0.0
    %3454 = vmatpush2.msra.mxu0 0.0
    %3455 = vmatprep.subr.mxu0 0.0
    %3456 = vmatpush2.msra.mxu0 0.0
    %3457 = vmatprep.subr.mxu0 0.0
    %3458 = vmatpush2.msra.mxu0 0.0
    %3459 = vmatprep.subr.mxu0 0.0
    %3460 = vmatpush2.msra.mxu0 0.0
    %3461 = vmatprep.subr.mxu0 0.0
    %3462 = vmatpush2.msra.mxu0 0.0
    %3463 = vmatprep.mubr.f32.mxu0 0.0
    %3464 = vmatmul.mubr.f32.gmra.mxu0 %v3388
    %v3465 = vpop.f32.mrf.mxu0
    %v3466 = vadd.f32 0.0, %v3465
    %v3467 = vpop.f32.mrf.mxu0
    %3468 = vmatprep.mubr.f32.mxu0 0.0
    %3469 = vmatmul.mubr.f32.gmra.mxu0 %v3391
    %v3470 = vpop.f32.mrf.mxu0
    %v3471 = vadd.f32 0.0, %v3470
    %v3472 = vpop.f32.mrf.mxu0
    %3473 = vmatprep.mubr.f32.mxu0 0.0
    %3474 = vmatmul.mubr.f32.gmra.mxu0 %v3394
    %v3475 = vpop.f32.mrf.mxu0
    %v3476 = vadd.f32 0.0, %v3475
    %v3477 = vpop.f32.mrf.mxu0
    %3478 = vmatprep.mubr.f32.mxu0 0.0
    %3479 = vmatmul.mubr.f32.gmra.mxu0 %v3397
    %v3480 = vpop.f32.mrf.mxu0
    %v3481 = vadd.f32 0.0, %v3480
    %v3482 = vpop.f32.mrf.mxu0
    %3483 = vdwg.mxu0
    %v3484 = vadd.f32 %v3360, %v3466
    %v3485 = vadd.f32 %v3365, %v3471
    %v3486 = vadd.f32 %v3370, %v3476
    %v3487 = vadd.f32 %v3375, %v3481
    %v3488 = vld [vmem:[%s8 + $0x9] sm:$0x1]
    %v3489 = vlaneseq
    %v3490 = vshrl.u32 %v3489, 7
    %v3491 = vsub.s32 0, %v3490
    %v3492 = vrot.slane %v3488, %v3491
    %v3493 = vadd.f32 %v3484, %v3492
    %v3494 = vadd.f32 %v3485, %v3492
    %v3495 = vadd.f32 %v3486, %v3492
    %v3496 = vadd.f32 %v3487, %v3492
    %v3497 = vadd.f32 %v3493, %v2963
    %v3498 = vadd.f32 %v3494, %v2964
    %v3499 = vadd.f32 %v3495, %v2965
    %v3500 = vadd.f32 %v3496, %v2966
    %v3501 = vld [vmem:[%s8 + $0xa] sm:$0x1]
    %v3502 = vld [vmem:[%s8 + $0xb] sm:$0x1]
    %v3503 = vsel %vm60, %v3497, 0.0
    %3504 = vadd.xlane.f32.xlu0 %v3503
    %v3505 = vpop.xlane.xlu0 %3504
    %v3506 = vsel %vm60, %v3498, 0.0
    %3507 = vadd.xlane.f32.xlu0 %v3506
    %v3508 = vpop.xlane.xlu0 %3507
    %v3509 = vsel %vm60, %v3499, 0.0
    %3510 = vadd.xlane.f32.xlu0 %v3509
    %v3511 = vpop.xlane.xlu0 %3510
    %v3512 = vsel %vm60, %v3500, 0.0
    %3513 = vadd.xlane.f32.xlu0 %v3512
    %v3514 = vpop.xlane.xlu0 %3513
    %v3515 = vmul.f32 %v3505, %v1133
    %v3516 = vmul.f32 %v3508, %v1133
    %v3517 = vmul.f32 %v3511, %v1133
    %v3518 = vmul.f32 %v3514, %v1133
    %v3519 = vsub.f32 %v3497, %v3515
    %v3520 = vsub.f32 %v3498, %v3516
    %v3521 = vsub.f32 %v3499, %v3517
    %v3522 = vsub.f32 %v3500, %v3518
    %v3523 = vmul.f32 %v3519, %v3519
    %v3524 = vmul.f32 %v3520, %v3520
    %v3525 = vmul.f32 %v3521, %v3521
    %v3526 = vmul.f32 %v3522, %v3522
    %v3527 = vsel %vm60, %v3523, 0.0
    %3528 = vadd.xlane.f32.xlu0 %v3527
    %v3529 = vpop.xlane.xlu0 %3528
    %v3530 = vsel %vm60, %v3524, 0.0
    %3531 = vadd.xlane.f32.xlu0 %v3530
    %v3532 = vpop.xlane.xlu0 %3531
    %v3533 = vsel %vm60, %v3525, 0.0
    %3534 = vadd.xlane.f32.xlu0 %v3533
    %v3535 = vpop.xlane.xlu0 %3534
    %v3536 = vsel %vm60, %v3526, 0.0
    %3537 = vadd.xlane.f32.xlu0 %v3536
    %v3538 = vpop.xlane.xlu0 %3537
    %v3539 = vmul.f32 %v3529, %v1133
    %v3540 = vmul.f32 %v3532, %v1133
    %v3541 = vmul.f32 %v3535, %v1133
    %v3542 = vmul.f32 %v3538, %v1133
    %v3543 = vadd.f32 %v3539, 1e-05
    %v3544 = vadd.f32 %v3540, 1e-05
    %v3545 = vadd.f32 %v3541, 1e-05
    %v3546 = vadd.f32 %v3542, 1e-05
    %v3547 = vrsqrt.pop %v3543
    %v3548 = vrsqrt.pop %v3544
    %v3549 = vrsqrt.pop %v3545
    %v3550 = vrsqrt.pop %v3546
    %v3551 = vmul.f32 %v3519, %v3547
    %v3552 = vmul.f32 %v3520, %v3548
    %v3553 = vmul.f32 %v3521, %v3549
    %v3554 = vmul.f32 %v3522, %v3550
    %v3555 = vlaneseq
    %v3556 = vshrl.u32 %v3555, 7
    %v3557 = vsub.s32 0, %v3556
    %v3558 = vrot.slane %v3501, %v3557
    %v3559 = vmul.f32 %v3551, %v3558
    %v3560 = vmul.f32 %v3552, %v3558
    %v3561 = vmul.f32 %v3553, %v3558
    %v3562 = vmul.f32 %v3554, %v3558
    %v3563 = vlaneseq
    %v3564 = vshrl.u32 %v3563, 7
    %v3565 = vsub.s32 0, %v3564
    %v3566 = vrot.slane %v3502, %v3565
    %v3567 = vadd.f32 %v3559, %v3566
    %v3568 = vadd.f32 %v3560, %v3566
    %v3569 = vadd.f32 %v3561, %v3566
    %v3570 = vadd.f32 %v3562, %v3566
    %3571 = vst.msk [vmem:[#allocation3] sm:$0xff] %vm60, %v3567
    %3572 = vst.msk [vmem:[#allocation3 + $0x8] sm:$0xff] %vm60, %v3568
    %3573 = vst.msk [vmem:[#allocation3 + $0x10] sm:$0xff] %vm60, %v3569
    %3574 = vst.msk [vmem:[#allocation3 + $0x18] sm:$0xff] %vm60, %v3570
    // Predicated region
    $region42: #{encoder_forward.1} parent=1 // pred_check
      _
    $region43: #{encoder_forward.1} parent=1 // pred_check_branch
      %3576 = sbr.rel (0) target = $region45
    $region44: #{encoder_forward.1} parent=1 // pred_region
      %s3578 = ssub.s32 512, 512
      %3579 = vsyncadd [#allocation4], %s3578
      %s3580 = sshll.u32 [#allocation3], 4
      %s3581 = int_to_ptr.vmem [resolvable:$true] %s3580
      %3586 = dma.vmem_to_hbm [thread:$0]  %s3581, 512, %s10, [#allocation4], 128, 128, 8
    $region45: #{encoder_forward.1} parent=1 // pred_fallthru
      _
    // Predicated region
    $region46: #{encoder_forward.1} parent=1 // pred_check
      _
    $region47: #{encoder_forward.1} parent=1 // pred_check_branch
      %3588 = sbr.rel (0) target = $region49
    $region48: #{encoder_forward.1} parent=1 // pred_region
      %3589 = dma.done [#allocation4], 512
    $region49: #{encoder_forward.1} parent=1 // pred_fallthru
      _
    %3590 = vsyncpa [#allocation4], 1

</llo_original>
